<compile_context>
chip_gen: v7x
topology: tpu7x:2x2x1
jax: 0.10.0
libtpu: 0.0.40
codegen_flags: <defaults>
</compile_context>

<pallas_src>
import functools

import jax
import jax.numpy as jnp
from jax.experimental import pallas as pl
from jax.experimental.pallas import tpu as pltpu

NP = 128                         # lane-padded output-channel / feature width
VMEM_LIMIT = 32 * 1024 * 1024    # safe on v5e/v6e (128 MiB) and v7x (64 MiB/TC)


def _round_up(x, m):
    return (x + m - 1) // m * m


def _pick_tile(m, cap, align=16):
    """Tile size: multiple of `align`, <= cap, and (when m allows) small
    enough to give >= 2 grid steps so both v7x TensorCores are used."""
    half = _round_up(max(pl.cdiv(m, 2), 1), align)
    return max(min(cap, half), align)


# ----------------------------------------------------------------------------
# Pallas kernels
# ----------------------------------------------------------------------------
def _conv_relu_pool_kernel(x_ref, w_ref, b_ref, o_ref):
    """Fused conv-as-matmul + bias + ReLU + 2x2 max-pool.

    x_ref: (4, TILE_M, K) bf16   -- 4 pool phases of the im2col matrix
    w_ref: (K, 128)       bf16   -- K is unpadded (Mosaic pads in VMEM)
    b_ref: (1, 128)       f32
    o_ref: (TILE_M, 128)  bf16   -- pooled, ReLU'd NHWC rows (lane-dense)
    """
    P, TM, K = x_ref.shape
    # One long matmul over all four pool phases (amortizes MXU ramp/drain);
    # the leading dim merges into the sublane dim (TM is a multiple of 16).
    x2d = x_ref[...].reshape(P * TM, K)
    acc = jnp.dot(x2d, w_ref[...], preferred_element_type=jnp.float32)
    # Phase max = VPU max over four tile-aligned sublane slabs.
    pooled = functools.reduce(
        jnp.maximum, [acc[p * TM:(p + 1) * TM] for p in range(P)])
    # relu(max_p(conv_p) + b) == maxpool(relu(conv + b))  (relu monotone,
    # bias constant over the window) -> matches PyTorch relu-then-pool.
    o_ref[...] = jnp.maximum(pooled + b_ref[...], 0.0).astype(o_ref.dtype)


def _mlp_kernel(x_ref, w1_ref, b1_ref, w2_ref, b2_ref, w3_ref, b3_ref, o_ref):
    """Fused fc1(ReLU) -> fc2(ReLU) -> fc3. All operands live in VMEM."""
    h = jnp.dot(x_ref[...], w1_ref[...], preferred_element_type=jnp.float32)
    h = jnp.maximum(h + b1_ref[...], 0.0)
    h = jnp.dot(h.astype(jnp.bfloat16), w2_ref[...],
                preferred_element_type=jnp.float32)
    h = jnp.maximum(h + b2_ref[...], 0.0)
    h = jnp.dot(h.astype(jnp.bfloat16), w3_ref[...],
                preferred_element_type=jnp.float32)
    o_ref[...] = (h + b3_ref[...]).astype(o_ref.dtype)


# ----------------------------------------------------------------------------
# im2col glue (phase-separated over the 2x2 pooling window)
# ----------------------------------------------------------------------------
def _im2col_pooled(x, kh, kw, c_real):
    """x: (B, H, W, C) NHWC.  Returns (4, B*Hp*Wp, kh*kw*c_real), (B, Hp, Wp).

    Phase p = 2*dh + dw holds the patches of conv-output position
    (2*hp + dh, 2*wp + dw); rows are ordered (b, hp, wp).  Columns are
    ordered (i, j, c): the channel stays in the lane dim, so this is
    stack + plain reshape with NO cross-major transpose (no extra HBM
    round-trip of the 25x-expanded matrix).
    """
    B, H, W, _ = x.shape
    Ho, Wo = H - kh + 1, W - kw + 1
    Hp, Wp = Ho // 2, Wo // 2
    phases = []
    for dh in range(2):
        for dw in range(2):
            taps = []
            for i in range(kh):
                for j in range(kw):
                    taps.append(x[:, dh + i: dh + i + 2 * Hp: 2,
                                  dw + j: dw + j + 2 * Wp: 2, :c_real])
            p = jnp.stack(taps, axis=3)                  # (B,Hp,Wp,kh*kw,c)
            phases.append(p.reshape(B * Hp * Wp, kh * kw * c_real))
    return jnp.stack(phases, axis=0), (B, Hp, Wp)


# ----------------------------------------------------------------------------
# Pallas wrappers
# ----------------------------------------------------------------------------
def conv_relu_pool(x_nhwc, w_kn, b_pad, *, c_real, kh=5, kw=5):
    """Conv2d(stride 1, valid) + ReLU + MaxPool2d(2,2), NHWC, 128-padded C."""
    cols, (B, Hp, Wp) = _im2col_pooled(x_nhwc, kh, kw, c_real)
    cols = cols.astype(jnp.bfloat16)
    P, M, K = cols.shape
    assert w_kn.shape[0] == K and w_kn.shape[1] == NP

    tile_m = _pick_tile(M, cap=1024)                  # multiple of 16 (bf16)
    Mp = _round_up(M, tile_m)
    if Mp > M:                                        # pad rows only; K stays
        cols = jnp.pad(cols, ((0, 0), (0, Mp - M), (0, 0)))

    out = pl.pallas_call(
        _conv_relu_pool_kernel,
        out_shape=jax.ShapeDtypeStruct((Mp, NP), jnp.bfloat16),
        grid=(Mp // tile_m,),
        in_specs=[
            pl.BlockSpec((P, tile_m, K), lambda i: (0, i, 0)),
            pl.BlockSpec((K, NP), lambda i: (0, 0)),
            pl.BlockSpec((1, NP), lambda i: (0, 0)),
        ],
        out_specs=pl.BlockSpec((tile_m, NP), lambda i: (i, 0)),
        compiler_params=pltpu.CompilerParams(
            dimension_semantics=("parallel",),
            vmem_limit_bytes=VMEM_LIMIT),
    )(cols, w_kn, b_pad)

    return out[:M].reshape(B, Hp, Wp, NP)             # pooled NHWC (bf16)


def pallas_mlp(x, w1, b1, w2, b2, w3, b3):
    """Fused fc1+fc2+fc3.  x: (B, 3200) bf16; returns (B, 128) f32."""
    B, K = x.shape
    tile_b = _pick_tile(B, cap=512)
    Bp = _round_up(B, tile_b)
    if Bp > B:
        x = jnp.pad(x, ((0, Bp - B), (0, 0)))

    out = pl.pallas_call(
        _mlp_kernel,
        out_shape=jax.ShapeDtypeStruct((Bp, NP), jnp.float32),
        grid=(Bp // tile_b,),
        in_specs=[
            pl.BlockSpec((tile_b, K), lambda i: (i, 0)),
            pl.BlockSpec(w1.shape, lambda i: (0, 0)),
            pl.BlockSpec(b1.shape, lambda i: (0, 0)),
            pl.BlockSpec(w2.shape, lambda i: (0, 0)),
            pl.BlockSpec(b2.shape, lambda i: (0, 0)),
            pl.BlockSpec(w3.shape, lambda i: (0, 0)),
            pl.BlockSpec(b3.shape, lambda i: (0, 0)),
        ],
        out_specs=pl.BlockSpec((tile_b, NP), lambda i: (i, 0)),
        compiler_params=pltpu.CompilerParams(
            dimension_semantics=("parallel",),
            vmem_limit_bytes=VMEM_LIMIT),
    )(x, w1, b1, w2, b2, w3, b3)
    return out[:B]


# ----------------------------------------------------------------------------
# LeNet parameters: PyTorch-style init + one-time layout preprocessing
# ----------------------------------------------------------------------------
def init_lenet_params(key, dtype=jnp.float32):
    """Deterministic init mimicking PyTorch default U(-1/sqrt(fan_in), +)."""
    def uniform(k, shape, fan_in):
        bound = 1.0 / (fan_in ** 0.5)
        return jax.random.uniform(k, shape, dtype, minval=-bound, maxval=bound)

    ks = jax.random.split(key, 10)
    p = {}
    p["conv1_w"] = uniform(ks[0], (16, 3, 5, 5), 3 * 5 * 5)
    p["conv1_b"] = uniform(ks[1], (16,), 3 * 5 * 5)
    p["conv2_w"] = uniform(ks[2], (32, 16, 5, 5), 16 * 5 * 5)
    p["conv2_b"] = uniform(ks[3], (32,), 16 * 5 * 5)
    p["fc1_w"] = uniform(ks[4], (120, 32 * 5 * 5), 32 * 5 * 5)
    p["fc1_b"] = uniform(ks[5], (120,), 32 * 5 * 5)
    p["fc2_w"] = uniform(ks[6], (84, 120), 120)
    p["fc2_b"] = uniform(ks[7], (84,), 120)
    p["fc3_w"] = uniform(ks[8], (1, 84), 84)
    p["fc3_b"] = uniform(ks[9], (1,), 84)
    return p


def preprocess_params(p):
    """One-time: reorder/transpose, zero-pad only lane-dense dims, cast bf16."""
    f32, bf16 = jnp.float32, jnp.bfloat16
    q = {}

    def conv_wb(w, b):
        O, C, kh, kw = w.shape
        K = kh * kw * C
        # Rows ordered (i, j, c) to match the im2col column order; pad only
        # the output-channel (lane) dim to 128 -- K is left unpadded.
        w2 = jnp.transpose(w, (2, 3, 1, 0)).reshape(K, O)        # (K, O)
        w2 = jnp.pad(w2, ((0, 0), (0, NP - O)))                  # (K, 128)
        b2 = jnp.pad(b, (0, NP - O)).reshape(1, NP)
        return w2.astype(bf16), b2.astype(f32)

    q["conv1_w"], q["conv1_b"] = conv_wb(p["conv1_w"], p["conv1_b"])
    q["conv2_w"], q["conv2_b"] = conv_wb(p["conv2_w"], p["conv2_b"])

    # fc1: PyTorch columns ordered (c, h, w) for an NCHW flatten; reorder to
    # (h, w, c) and pad channels to 128 so it consumes the NHWC-padded
    # pooled activation flattened directly (no transpose in the forward).
    w1 = p["fc1_w"].reshape(120, 32, 5, 5).transpose(0, 2, 3, 1)  # (120,5,5,32)
    w1 = jnp.pad(w1, ((0, 0), (0, 0), (0, 0), (0, NP - 32)))      # (120,5,5,128)
    w1 = w1.reshape(120, 5 * 5 * NP).T                            # (3200,120)
    q["fc1_w"] = jnp.pad(w1, ((0, 0), (0, NP - 120))).astype(bf16)
    q["fc1_b"] = jnp.pad(p["fc1_b"], (0, NP - 120)).reshape(1, NP).astype(f32)

    q["fc2_w"] = jnp.pad(p["fc2_w"].T,
                         ((0, NP - 120), (0, NP - 84))).astype(bf16)
    q["fc2_b"] = jnp.pad(p["fc2_b"], (0, NP - 84)).reshape(1, NP).astype(f32)

    q["fc3_w"] = jnp.pad(p["fc3_w"].T,
                         ((0, NP - 84), (0, NP - 1))).astype(bf16)
    q["fc3_b"] = jnp.pad(p["fc3_b"], (0, NP - 1)).reshape(1, NP).astype(f32)
    return q


# ----------------------------------------------------------------------------
# Forward
# ----------------------------------------------------------------------------
def lenet_forward(q, x):
    # x: (B, 3, 32, 32) f32 NCHW -> NHWC bf16 once at the model boundary.
    x = jnp.transpose(x, (0, 2, 3, 1)).astype(jnp.bfloat16)      # (B,32,32,3)
    x = conv_relu_pool(x, q["conv1_w"], q["conv1_b"], c_real=3)  # (B,14,14,128)
    x = conv_relu_pool(x, q["conv2_w"], q["conv2_b"], c_real=16) # (B,5,5,128)
    B = x.shape[0]
    x = x.reshape(B, 5 * 5 * NP)                                 # (B,3200) bf16
    out = pallas_mlp(x, q["fc1_w"], q["fc1_b"], q["fc2_w"], q["fc2_b"],
                     q["fc3_w"], q["fc3_b"])                     # (B,128) f32
    return out[:, :1]                                            # (B,1)


if __name__ == "__main__":
    key = jax.random.PRNGKey(0)
    k_params, k_x = jax.random.split(key)

    params = preprocess_params(init_lenet_params(k_params))
    # LeNet's fc1 (32*5*5) implies a 32x32 spatial input; small batch of 2.
    x = jax.random.normal(k_x, (2, 3, 32, 32), dtype=jnp.float32)

    fwd = jax.jit(functools.partial(lenet_forward, params))
    out = jax.block_until_ready(fwd(x))

    assert out.shape == (2, 1), out.shape
    assert out.dtype == jnp.float32
    assert bool(jnp.all(jnp.isfinite(out)))
    print("KERNEL_OK")
</pallas_src>

<mosaic_0001>
module attributes {stable_mosaic.version = 11 : i64} {
  func.func @_conv_relu_pool_kernel(%arg0: i32, %arg1: memref<4x208x75xbf16, #tpu.memory_space<vmem>>, %arg2: memref<75x128xbf16, #tpu.memory_space<vmem>>, %arg3: memref<1x128xf32, #tpu.memory_space<vmem>>, %arg4: memref<208x128xbf16, #tpu.memory_space<vmem>>) attributes {dimension_semantics = [#tpu.dimension_semantics<parallel>], iteration_bounds = array<i64: 2>, scalar_prefetch = 0 : i64, scratch_operands = 0 : i64, tpu.core_type = #tpu.core_type<tc>, window_params = [{transform_indices = @transform_0, window_bounds = array<i64: 4, 208, 75>}, {pipeline_mode = #tpu.pipeline_mode<synchronous>, transform_indices = @transform_1, window_bounds = array<i64: 75, 128>}, {pipeline_mode = #tpu.pipeline_mode<synchronous>, transform_indices = @transform_2, window_bounds = array<i64: 1, 128>}, {transform_indices = @transform_3, window_bounds = array<i64: 208, 128>}]} {
    %c0 = arith.constant 0 : index
    %c0_0 = arith.constant 0 : index
    %c0_1 = arith.constant 0 : index
    %0 = vector.load %arg1[%c0, %c0_0, %c0_1] : memref<4x208x75xbf16, #tpu.memory_space<vmem>>, vector<4x208x75xbf16>
    %1 = vector.shape_cast %0 : vector<4x208x75xbf16> to vector<832x75xbf16>
    %c0_2 = arith.constant 0 : index
    %c0_3 = arith.constant 0 : index
    %2 = vector.load %arg2[%c0_2, %c0_3] : memref<75x128xbf16, #tpu.memory_space<vmem>>, vector<75x128xbf16>
    %cst = arith.constant dense<0.000000e+00> : vector<832x128xf32>
    %3 = tpu.matmul %1, %2, %cst {dimension_numbers = #tpu.dot_dimension_numbers<[1], [0], [0], [1], [0, 0, 1, 1], [], []>} : vector<832x75xbf16>, vector<75x128xbf16>, vector<832x128xf32> -> vector<832x128xf32>
    %4 = vector.extract_strided_slice %3 {offsets = [0, 0], sizes = [208, 128], strides = [1, 1]} : vector<832x128xf32> to vector<208x128xf32>
    %5 = vector.extract_strided_slice %3 {offsets = [208, 0], sizes = [208, 128], strides = [1, 1]} : vector<832x128xf32> to vector<208x128xf32>
    %6 = vector.extract_strided_slice %3 {offsets = [416, 0], sizes = [208, 128], strides = [1, 1]} : vector<832x128xf32> to vector<208x128xf32>
    %7 = vector.extract_strided_slice %3 {offsets = [624, 0], sizes = [208, 128], strides = [1, 1]} : vector<832x128xf32> to vector<208x128xf32>
    %8 = arith.maximumf %4, %5 : vector<208x128xf32>
    %9 = arith.maximumf %8, %6 : vector<208x128xf32>
    %10 = arith.maximumf %9, %7 : vector<208x128xf32>
    %c0_4 = arith.constant 0 : index
    %c0_5 = arith.constant 0 : index
    %11 = vector.load %arg3[%c0_4, %c0_5] : memref<1x128xf32, #tpu.memory_space<vmem>>, vector<1x128xf32>
    %12 = vector.broadcast %11 : vector<1x128xf32> to vector<208x128xf32>
    %13 = arith.addf %10, %12 : vector<208x128xf32>
    %cst_6 = arith.constant 0.000000e+00 : f32
    %14 = vector.broadcast %cst_6 : f32 to vector<208x128xf32>
    %15 = arith.maximumf %13, %14 : vector<208x128xf32>
    %16 = arith.truncf %15 : vector<208x128xf32> to vector<208x128xbf16>
    %c0_7 = arith.constant 0 : index
    %c0_8 = arith.constant 0 : index
    %17 = vector.load %arg4[%c0_7, %c0_8] : memref<208x128xbf16, #tpu.memory_space<vmem>>, vector<208x128xbf16>
    tpu.vector_store %arg4[%c0_7, %c0_8], %16 {strides = array<i32>} : memref<208x128xbf16, #tpu.memory_space<vmem>>, vector<208x128xbf16>,
    return
  }
  func.func @transform_0(%arg0: i32) -> (i32, i32, i32) {
    %c0_i32 = arith.constant 0 : i32
    %c0_i32_0 = arith.constant 0 : i32
    %c0_i32_1 = arith.constant 0 : i32
    return %c0_i32, %arg0, %c0_i32_0 : i32, i32, i32
  }
  func.func @transform_1(%arg0: i32) -> (i32, i32) {
    %c0_i32 = arith.constant 0 : i32
    %c0_i32_0 = arith.constant 0 : i32
    %c0_i32_1 = arith.constant 0 : i32
    return %c0_i32, %c0_i32_0 : i32, i32
  }
  func.func @transform_2(%arg0: i32) -> (i32, i32) {
    %c0_i32 = arith.constant 0 : i32
    %c0_i32_0 = arith.constant 0 : i32
    %c0_i32_1 = arith.constant 0 : i32
    return %c0_i32, %c0_i32_0 : i32, i32
  }
  func.func @transform_3(%arg0: i32) -> (i32, i32) {
    %c0_i32 = arith.constant 0 : i32
    %c0_i32_0 = arith.constant 0 : i32
    return %arg0, %c0_i32 : i32, i32
  }
}

module attributes {stable_mosaic.version = 11 : i64} {
  func.func @_conv_relu_pool_kernel(%arg0: i32, %arg1: memref<4x32x400xbf16, #tpu.memory_space<vmem>>, %arg2: memref<400x128xbf16, #tpu.memory_space<vmem>>, %arg3: memref<1x128xf32, #tpu.memory_space<vmem>>, %arg4: memref<32x128xbf16, #tpu.memory_space<vmem>>) attributes {dimension_semantics = [#tpu.dimension_semantics<parallel>], iteration_bounds = array<i64: 2>, scalar_prefetch = 0 : i64, scratch_operands = 0 : i64, tpu.core_type = #tpu.core_type<tc>, window_params = [{transform_indices = @transform_0, window_bounds = array<i64: 4, 32, 400>}, {pipeline_mode = #tpu.pipeline_mode<synchronous>, transform_indices = @transform_1, window_bounds = array<i64: 400, 128>}, {pipeline_mode = #tpu.pipeline_mode<synchronous>, transform_indices = @transform_2, window_bounds = array<i64: 1, 128>}, {transform_indices = @transform_3, window_bounds = array<i64: 32, 128>}]} {
    %c0 = arith.constant 0 : index
    %c0_0 = arith.constant 0 : index
    %c0_1 = arith.constant 0 : index
    %0 = vector.load %arg1[%c0, %c0_0, %c0_1] : memref<4x32x400xbf16, #tpu.memory_space<vmem>>, vector<4x32x400xbf16>
    %1 = vector.shape_cast %0 : vector<4x32x400xbf16> to vector<128x400xbf16>
    %c0_2 = arith.constant 0 : index
    %c0_3 = arith.constant 0 : index
    %2 = vector.load %arg2[%c0_2, %c0_3] : memref<400x128xbf16, #tpu.memory_space<vmem>>, vector<400x128xbf16>
    %cst = arith.constant dense<0.000000e+00> : vector<128x128xf32>
    %3 = tpu.matmul %1, %2, %cst {dimension_numbers = #tpu.dot_dimension_numbers<[1], [0], [0], [1], [0, 0, 1, 1], [], []>} : vector<128x400xbf16>, vector<400x128xbf16>, vector<128x128xf32> -> vector<128x128xf32>
    %4 = vector.extract_strided_slice %3 {offsets = [0, 0], sizes = [32, 128], strides = [1, 1]} : vector<128x128xf32> to vector<32x128xf32>
    %5 = vector.extract_strided_slice %3 {offsets = [32, 0], sizes = [32, 128], strides = [1, 1]} : vector<128x128xf32> to vector<32x128xf32>
    %6 = vector.extract_strided_slice %3 {offsets = [64, 0], sizes = [32, 128], strides = [1, 1]} : vector<128x128xf32> to vector<32x128xf32>
    %7 = vector.extract_strided_slice %3 {offsets = [96, 0], sizes = [32, 128], strides = [1, 1]} : vector<128x128xf32> to vector<32x128xf32>
    %8 = arith.maximumf %4, %5 : vector<32x128xf32>
    %9 = arith.maximumf %8, %6 : vector<32x128xf32>
    %10 = arith.maximumf %9, %7 : vector<32x128xf32>
    %c0_4 = arith.constant 0 : index
    %c0_5 = arith.constant 0 : index
    %11 = vector.load %arg3[%c0_4, %c0_5] : memref<1x128xf32, #tpu.memory_space<vmem>>, vector<1x128xf32>
    %12 = vector.broadcast %11 : vector<1x128xf32> to vector<32x128xf32>
    %13 = arith.addf %10, %12 : vector<32x128xf32>
    %cst_6 = arith.constant 0.000000e+00 : f32
    %14 = vector.broadcast %cst_6 : f32 to vector<32x128xf32>
    %15 = arith.maximumf %13, %14 : vector<32x128xf32>
    %16 = arith.truncf %15 : vector<32x128xf32> to vector<32x128xbf16>
    %c0_7 = arith.constant 0 : index
    %c0_8 = arith.constant 0 : index
    %17 = vector.load %arg4[%c0_7, %c0_8] : memref<32x128xbf16, #tpu.memory_space<vmem>>, vector<32x128xbf16>
    tpu.vector_store %arg4[%c0_7, %c0_8], %16 {strides = array<i32>} : memref<32x128xbf16, #tpu.memory_space<vmem>>, vector<32x128xbf16>,
    return
  }
  func.func @transform_0(%arg0: i32) -> (i32, i32, i32) {
    %c0_i32 = arith.constant 0 : i32
    %c0_i32_0 = arith.constant 0 : i32
    %c0_i32_1 = arith.constant 0 : i32
    return %c0_i32, %arg0, %c0_i32_0 : i32, i32, i32
  }
  func.func @transform_1(%arg0: i32) -> (i32, i32) {
    %c0_i32 = arith.constant 0 : i32
    %c0_i32_0 = arith.constant 0 : i32
    %c0_i32_1 = arith.constant 0 : i32
    return %c0_i32, %c0_i32_0 : i32, i32
  }
  func.func @transform_2(%arg0: i32) -> (i32, i32) {
    %c0_i32 = arith.constant 0 : i32
    %c0_i32_0 = arith.constant 0 : i32
    %c0_i32_1 = arith.constant 0 : i32
    return %c0_i32, %c0_i32_0 : i32, i32
  }
  func.func @transform_3(%arg0: i32) -> (i32, i32) {
    %c0_i32 = arith.constant 0 : i32
    %c0_i32_0 = arith.constant 0 : i32
    return %arg0, %c0_i32 : i32, i32
  }
}

module attributes {stable_mosaic.version = 11 : i64} {
  func.func @_mlp_kernel(%arg0: i32, %arg1: memref<16x3200xbf16, #tpu.memory_space<vmem>>, %arg2: memref<3200x128xbf16, #tpu.memory_space<vmem>>, %arg3: memref<1x128xf32, #tpu.memory_space<vmem>>, %arg4: memref<128x128xbf16, #tpu.memory_space<vmem>>, %arg5: memref<1x128xf32, #tpu.memory_space<vmem>>, %arg6: memref<128x128xbf16, #tpu.memory_space<vmem>>, %arg7: memref<1x128xf32, #tpu.memory_space<vmem>>, %arg8: memref<16x128xf32, #tpu.memory_space<vmem>>) attributes {dimension_semantics = [#tpu.dimension_semantics<parallel>], iteration_bounds = array<i64: 1>, scalar_prefetch = 0 : i64, scratch_operands = 0 : i64, tpu.core_type = #tpu.core_type<tc>, window_params = [{transform_indices = @transform_0, window_bounds = array<i64: 16, 3200>}, {pipeline_mode = #tpu.pipeline_mode<synchronous>, transform_indices = @transform_1, window_bounds = array<i64: 3200, 128>}, {pipeline_mode = #tpu.pipeline_mode<synchronous>, transform_indices = @transform_2, window_bounds = array<i64: 1, 128>}, {pipeline_mode = #tpu.pipeline_mode<synchronous>, transform_indices = @transform_3, window_bounds = array<i64: 128, 128>}, {pipeline_mode = #tpu.pipeline_mode<synchronous>, transform_indices = @transform_4, window_bounds = array<i64: 1, 128>}, {pipeline_mode = #tpu.pipeline_mode<synchronous>, transform_indices = @transform_5, window_bounds = array<i64: 128, 128>}, {pipeline_mode = #tpu.pipeline_mode<synchronous>, transform_indices = @transform_6, window_bounds = array<i64: 1, 128>}, {transform_indices = @transform_7, window_bounds = array<i64: 16, 128>}]} {
    %c0 = arith.constant 0 : index
    %c0_0 = arith.constant 0 : index
    %0 = vector.load %arg1[%c0, %c0_0] : memref<16x3200xbf16, #tpu.memory_space<vmem>>, vector<16x3200xbf16>
    %c0_1 = arith.constant 0 : index
    %c0_2 = arith.constant 0 : index
    %1 = vector.load %arg2[%c0_1, %c0_2] : memref<3200x128xbf16, #tpu.memory_space<vmem>>, vector<3200x128xbf16>
    %cst = arith.constant dense<0.000000e+00> : vector<16x128xf32>
    %2 = tpu.matmul %0, %1, %cst {dimension_numbers = #tpu.dot_dimension_numbers<[1], [0], [0], [1], [0, 0, 1, 1], [], []>} : vector<16x3200xbf16>, vector<3200x128xbf16>, vector<16x128xf32> -> vector<16x128xf32>
    %c0_3 = arith.constant 0 : index
    %c0_4 = arith.constant 0 : index
    %3 = vector.load %arg3[%c0_3, %c0_4] : memref<1x128xf32, #tpu.memory_space<vmem>>, vector<1x128xf32>
    %4 = vector.broadcast %3 : vector<1x128xf32> to vector<16x128xf32>
    %5 = arith.addf %2, %4 : vector<16x128xf32>
    %cst_5 = arith.constant 0.000000e+00 : f32
    %6 = vector.broadcast %cst_5 : f32 to vector<16x128xf32>
    %7 = arith.maximumf %5, %6 : vector<16x128xf32>
    %8 = arith.truncf %7 : vector<16x128xf32> to vector<16x128xbf16>
    %c0_6 = arith.constant 0 : index
    %c0_7 = arith.constant 0 : index
    %9 = vector.load %arg4[%c0_6, %c0_7] : memref<128x128xbf16, #tpu.memory_space<vmem>>, vector<128x128xbf16>
    %cst_8 = arith.constant dense<0.000000e+00> : vector<16x128xf32>
    %10 = tpu.matmul %8, %9, %cst_8 {dimension_numbers = #tpu.dot_dimension_numbers<[1], [0], [0], [1], [0, 0, 1, 1], [], []>} : vector<16x128xbf16>, vector<128x128xbf16>, vector<16x128xf32> -> vector<16x128xf32>
    %c0_9 = arith.constant 0 : index
    %c0_10 = arith.constant 0 : index
    %11 = vector.load %arg5[%c0_9, %c0_10] : memref<1x128xf32, #tpu.memory_space<vmem>>, vector<1x128xf32>
    %12 = vector.broadcast %11 : vector<1x128xf32> to vector<16x128xf32>
    %13 = arith.addf %10, %12 : vector<16x128xf32>
    %cst_11 = arith.constant 0.000000e+00 : f32
    %14 = vector.broadcast %cst_11 : f32 to vector<16x128xf32>
    %15 = arith.maximumf %13, %14 : vector<16x128xf32>
    %16 = arith.truncf %15 : vector<16x128xf32> to vector<16x128xbf16>
    %c0_12 = arith.constant 0 : index
    %c0_13 = arith.constant 0 : index
    %17 = vector.load %arg6[%c0_12, %c0_13] : memref<128x128xbf16, #tpu.memory_space<vmem>>, vector<128x128xbf16>
    %cst_14 = arith.constant dense<0.000000e+00> : vector<16x128xf32>
    %18 = tpu.matmul %16, %17, %cst_14 {dimension_numbers = #tpu.dot_dimension_numbers<[1], [0], [0], [1], [0, 0, 1, 1], [], []>} : vector<16x128xbf16>, vector<128x128xbf16>, vector<16x128xf32> -> vector<16x128xf32>
    %c0_15 = arith.constant 0 : index
    %c0_16 = arith.constant 0 : index
    %19 = vector.load %arg7[%c0_15, %c0_16] : memref<1x128xf32, #tpu.memory_space<vmem>>, vector<1x128xf32>
    %20 = vector.broadcast %19 : vector<1x128xf32> to vector<16x128xf32>
    %21 = arith.addf %18, %20 : vector<16x128xf32>
    %c0_17 = arith.constant 0 : index
    %c0_18 = arith.constant 0 : index
    %22 = vector.load %arg8[%c0_17, %c0_18] : memref<16x128xf32, #tpu.memory_space<vmem>>, vector<16x128xf32>
    tpu.vector_store %arg8[%c0_17, %c0_18], %21 {strides = array<i32>} : memref<16x128xf32, #tpu.memory_space<vmem>>, vector<16x128xf32>,
    return
  }
  func.func @transform_0(%arg0: i32) -> (i32, i32) {
    %c0_i32 = arith.constant 0 : i32
    %c0_i32_0 = arith.constant 0 : i32
    return %arg0, %c0_i32 : i32, i32
  }
  func.func @transform_1(%arg0: i32) -> (i32, i32) {
    %c0_i32 = arith.constant 0 : i32
    %c0_i32_0 = arith.constant 0 : i32
    %c0_i32_1 = arith.constant 0 : i32
    return %c0_i32, %c0_i32_0 : i32, i32
  }
  func.func @transform_2(%arg0: i32) -> (i32, i32) {
    %c0_i32 = arith.constant 0 : i32
    %c0_i32_0 = arith.constant 0 : i32
    %c0_i32_1 = arith.constant 0 : i32
    return %c0_i32, %c0_i32_0 : i32, i32
  }
  func.func @transform_3(%arg0: i32) -> (i32, i32) {
    %c0_i32 = arith.constant 0 : i32
    %c0_i32_0 = arith.constant 0 : i32
    %c0_i32_1 = arith.constant 0 : i32
    return %c0_i32, %c0_i32_0 : i32, i32
  }
  func.func @transform_4(%arg0: i32) -> (i32, i32) {
    %c0_i32 = arith.constant 0 : i32
    %c0_i32_0 = arith.constant 0 : i32
    %c0_i32_1 = arith.constant 0 : i32
    return %c0_i32, %c0_i32_0 : i32, i32
  }
  func.func @transform_5(%arg0: i32) -> (i32, i32) {
    %c0_i32 = arith.constant 0 : i32
    %c0_i32_0 = arith.constant 0 : i32
    %c0_i32_1 = arith.constant 0 : i32
    return %c0_i32, %c0_i32_0 : i32, i32
  }
  func.func @transform_6(%arg0: i32) -> (i32, i32) {
    %c0_i32 = arith.constant 0 : i32
    %c0_i32_0 = arith.constant 0 : i32
    %c0_i32_1 = arith.constant 0 : i32
    return %c0_i32, %c0_i32_0 : i32, i32
  }
  func.func @transform_7(%arg0: i32) -> (i32, i32) {
    %c0_i32 = arith.constant 0 : i32
    %c0_i32_0 = arith.constant 0 : i32
    return %arg0, %c0_i32 : i32, i32
  }
}

</mosaic_0001>

<llo_original>
// kernel: lenet_forward.3
$region0: #{lenet_forward.3}
  #allocation0 [shape = 'u32[]', space=smem, size = 0x4, offset = 0x4, fixed_abs, tag = 'smem constant byte address 0x4 - core index']
  #allocation1 [shape = 'u32[144,128]{1,0:T(1,128)}', space=vmem, size = 0x12000, scoped, tag = 'internal scratch']
  %s0 = inlined_call_operand.vmem [shape: bf16[4,416,75], index: 0, kind: input, shape index: {}]
  %s1 = inlined_call_operand.vmem [shape: bf16[75,128], index: 1, kind: input, shape index: {}]
  %s2 = inlined_call_operand.vmem [shape: f32[1,128], index: 2, kind: input, shape index: {}]
  %s3 = inlined_call_operand.vmem [shape: bf16[416,128], index: 3, kind: output, shape index: {}]
  %s4 = sld [smem:[#allocation0]]
  $region86: #{lenet_forward.3} parent=0
    _
  %s6 = ssub.s32 1, %s4
  %s7 = scalar_select 0, %s6, %s4
  $region1: #{lenet_forward.3} parent=0
    #allocation2 [shape = 'u8[425984]{0}', space=vmem, size = 0x68000, scoped, tag = 'input window, operand 0']
    loop: start=0, step=1, limit=4
    $region2: #{lenet_forward.3} parent=1 // loop_pre_header
      _
    $region3: #{lenet_forward.3} parent=1 // loop_header
      %s9 = sphi 0, %s13
      %p10 = scmp.ge.s32.totalorder %s9, 4
      %s19 = sphi 0, %s21
      %s22 = sphi 0, %s19
      %s23 = sphi 0, %s22
      %s39 = sphi 0, %s23
      %s43 = sphi 0, %s43
      %s45 = sphi 0, %s43
      %s46 = sphi 0, %s45
      %s60 = sphi 0, %s46
      %s64 = sphi 0, %s64
      %s66 = sphi 0, %s64
      %s67 = sphi 0, %s66
      %s81 = sphi 0, %s67
      %s87 = sphi 0, %s89
      %s90 = sphi 0, %s87
      %s91 = sphi 0, %s90
      %s107 = sphi 0, %s91
    $region4: #{lenet_forward.3} parent=1 // loop_header_branch
      %12 = sbr.rel (%p10) target = $region8
    $region5: #{lenet_forward.3} parent=1 // loop_body
      %s14 = ssub.s32 %s9, 1
      %s15 = ssub.s32 %s9, 2
      %s16 = sadd.s32 %s9, 1
      %s17 = ssub.s32 %s9, %s16
      %p18 = scmp.eq.s32.totalorder %s17, 0
      %s20 = sadd.s32 %s19, 1
      %s21 = scalar_select %p18, %s19, %s20
      %p24 = pneg %p18
      %p25 = scmp.eq.s32.totalorder %s9, 1
      %p26 = por %p24, %p25
      %p27 = scmp.ne.s32.totalorder %s19, %s22
      %p28 = scmp.eq.s32.totalorder %s9, 0
      %p29 = por %p27, %p28
      %p30 = scmp.ne.s32.totalorder %s19, %s22
      %p31 = scmp.eq.s32.totalorder %s14, 1
      %p32 = por %p30, %p31
      %p33 = scmp.ne.s32.totalorder %s22, %s23
      %p34 = scmp.eq.s32.totalorder %s14, 0
      %p35 = por %p33, %p34
      %p36 = scmp.ne.s32.totalorder %s22, %s23
      %p37 = scmp.eq.s32.totalorder %s15, 1
      %p38 = por %p36, %p37
      %p40 = scmp.ne.s32.totalorder %s23, %s39
      %p41 = scmp.eq.s32.totalorder %s15, 0
      %p42 = por %p40, %p41
      %s44 = sadd.s32 %s43, 1
      %p47 = scmp.eq.s32.totalorder %s9, 1
      %p48 = scmp.ne.s32.totalorder %s43, %s45
      %p49 = scmp.eq.s32.totalorder %s9, 0
      %p50 = por %p48, %p49
      %p51 = scmp.ne.s32.totalorder %s43, %s45
      %p52 = scmp.eq.s32.totalorder %s14, 1
      %p53 = por %p51, %p52
      %p54 = scmp.ne.s32.totalorder %s45, %s46
      %p55 = scmp.eq.s32.totalorder %s14, 0
      %p56 = por %p54, %p55
      %p57 = scmp.ne.s32.totalorder %s45, %s46
      %p58 = scmp.eq.s32.totalorder %s15, 1
      %p59 = por %p57, %p58
      %p61 = scmp.ne.s32.totalorder %s46, %s60
      %p62 = scmp.eq.s32.totalorder %s15, 0
      %p63 = por %p61, %p62
      %s65 = sadd.s32 %s64, 1
      %p68 = scmp.eq.s32.totalorder %s9, 1
      %p69 = scmp.ne.s32.totalorder %s64, %s66
      %p70 = scmp.eq.s32.totalorder %s9, 0
      %p71 = por %p69, %p70
      %p72 = scmp.ne.s32.totalorder %s64, %s66
      %p73 = scmp.eq.s32.totalorder %s14, 1
      %p74 = por %p72, %p73
      %p75 = scmp.ne.s32.totalorder %s66, %s67
      %p76 = scmp.eq.s32.totalorder %s14, 0
      %p77 = por %p75, %p76
      %p78 = scmp.ne.s32.totalorder %s66, %s67
      %p79 = scmp.eq.s32.totalorder %s15, 1
      %p80 = por %p78, %p79
      %p82 = scmp.ne.s32.totalorder %s67, %s81
      %p83 = scmp.eq.s32.totalorder %s15, 0
      %p84 = por %p82, %p83
      %s85 = ssub.s32 %s9, %s16
      %p86 = scmp.eq.s32.totalorder %s85, 0
      %s88 = sadd.s32 %s87, 1
      %s89 = scalar_select %p86, %s87, %s88
      %p92 = pneg %p86
      %p93 = scmp.eq.s32.totalorder %s9, 1
      %p94 = por %p92, %p93
      %p95 = scmp.ne.s32.totalorder %s87, %s90
      %p96 = scmp.eq.s32.totalorder %s9, 0
      %p97 = por %p95, %p96
      %p98 = scmp.ne.s32.totalorder %s87, %s90
      %p99 = scmp.eq.s32.totalorder %s14, 1
      %p100 = por %p98, %p99
      %p101 = scmp.ne.s32.totalorder %s90, %s91
      %p102 = scmp.eq.s32.totalorder %s14, 0
      %p103 = por %p101, %p102
      %p104 = scmp.ne.s32.totalorder %s90, %s91
      %p105 = scmp.eq.s32.totalorder %s15, 1
      %p106 = por %p104, %p105
      %p108 = scmp.ne.s32.totalorder %s91, %s107
      %p109 = scmp.eq.s32.totalorder %s15, 0
      %p110 = por %p108, %p109
      %p111 = scmp.le.s32.totalorder 1, %s9
      %p112 = scmp.lt.s32.totalorder %s9, 3
      %p113 = pnand %p111, %p112
      %p114 = pneg %p113
      // Predicated region
      $region9: #{lenet_forward.3} parent=5 // pred_check
        _
      $region10: #{lenet_forward.3} parent=5 // pred_check_branch
        %116 = sbr.rel (%p113) target = $region12
      $region11: #{lenet_forward.3} parent=5 // pred_region
        %s117 = ssub.s32 %s9, 1
        // Predicated region
        $region13: #{lenet_forward.3} parent=11 // pred_check
          %p118 = pneg %p56
        $region14: #{lenet_forward.3} parent=11 // pred_check_branch
          %120 = sbr.rel (%p118) target = $region16
        $region15: #{lenet_forward.3} parent=11 // pred_region
          _
        $region16: #{lenet_forward.3} parent=11 // pred_fallthru
          _
        // Predicated region
        $region17: #{lenet_forward.3} parent=11 // pred_check
          %p121 = pneg %p77
        $region18: #{lenet_forward.3} parent=11 // pred_check_branch
          %123 = sbr.rel (%p121) target = $region20
        $region19: #{lenet_forward.3} parent=11 // pred_region
          _
        $region20: #{lenet_forward.3} parent=11 // pred_fallthru
          _
      $region12: #{lenet_forward.3} parent=5 // pred_fallthru
        _
      %p124 = scmp.lt.s32.totalorder %s9, 2
      // Predicated region
      $region21: #{lenet_forward.3} parent=5 // pred_check
        %p125 = pneg %p124
      $region22: #{lenet_forward.3} parent=5 // pred_check_branch
        %127 = sbr.rel (%p125) target = $region24
      $region23: #{lenet_forward.3} parent=5 // pred_region
        // Predicated region
        $region25: #{lenet_forward.3} parent=23 // pred_check
          %p128 = pneg %p29
        $region26: #{lenet_forward.3} parent=23 // pred_check_branch
          %130 = sbr.rel (%p128) target = $region28
        $region27: #{lenet_forward.3} parent=23 // pred_region
          %s131 = sand.u32 %s19, 1
          %s132 = sand.u32 %s19, 1
          %s133 = smul.addr %s132, 416
          %s134 = scalar_lea.vmem [#allocation2], %s133
          %s135 = smul.u32 26, %s9
          %s136 = smul.addr %s135, 4
          %s137 = scalar_lea.vmem %s0, %s136
          // Predicated region
          $region29: #{lenet_forward.3} parent=27 // pred_check
            _
          $region30: #{lenet_forward.3} parent=27 // pred_check_branch
            %139 = sbr.rel (0) target = $region32
          $region31: #{lenet_forward.3} parent=27 // pred_region
            // Predicated region
            $region33: #{lenet_forward.3} parent=31 // pred_check
              _
            $region34: #{lenet_forward.3} parent=31 // pred_check_branch
              %141 = sbr.rel target = $region36
            $region35: #{lenet_forward.3} parent=31 // pred_region
              // Predicated region
              $region48: #{lenet_forward.3} parent=35 // pred_check
                _
              $region49: #{lenet_forward.3} parent=35 // pred_check_branch
                %362 = sbr.rel (0) target = $region51
              $region50: #{lenet_forward.3} parent=35 // pred_region
                loop: start=0, step=1, limit=1
                $region52: #{lenet_forward.3} parent=50 // loop_pre_header
                  _
                $region53: #{lenet_forward.3} parent=50 // loop_header
                  %s364 = sphi 0, %s368
                  %p365 = scmp.ge.s32.totalorder %s364, 1
                  %s369 = sphi %s137, %s137
                  %s370 = sphi %s134, %s134
                $region54: #{lenet_forward.3} parent=50 // loop_header_branch
                  %367 = sbr.rel (%p365) target = $region58
                $region55: #{lenet_forward.3} parent=50 // loop_body
                  _
                $region56: #{lenet_forward.3} parent=50 // loop_footer
                  %s368 = sadd.s32 1, %s364
                $region57: #{lenet_forward.3} parent=50 // loop_footer_branch
                  %363 = sbr.rel target = $region53
                $region58: #{lenet_forward.3} parent=50 // loop_exit
                  _
                loop: start=0, step=1, limit=1
                $region59: #{lenet_forward.3} parent=50 // loop_pre_header
                  _
                $region60: #{lenet_forward.3} parent=50 // loop_header
                  %s373 = sphi 0, %s377
                  %p374 = scmp.ge.s32.totalorder %s373, 1
                  %s378 = sphi %s137, %s137
                  %s379 = sphi %s134, %s134
                $region61: #{lenet_forward.3} parent=50 // loop_header_branch
                  %376 = sbr.rel (%p374) target = $region65
                $region62: #{lenet_forward.3} parent=50 // loop_body
                  %v380 = vld [vmem:[%s378] sm:$0xf]
                  %381 = vst [vmem:[%s379] sm:$0xf] %v380
                  %v382 = vld [vmem:[%s378 + $0x4] sm:$0xf]
                  %383 = vst [vmem:[%s379 + $0x4] sm:$0xf] %v382
                  %v384 = vld [vmem:[%s378 + $0x8] sm:$0xf]
                  %385 = vst [vmem:[%s379 + $0x8] sm:$0xf] %v384
                  %v386 = vld [vmem:[%s378 + $0xc] sm:$0xf]
                  %387 = vst [vmem:[%s379 + $0xc] sm:$0xf] %v386
                  %v388 = vld [vmem:[%s378 + $0x10] sm:$0xf]
                  %389 = vst [vmem:[%s379 + $0x10] sm:$0xf] %v388
                  %v390 = vld [vmem:[%s378 + $0x14] sm:$0xf]
                  %391 = vst [vmem:[%s379 + $0x14] sm:$0xf] %v390
                  %v392 = vld [vmem:[%s378 + $0x18] sm:$0xf]
                  %393 = vst [vmem:[%s379 + $0x18] sm:$0xf] %v392
                  %v394 = vld [vmem:[%s378 + $0x1c] sm:$0xf]
                  %395 = vst [vmem:[%s379 + $0x1c] sm:$0xf] %v394
                  %v396 = vld [vmem:[%s378 + $0x20] sm:$0xf]
                  %397 = vst [vmem:[%s379 + $0x20] sm:$0xf] %v396
                  %v398 = vld [vmem:[%s378 + $0x24] sm:$0xf]
                  %399 = vst [vmem:[%s379 + $0x24] sm:$0xf] %v398
                  %v400 = vld [vmem:[%s378 + $0x28] sm:$0xf]
                  %401 = vst [vmem:[%s379 + $0x28] sm:$0xf] %v400
                  %v402 = vld [vmem:[%s378 + $0x2c] sm:$0xf]
                  %403 = vst [vmem:[%s379 + $0x2c] sm:$0xf] %v402
                  %v404 = vld [vmem:[%s378 + $0x30] sm:$0xf]
                  %405 = vst [vmem:[%s379 + $0x30] sm:$0xf] %v404
                  %v406 = vld [vmem:[%s378 + $0x34] sm:$0xf]
                  %407 = vst [vmem:[%s379 + $0x34] sm:$0xf] %v406
                  %v408 = vld [vmem:[%s378 + $0x38] sm:$0xf]
                  %409 = vst [vmem:[%s379 + $0x38] sm:$0xf] %v408
                  %v410 = vld [vmem:[%s378 + $0x3c] sm:$0xf]
                  %411 = vst [vmem:[%s379 + $0x3c] sm:$0xf] %v410
                  %v412 = vld [vmem:[%s378 + $0x40] sm:$0xf]
                  %413 = vst [vmem:[%s379 + $0x40] sm:$0xf] %v412
                  %v414 = vld [vmem:[%s378 + $0x44] sm:$0xf]
                  %415 = vst [vmem:[%s379 + $0x44] sm:$0xf] %v414
                  %v416 = vld [vmem:[%s378 + $0x48] sm:$0xf]
                  %417 = vst [vmem:[%s379 + $0x48] sm:$0xf] %v416
                  %v418 = vld [vmem:[%s378 + $0x4c] sm:$0xf]
                  %419 = vst [vmem:[%s379 + $0x4c] sm:$0xf] %v418
                  %v420 = vld [vmem:[%s378 + $0x50] sm:$0xf]
                  %421 = vst [vmem:[%s379 + $0x50] sm:$0xf] %v420
                  %v422 = vld [vmem:[%s378 + $0x54] sm:$0xf]
                  %423 = vst [vmem:[%s379 + $0x54] sm:$0xf] %v422
                  %v424 = vld [vmem:[%s378 + $0x58] sm:$0xf]
                  %425 = vst [vmem:[%s379 + $0x58] sm:$0xf] %v424
                  %v426 = vld [vmem:[%s378 + $0x5c] sm:$0xf]
                  %427 = vst [vmem:[%s379 + $0x5c] sm:$0xf] %v426
                  %v428 = vld [vmem:[%s378 + $0x60] sm:$0xf]
                  %429 = vst [vmem:[%s379 + $0x60] sm:$0xf] %v428
                  %v430 = vld [vmem:[%s378 + $0x64] sm:$0xf]
                  %431 = vst [vmem:[%s379 + $0x64] sm:$0xf] %v430
                  %v432 = vld [vmem:[%s378 + $0xd0] sm:$0xf]
                  %433 = vst [vmem:[%s379 + $0x68] sm:$0xf] %v432
                  %v434 = vld [vmem:[%s378 + $0xd4] sm:$0xf]
                  %435 = vst [vmem:[%s379 + $0x6c] sm:$0xf] %v434
                  %v436 = vld [vmem:[%s378 + $0xd8] sm:$0xf]
                  %437 = vst [vmem:[%s379 + $0x70] sm:$0xf] %v436
                  %v438 = vld [vmem:[%s378 + $0xdc] sm:$0xf]
                  %439 = vst [vmem:[%s379 + $0x74] sm:$0xf] %v438
                  %v440 = vld [vmem:[%s378 + $0xe0] sm:$0xf]
                  %441 = vst [vmem:[%s379 + $0x78] sm:$0xf] %v440
                  %v442 = vld [vmem:[%s378 + $0xe4] sm:$0xf]
                  %443 = vst [vmem:[%s379 + $0x7c] sm:$0xf] %v442
                  %v444 = vld [vmem:[%s378 + $0xe8] sm:$0xf]
                  %445 = vst [vmem:[%s379 + $0x80] sm:$0xf] %v444
                  %v446 = vld [vmem:[%s378 + $0xec] sm:$0xf]
                  %447 = vst [vmem:[%s379 + $0x84] sm:$0xf] %v446
                  %v448 = vld [vmem:[%s378 + $0xf0] sm:$0xf]
                  %449 = vst [vmem:[%s379 + $0x88] sm:$0xf] %v448
                  %v450 = vld [vmem:[%s378 + $0xf4] sm:$0xf]
                  %451 = vst [vmem:[%s379 + $0x8c] sm:$0xf] %v450
                  %v452 = vld [vmem:[%s378 + $0xf8] sm:$0xf]
                  %453 = vst [vmem:[%s379 + $0x90] sm:$0xf] %v452
                  %v454 = vld [vmem:[%s378 + $0xfc] sm:$0xf]
                  %455 = vst [vmem:[%s379 + $0x94] sm:$0xf] %v454
                  %v456 = vld [vmem:[%s378 + $0x100] sm:$0xf]
                  %457 = vst [vmem:[%s379 + $0x98] sm:$0xf] %v456
                  %v458 = vld [vmem:[%s378 + $0x104] sm:$0xf]
                  %459 = vst [vmem:[%s379 + $0x9c] sm:$0xf] %v458
                  %v460 = vld [vmem:[%s378 + $0x108] sm:$0xf]
                  %461 = vst [vmem:[%s379 + $0xa0] sm:$0xf] %v460
                  %v462 = vld [vmem:[%s378 + $0x10c] sm:$0xf]
                  %463 = vst [vmem:[%s379 + $0xa4] sm:$0xf] %v462
                  %v464 = vld [vmem:[%s378 + $0x110] sm:$0xf]
                  %465 = vst [vmem:[%s379 + $0xa8] sm:$0xf] %v464
                  %v466 = vld [vmem:[%s378 + $0x114] sm:$0xf]
                  %467 = vst [vmem:[%s379 + $0xac] sm:$0xf] %v466
                  %v468 = vld [vmem:[%s378 + $0x118] sm:$0xf]
                  %469 = vst [vmem:[%s379 + $0xb0] sm:$0xf] %v468
                  %v470 = vld [vmem:[%s378 + $0x11c] sm:$0xf]
                  %471 = vst [vmem:[%s379 + $0xb4] sm:$0xf] %v470
                  %v472 = vld [vmem:[%s378 + $0x120] sm:$0xf]
                  %473 = vst [vmem:[%s379 + $0xb8] sm:$0xf] %v472
                  %v474 = vld [vmem:[%s378 + $0x124] sm:$0xf]
                  %475 = vst [vmem:[%s379 + $0xbc] sm:$0xf] %v474
                  %v476 = vld [vmem:[%s378 + $0x128] sm:$0xf]
                  %477 = vst [vmem:[%s379 + $0xc0] sm:$0xf] %v476
                  %v478 = vld [vmem:[%s378 + $0x12c] sm:$0xf]
                  %479 = vst [vmem:[%s379 + $0xc4] sm:$0xf] %v478
                  %v480 = vld [vmem:[%s378 + $0x130] sm:$0xf]
                  %481 = vst [vmem:[%s379 + $0xc8] sm:$0xf] %v480
                  %v482 = vld [vmem:[%s378 + $0x134] sm:$0xf]
                  %483 = vst [vmem:[%s379 + $0xcc] sm:$0xf] %v482
                  %v484 = vld [vmem:[%s378 + $0x1a0] sm:$0xf]
                  %485 = vst [vmem:[%s379 + $0xd0] sm:$0xf] %v484
                  %v486 = vld [vmem:[%s378 + $0x1a4] sm:$0xf]
                  %487 = vst [vmem:[%s379 + $0xd4] sm:$0xf] %v486
                  %v488 = vld [vmem:[%s378 + $0x1a8] sm:$0xf]
                  %489 = vst [vmem:[%s379 + $0xd8] sm:$0xf] %v488
                  %v490 = vld [vmem:[%s378 + $0x1ac] sm:$0xf]
                  %491 = vst [vmem:[%s379 + $0xdc] sm:$0xf] %v490
                  %v492 = vld [vmem:[%s378 + $0x1b0] sm:$0xf]
                  %493 = vst [vmem:[%s379 + $0xe0] sm:$0xf] %v492
                  %v494 = vld [vmem:[%s378 + $0x1b4] sm:$0xf]
                  %495 = vst [vmem:[%s379 + $0xe4] sm:$0xf] %v494
                  %v496 = vld [vmem:[%s378 + $0x1b8] sm:$0xf]
                  %497 = vst [vmem:[%s379 + $0xe8] sm:$0xf] %v496
                  %v498 = vld [vmem:[%s378 + $0x1bc] sm:$0xf]
                  %499 = vst [vmem:[%s379 + $0xec] sm:$0xf] %v498
                  %v500 = vld [vmem:[%s378 + $0x1c0] sm:$0xf]
                  %501 = vst [vmem:[%s379 + $0xf0] sm:$0xf] %v500
                  %v502 = vld [vmem:[%s378 + $0x1c4] sm:$0xf]
                  %503 = vst [vmem:[%s379 + $0xf4] sm:$0xf] %v502
                  %v504 = vld [vmem:[%s378 + $0x1c8] sm:$0xf]
                  %505 = vst [vmem:[%s379 + $0xf8] sm:$0xf] %v504
                  %v506 = vld [vmem:[%s378 + $0x1cc] sm:$0xf]
                  %507 = vst [vmem:[%s379 + $0xfc] sm:$0xf] %v506
                  %v508 = vld [vmem:[%s378 + $0x1d0] sm:$0xf]
                  %509 = vst [vmem:[%s379 + $0x100] sm:$0xf] %v508
                  %v510 = vld [vmem:[%s378 + $0x1d4] sm:$0xf]
                  %511 = vst [vmem:[%s379 + $0x104] sm:$0xf] %v510
                  %v512 = vld [vmem:[%s378 + $0x1d8] sm:$0xf]
                  %513 = vst [vmem:[%s379 + $0x108] sm:$0xf] %v512
                  %v514 = vld [vmem:[%s378 + $0x1dc] sm:$0xf]
                  %515 = vst [vmem:[%s379 + $0x10c] sm:$0xf] %v514
                  %v516 = vld [vmem:[%s378 + $0x1e0] sm:$0xf]
                  %517 = vst [vmem:[%s379 + $0x110] sm:$0xf] %v516
                  %v518 = vld [vmem:[%s378 + $0x1e4] sm:$0xf]
                  %519 = vst [vmem:[%s379 + $0x114] sm:$0xf] %v518
                  %v520 = vld [vmem:[%s378 + $0x1e8] sm:$0xf]
                  %521 = vst [vmem:[%s379 + $0x118] sm:$0xf] %v520
                  %v522 = vld [vmem:[%s378 + $0x1ec] sm:$0xf]
                  %523 = vst [vmem:[%s379 + $0x11c] sm:$0xf] %v522
                  %v524 = vld [vmem:[%s378 + $0x1f0] sm:$0xf]
                  %525 = vst [vmem:[%s379 + $0x120] sm:$0xf] %v524
                  %v526 = vld [vmem:[%s378 + $0x1f4] sm:$0xf]
                  %527 = vst [vmem:[%s379 + $0x124] sm:$0xf] %v526
                  %v528 = vld [vmem:[%s378 + $0x1f8] sm:$0xf]
                  %529 = vst [vmem:[%s379 + $0x128] sm:$0xf] %v528
                  %v530 = vld [vmem:[%s378 + $0x1fc] sm:$0xf]
                  %531 = vst [vmem:[%s379 + $0x12c] sm:$0xf] %v530
                  %v532 = vld [vmem:[%s378 + $0x200] sm:$0xf]
                  %533 = vst [vmem:[%s379 + $0x130] sm:$0xf] %v532
                  %v534 = vld [vmem:[%s378 + $0x204] sm:$0xf]
                  %535 = vst [vmem:[%s379 + $0x134] sm:$0xf] %v534
                  %v536 = vld [vmem:[%s378 + $0x270] sm:$0xf]
                  %537 = vst [vmem:[%s379 + $0x138] sm:$0xf] %v536
                  %v538 = vld [vmem:[%s378 + $0x274] sm:$0xf]
                  %539 = vst [vmem:[%s379 + $0x13c] sm:$0xf] %v538
                  %v540 = vld [vmem:[%s378 + $0x278] sm:$0xf]
                  %541 = vst [vmem:[%s379 + $0x140] sm:$0xf] %v540
                  %v542 = vld [vmem:[%s378 + $0x27c] sm:$0xf]
                  %543 = vst [vmem:[%s379 + $0x144] sm:$0xf] %v542
                  %v544 = vld [vmem:[%s378 + $0x280] sm:$0xf]
                  %545 = vst [vmem:[%s379 + $0x148] sm:$0xf] %v544
                  %v546 = vld [vmem:[%s378 + $0x284] sm:$0xf]
                  %547 = vst [vmem:[%s379 + $0x14c] sm:$0xf] %v546
                  %v548 = vld [vmem:[%s378 + $0x288] sm:$0xf]
                  %549 = vst [vmem:[%s379 + $0x150] sm:$0xf] %v548
                  %v550 = vld [vmem:[%s378 + $0x28c] sm:$0xf]
                  %551 = vst [vmem:[%s379 + $0x154] sm:$0xf] %v550
                  %v552 = vld [vmem:[%s378 + $0x290] sm:$0xf]
                  %553 = vst [vmem:[%s379 + $0x158] sm:$0xf] %v552
                  %v554 = vld [vmem:[%s378 + $0x294] sm:$0xf]
                  %555 = vst [vmem:[%s379 + $0x15c] sm:$0xf] %v554
                  %v556 = vld [vmem:[%s378 + $0x298] sm:$0xf]
                  %557 = vst [vmem:[%s379 + $0x160] sm:$0xf] %v556
                  %v558 = vld [vmem:[%s378 + $0x29c] sm:$0xf]
                  %559 = vst [vmem:[%s379 + $0x164] sm:$0xf] %v558
                  %v560 = vld [vmem:[%s378 + $0x2a0] sm:$0xf]
                  %561 = vst [vmem:[%s379 + $0x168] sm:$0xf] %v560
                  %v562 = vld [vmem:[%s378 + $0x2a4] sm:$0xf]
                  %563 = vst [vmem:[%s379 + $0x16c] sm:$0xf] %v562
                  %v564 = vld [vmem:[%s378 + $0x2a8] sm:$0xf]
                  %565 = vst [vmem:[%s379 + $0x170] sm:$0xf] %v564
                  %v566 = vld [vmem:[%s378 + $0x2ac] sm:$0xf]
                  %567 = vst [vmem:[%s379 + $0x174] sm:$0xf] %v566
                  %v568 = vld [vmem:[%s378 + $0x2b0] sm:$0xf]
                  %569 = vst [vmem:[%s379 + $0x178] sm:$0xf] %v568
                  %v570 = vld [vmem:[%s378 + $0x2b4] sm:$0xf]
                  %571 = vst [vmem:[%s379 + $0x17c] sm:$0xf] %v570
                  %v572 = vld [vmem:[%s378 + $0x2b8] sm:$0xf]
                  %573 = vst [vmem:[%s379 + $0x180] sm:$0xf] %v572
                  %v574 = vld [vmem:[%s378 + $0x2bc] sm:$0xf]
                  %575 = vst [vmem:[%s379 + $0x184] sm:$0xf] %v574
                  %v576 = vld [vmem:[%s378 + $0x2c0] sm:$0xf]
                  %577 = vst [vmem:[%s379 + $0x188] sm:$0xf] %v576
                  %v578 = vld [vmem:[%s378 + $0x2c4] sm:$0xf]
                  %579 = vst [vmem:[%s379 + $0x18c] sm:$0xf] %v578
                  %v580 = vld [vmem:[%s378 + $0x2c8] sm:$0xf]
                  %581 = vst [vmem:[%s379 + $0x190] sm:$0xf] %v580
                  %v582 = vld [vmem:[%s378 + $0x2cc] sm:$0xf]
                  %583 = vst [vmem:[%s379 + $0x194] sm:$0xf] %v582
                  %v584 = vld [vmem:[%s378 + $0x2d0] sm:$0xf]
                  %585 = vst [vmem:[%s379 + $0x198] sm:$0xf] %v584
                  %v586 = vld [vmem:[%s378 + $0x2d4] sm:$0xf]
                  %587 = vst [vmem:[%s379 + $0x19c] sm:$0xf] %v586
                $region63: #{lenet_forward.3} parent=50 // loop_footer
                  %s377 = sadd.s32 1, %s373
                $region64: #{lenet_forward.3} parent=50 // loop_footer_branch
                  %372 = sbr.rel target = $region60
                $region65: #{lenet_forward.3} parent=50 // loop_exit
                  _
              $region51: #{lenet_forward.3} parent=35 // pred_fallthru
                _
            $region36: #{lenet_forward.3} parent=31 // pred_fallthru
              _
            // Predicated region
            $region37: #{lenet_forward.3} parent=31 // pred_check
              _
            $region38: #{lenet_forward.3} parent=31 // pred_check_branch
              %143 = sbr.rel (0) target = $region40
            $region39: #{lenet_forward.3} parent=31 // pred_region
              loop: start=0, step=1, limit=1
              $region41: #{lenet_forward.3} parent=39 // loop_pre_header
                _
              $region42: #{lenet_forward.3} parent=39 // loop_header
                %s146 = sphi 0, %s150
                %p147 = scmp.ge.s32.totalorder %s146, 1
                %s151 = sphi %s137, %s137
                %s152 = sphi %s134, %s134
              $region43: #{lenet_forward.3} parent=39 // loop_header_branch
                %149 = sbr.rel (%p147) target = $region47
              $region44: #{lenet_forward.3} parent=39 // loop_body
                %v153 = vld [vmem:[%s151] sm:$0xf]
                %154 = vst [vmem:[%s152] sm:$0xf] %v153
                %v155 = vld [vmem:[%s151 + $0x4] sm:$0xf]
                %156 = vst [vmem:[%s152 + $0x4] sm:$0xf] %v155
                %v157 = vld [vmem:[%s151 + $0x8] sm:$0xf]
                %158 = vst [vmem:[%s152 + $0x8] sm:$0xf] %v157
                %v159 = vld [vmem:[%s151 + $0xc] sm:$0xf]
                %160 = vst [vmem:[%s152 + $0xc] sm:$0xf] %v159
                %v161 = vld [vmem:[%s151 + $0x10] sm:$0xf]
                %162 = vst [vmem:[%s152 + $0x10] sm:$0xf] %v161
                %v163 = vld [vmem:[%s151 + $0x14] sm:$0xf]
                %164 = vst [vmem:[%s152 + $0x14] sm:$0xf] %v163
                %v165 = vld [vmem:[%s151 + $0x18] sm:$0xf]
                %166 = vst [vmem:[%s152 + $0x18] sm:$0xf] %v165
                %v167 = vld [vmem:[%s151 + $0x1c] sm:$0xf]
                %168 = vst [vmem:[%s152 + $0x1c] sm:$0xf] %v167
                %v169 = vld [vmem:[%s151 + $0x20] sm:$0xf]
                %170 = vst [vmem:[%s152 + $0x20] sm:$0xf] %v169
                %v171 = vld [vmem:[%s151 + $0x24] sm:$0xf]
                %172 = vst [vmem:[%s152 + $0x24] sm:$0xf] %v171
                %v173 = vld [vmem:[%s151 + $0x28] sm:$0xf]
                %174 = vst [vmem:[%s152 + $0x28] sm:$0xf] %v173
                %v175 = vld [vmem:[%s151 + $0x2c] sm:$0xf]
                %176 = vst [vmem:[%s152 + $0x2c] sm:$0xf] %v175
                %v177 = vld [vmem:[%s151 + $0x30] sm:$0xf]
                %178 = vst [vmem:[%s152 + $0x30] sm:$0xf] %v177
                %v179 = vld [vmem:[%s151 + $0x34] sm:$0xf]
                %180 = vst [vmem:[%s152 + $0x34] sm:$0xf] %v179
                %v181 = vld [vmem:[%s151 + $0x38] sm:$0xf]
                %182 = vst [vmem:[%s152 + $0x38] sm:$0xf] %v181
                %v183 = vld [vmem:[%s151 + $0x3c] sm:$0xf]
                %184 = vst [vmem:[%s152 + $0x3c] sm:$0xf] %v183
                %v185 = vld [vmem:[%s151 + $0x40] sm:$0xf]
                %186 = vst [vmem:[%s152 + $0x40] sm:$0xf] %v185
                %v187 = vld [vmem:[%s151 + $0x44] sm:$0xf]
                %188 = vst [vmem:[%s152 + $0x44] sm:$0xf] %v187
                %v189 = vld [vmem:[%s151 + $0x48] sm:$0xf]
                %190 = vst [vmem:[%s152 + $0x48] sm:$0xf] %v189
                %v191 = vld [vmem:[%s151 + $0x4c] sm:$0xf]
                %192 = vst [vmem:[%s152 + $0x4c] sm:$0xf] %v191
                %v193 = vld [vmem:[%s151 + $0x50] sm:$0xf]
                %194 = vst [vmem:[%s152 + $0x50] sm:$0xf] %v193
                %v195 = vld [vmem:[%s151 + $0x54] sm:$0xf]
                %196 = vst [vmem:[%s152 + $0x54] sm:$0xf] %v195
                %v197 = vld [vmem:[%s151 + $0x58] sm:$0xf]
                %198 = vst [vmem:[%s152 + $0x58] sm:$0xf] %v197
                %v199 = vld [vmem:[%s151 + $0x5c] sm:$0xf]
                %200 = vst [vmem:[%s152 + $0x5c] sm:$0xf] %v199
                %v201 = vld [vmem:[%s151 + $0x60] sm:$0xf]
                %202 = vst [vmem:[%s152 + $0x60] sm:$0xf] %v201
                %v203 = vld [vmem:[%s151 + $0x64] sm:$0xf]
                %204 = vst [vmem:[%s152 + $0x64] sm:$0xf] %v203
                %v205 = vld [vmem:[%s151 + $0xd0] sm:$0xf]
                %206 = vst [vmem:[%s152 + $0x68] sm:$0xf] %v205
                %v207 = vld [vmem:[%s151 + $0xd4] sm:$0xf]
                %208 = vst [vmem:[%s152 + $0x6c] sm:$0xf] %v207
                %v209 = vld [vmem:[%s151 + $0xd8] sm:$0xf]
                %210 = vst [vmem:[%s152 + $0x70] sm:$0xf] %v209
                %v211 = vld [vmem:[%s151 + $0xdc] sm:$0xf]
                %212 = vst [vmem:[%s152 + $0x74] sm:$0xf] %v211
                %v213 = vld [vmem:[%s151 + $0xe0] sm:$0xf]
                %214 = vst [vmem:[%s152 + $0x78] sm:$0xf] %v213
                %v215 = vld [vmem:[%s151 + $0xe4] sm:$0xf]
                %216 = vst [vmem:[%s152 + $0x7c] sm:$0xf] %v215
                %v217 = vld [vmem:[%s151 + $0xe8] sm:$0xf]
                %218 = vst [vmem:[%s152 + $0x80] sm:$0xf] %v217
                %v219 = vld [vmem:[%s151 + $0xec] sm:$0xf]
                %220 = vst [vmem:[%s152 + $0x84] sm:$0xf] %v219
                %v221 = vld [vmem:[%s151 + $0xf0] sm:$0xf]
                %222 = vst [vmem:[%s152 + $0x88] sm:$0xf] %v221
                %v223 = vld [vmem:[%s151 + $0xf4] sm:$0xf]
                %224 = vst [vmem:[%s152 + $0x8c] sm:$0xf] %v223
                %v225 = vld [vmem:[%s151 + $0xf8] sm:$0xf]
                %226 = vst [vmem:[%s152 + $0x90] sm:$0xf] %v225
                %v227 = vld [vmem:[%s151 + $0xfc] sm:$0xf]
                %228 = vst [vmem:[%s152 + $0x94] sm:$0xf] %v227
                %v229 = vld [vmem:[%s151 + $0x100] sm:$0xf]
                %230 = vst [vmem:[%s152 + $0x98] sm:$0xf] %v229
                %v231 = vld [vmem:[%s151 + $0x104] sm:$0xf]
                %232 = vst [vmem:[%s152 + $0x9c] sm:$0xf] %v231
                %v233 = vld [vmem:[%s151 + $0x108] sm:$0xf]
                %234 = vst [vmem:[%s152 + $0xa0] sm:$0xf] %v233
                %v235 = vld [vmem:[%s151 + $0x10c] sm:$0xf]
                %236 = vst [vmem:[%s152 + $0xa4] sm:$0xf] %v235
                %v237 = vld [vmem:[%s151 + $0x110] sm:$0xf]
                %238 = vst [vmem:[%s152 + $0xa8] sm:$0xf] %v237
                %v239 = vld [vmem:[%s151 + $0x114] sm:$0xf]
                %240 = vst [vmem:[%s152 + $0xac] sm:$0xf] %v239
                %v241 = vld [vmem:[%s151 + $0x118] sm:$0xf]
                %242 = vst [vmem:[%s152 + $0xb0] sm:$0xf] %v241
                %v243 = vld [vmem:[%s151 + $0x11c] sm:$0xf]
                %244 = vst [vmem:[%s152 + $0xb4] sm:$0xf] %v243
                %v245 = vld [vmem:[%s151 + $0x120] sm:$0xf]
                %246 = vst [vmem:[%s152 + $0xb8] sm:$0xf] %v245
                %v247 = vld [vmem:[%s151 + $0x124] sm:$0xf]
                %248 = vst [vmem:[%s152 + $0xbc] sm:$0xf] %v247
                %v249 = vld [vmem:[%s151 + $0x128] sm:$0xf]
                %250 = vst [vmem:[%s152 + $0xc0] sm:$0xf] %v249
                %v251 = vld [vmem:[%s151 + $0x12c] sm:$0xf]
                %252 = vst [vmem:[%s152 + $0xc4] sm:$0xf] %v251
                %v253 = vld [vmem:[%s151 + $0x130] sm:$0xf]
                %254 = vst [vmem:[%s152 + $0xc8] sm:$0xf] %v253
                %v255 = vld [vmem:[%s151 + $0x134] sm:$0xf]
                %256 = vst [vmem:[%s152 + $0xcc] sm:$0xf] %v255
                %v257 = vld [vmem:[%s151 + $0x1a0] sm:$0xf]
                %258 = vst [vmem:[%s152 + $0xd0] sm:$0xf] %v257
                %v259 = vld [vmem:[%s151 + $0x1a4] sm:$0xf]
                %260 = vst [vmem:[%s152 + $0xd4] sm:$0xf] %v259
                %v261 = vld [vmem:[%s151 + $0x1a8] sm:$0xf]
                %262 = vst [vmem:[%s152 + $0xd8] sm:$0xf] %v261
                %v263 = vld [vmem:[%s151 + $0x1ac] sm:$0xf]
                %264 = vst [vmem:[%s152 + $0xdc] sm:$0xf] %v263
                %v265 = vld [vmem:[%s151 + $0x1b0] sm:$0xf]
                %266 = vst [vmem:[%s152 + $0xe0] sm:$0xf] %v265
                %v267 = vld [vmem:[%s151 + $0x1b4] sm:$0xf]
                %268 = vst [vmem:[%s152 + $0xe4] sm:$0xf] %v267
                %v269 = vld [vmem:[%s151 + $0x1b8] sm:$0xf]
                %270 = vst [vmem:[%s152 + $0xe8] sm:$0xf] %v269
                %v271 = vld [vmem:[%s151 + $0x1bc] sm:$0xf]
                %272 = vst [vmem:[%s152 + $0xec] sm:$0xf] %v271
                %v273 = vld [vmem:[%s151 + $0x1c0] sm:$0xf]
                %274 = vst [vmem:[%s152 + $0xf0] sm:$0xf] %v273
                %v275 = vld [vmem:[%s151 + $0x1c4] sm:$0xf]
                %276 = vst [vmem:[%s152 + $0xf4] sm:$0xf] %v275
                %v277 = vld [vmem:[%s151 + $0x1c8] sm:$0xf]
                %278 = vst [vmem:[%s152 + $0xf8] sm:$0xf] %v277
                %v279 = vld [vmem:[%s151 + $0x1cc] sm:$0xf]
                %280 = vst [vmem:[%s152 + $0xfc] sm:$0xf] %v279
                %v281 = vld [vmem:[%s151 + $0x1d0] sm:$0xf]
                %282 = vst [vmem:[%s152 + $0x100] sm:$0xf] %v281
                %v283 = vld [vmem:[%s151 + $0x1d4] sm:$0xf]
                %284 = vst [vmem:[%s152 + $0x104] sm:$0xf] %v283
                %v285 = vld [vmem:[%s151 + $0x1d8] sm:$0xf]
                %286 = vst [vmem:[%s152 + $0x108] sm:$0xf] %v285
                %v287 = vld [vmem:[%s151 + $0x1dc] sm:$0xf]
                %288 = vst [vmem:[%s152 + $0x10c] sm:$0xf] %v287
                %v289 = vld [vmem:[%s151 + $0x1e0] sm:$0xf]
                %290 = vst [vmem:[%s152 + $0x110] sm:$0xf] %v289
                %v291 = vld [vmem:[%s151 + $0x1e4] sm:$0xf]
                %292 = vst [vmem:[%s152 + $0x114] sm:$0xf] %v291
                %v293 = vld [vmem:[%s151 + $0x1e8] sm:$0xf]
                %294 = vst [vmem:[%s152 + $0x118] sm:$0xf] %v293
                %v295 = vld [vmem:[%s151 + $0x1ec] sm:$0xf]
                %296 = vst [vmem:[%s152 + $0x11c] sm:$0xf] %v295
                %v297 = vld [vmem:[%s151 + $0x1f0] sm:$0xf]
                %298 = vst [vmem:[%s152 + $0x120] sm:$0xf] %v297
                %v299 = vld [vmem:[%s151 + $0x1f4] sm:$0xf]
                %300 = vst [vmem:[%s152 + $0x124] sm:$0xf] %v299
                %v301 = vld [vmem:[%s151 + $0x1f8] sm:$0xf]
                %302 = vst [vmem:[%s152 + $0x128] sm:$0xf] %v301
                %v303 = vld [vmem:[%s151 + $0x1fc] sm:$0xf]
                %304 = vst [vmem:[%s152 + $0x12c] sm:$0xf] %v303
                %v305 = vld [vmem:[%s151 + $0x200] sm:$0xf]
                %306 = vst [vmem:[%s152 + $0x130] sm:$0xf] %v305
                %v307 = vld [vmem:[%s151 + $0x204] sm:$0xf]
                %308 = vst [vmem:[%s152 + $0x134] sm:$0xf] %v307
                %v309 = vld [vmem:[%s151 + $0x270] sm:$0xf]
                %310 = vst [vmem:[%s152 + $0x138] sm:$0xf] %v309
                %v311 = vld [vmem:[%s151 + $0x274] sm:$0xf]
                %312 = vst [vmem:[%s152 + $0x13c] sm:$0xf] %v311
                %v313 = vld [vmem:[%s151 + $0x278] sm:$0xf]
                %314 = vst [vmem:[%s152 + $0x140] sm:$0xf] %v313
                %v315 = vld [vmem:[%s151 + $0x27c] sm:$0xf]
                %316 = vst [vmem:[%s152 + $0x144] sm:$0xf] %v315
                %v317 = vld [vmem:[%s151 + $0x280] sm:$0xf]
                %318 = vst [vmem:[%s152 + $0x148] sm:$0xf] %v317
                %v319 = vld [vmem:[%s151 + $0x284] sm:$0xf]
                %320 = vst [vmem:[%s152 + $0x14c] sm:$0xf] %v319
                %v321 = vld [vmem:[%s151 + $0x288] sm:$0xf]
                %322 = vst [vmem:[%s152 + $0x150] sm:$0xf] %v321
                %v323 = vld [vmem:[%s151 + $0x28c] sm:$0xf]
                %324 = vst [vmem:[%s152 + $0x154] sm:$0xf] %v323
                %v325 = vld [vmem:[%s151 + $0x290] sm:$0xf]
                %326 = vst [vmem:[%s152 + $0x158] sm:$0xf] %v325
                %v327 = vld [vmem:[%s151 + $0x294] sm:$0xf]
                %328 = vst [vmem:[%s152 + $0x15c] sm:$0xf] %v327
                %v329 = vld [vmem:[%s151 + $0x298] sm:$0xf]
                %330 = vst [vmem:[%s152 + $0x160] sm:$0xf] %v329
                %v331 = vld [vmem:[%s151 + $0x29c] sm:$0xf]
                %332 = vst [vmem:[%s152 + $0x164] sm:$0xf] %v331
                %v333 = vld [vmem:[%s151 + $0x2a0] sm:$0xf]
                %334 = vst [vmem:[%s152 + $0x168] sm:$0xf] %v333
                %v335 = vld [vmem:[%s151 + $0x2a4] sm:$0xf]
                %336 = vst [vmem:[%s152 + $0x16c] sm:$0xf] %v335
                %v337 = vld [vmem:[%s151 + $0x2a8] sm:$0xf]
                %338 = vst [vmem:[%s152 + $0x170] sm:$0xf] %v337
                %v339 = vld [vmem:[%s151 + $0x2ac] sm:$0xf]
                %340 = vst [vmem:[%s152 + $0x174] sm:$0xf] %v339
                %v341 = vld [vmem:[%s151 + $0x2b0] sm:$0xf]
                %342 = vst [vmem:[%s152 + $0x178] sm:$0xf] %v341
                %v343 = vld [vmem:[%s151 + $0x2b4] sm:$0xf]
                %344 = vst [vmem:[%s152 + $0x17c] sm:$0xf] %v343
                %v345 = vld [vmem:[%s151 + $0x2b8] sm:$0xf]
                %346 = vst [vmem:[%s152 + $0x180] sm:$0xf] %v345
                %v347 = vld [vmem:[%s151 + $0x2bc] sm:$0xf]
                %348 = vst [vmem:[%s152 + $0x184] sm:$0xf] %v347
                %v349 = vld [vmem:[%s151 + $0x2c0] sm:$0xf]
                %350 = vst [vmem:[%s152 + $0x188] sm:$0xf] %v349
                %v351 = vld [vmem:[%s151 + $0x2c4] sm:$0xf]
                %352 = vst [vmem:[%s152 + $0x18c] sm:$0xf] %v351
                %v353 = vld [vmem:[%s151 + $0x2c8] sm:$0xf]
                %354 = vst [vmem:[%s152 + $0x190] sm:$0xf] %v353
                %v355 = vld [vmem:[%s151 + $0x2cc] sm:$0xf]
                %356 = vst [vmem:[%s152 + $0x194] sm:$0xf] %v355
                %v357 = vld [vmem:[%s151 + $0x2d0] sm:$0xf]
                %358 = vst [vmem:[%s152 + $0x198] sm:$0xf] %v357
                %v359 = vld [vmem:[%s151 + $0x2d4] sm:$0xf]
                %360 = vst [vmem:[%s152 + $0x19c] sm:$0xf] %v359
              $region45: #{lenet_forward.3} parent=39 // loop_footer
                %s150 = sadd.s32 1, %s146
              $region46: #{lenet_forward.3} parent=39 // loop_footer_branch
                %145 = sbr.rel target = $region42
              $region47: #{lenet_forward.3} parent=39 // loop_exit
                _
            $region40: #{lenet_forward.3} parent=31 // pred_fallthru
              _
          $region32: #{lenet_forward.3} parent=27 // pred_fallthru
            _
          %588 = vnop
        $region28: #{lenet_forward.3} parent=23 // pred_fallthru
          _
      $region24: #{lenet_forward.3} parent=5 // pred_fallthru
        _
      %p589 = scmp.le.s32.totalorder 1, %s9
      %p590 = scmp.lt.s32.totalorder %s9, 3
      %p591 = pnand %p589, %p590
      %p592 = pneg %p591
      // Predicated region
      $region66: #{lenet_forward.3} parent=5 // pred_check
        _
      $region67: #{lenet_forward.3} parent=5 // pred_check_branch
        %594 = sbr.rel (%p591) target = $region69
      $region68: #{lenet_forward.3} parent=5 // pred_region
        %s595 = ssub.s32 %s9, 1
        %s596 = sand.u32 %s22, 1
        %s597 = sand.u32 %s22, 1
        %s598 = smul.addr %s597, 416
        %s599 = scalar_lea.vmem [#allocation2], %s598
        // Predicated region
        $region70: #{lenet_forward.3} parent=68 // pred_check
          %p600 = pneg %p35
        $region71: #{lenet_forward.3} parent=68 // pred_check_branch
          %602 = sbr.rel (%p600) target = $region73
        $region72: #{lenet_forward.3} parent=68 // pred_region
          _
        $region73: #{lenet_forward.3} parent=68 // pred_fallthru
          _
        %s603 = sand.u32 %s22, 1
        %s604 = sand.u32 %s22, 1
        %s605 = smul.addr %s604, 416
        %s606 = scalar_lea.vmem [#allocation2], %s605
        %p607 = pneg %p35
        %p608 = pneg %p32
        %p609 = pneg %p56
        %p610 = pneg %p53
        %p611 = pneg %p77
        %p612 = pneg %p74
        %p613 = pneg %p103
        %p614 = pneg %p100
        %s615 = smul.u32 26, %s14
        %p616 = scmp.lt.s32.totalorder %s615, 51
        %s617 = scalar_select %p616, %s615, 51
        %s618 = smul.addr %s617, 4
        %s619 = scalar_lea.vmem %s3, %s618
        %s620 = smul.u32 26, %s14
        %s621 = smul.u32 26, %s14
        %p622 = scmp.lt.s32.totalorder %s621, 51
        %s623 = scalar_select %p622, %s621, 51
        %s624 = smul.addr %s623, 4
        %s625 = scalar_lea.vmem %s3, %s624
        %s626 = smul.u32 26, %s14
        %v628 = vld [vmem:[%s599] sm:$0xf]
        %v629 = vld [vmem:[%s599 + $0x4] sm:$0xf]
        %v630 = vld [vmem:[%s599 + $0x8] sm:$0xf]
        %v631 = vld [vmem:[%s599 + $0xc] sm:$0xf]
        %v632 = vld [vmem:[%s599 + $0x10] sm:$0xf]
        %v633 = vld [vmem:[%s599 + $0x14] sm:$0xf]
        %v634 = vld [vmem:[%s599 + $0x18] sm:$0xf]
        %v635 = vld [vmem:[%s599 + $0x1c] sm:$0xf]
        %v636 = vld [vmem:[%s599 + $0x20] sm:$0xf]
        %v637 = vld [vmem:[%s599 + $0x24] sm:$0xf]
        %v638 = vld [vmem:[%s599 + $0x28] sm:$0xf]
        %v639 = vld [vmem:[%s599 + $0x2c] sm:$0xf]
        %v640 = vld [vmem:[%s599 + $0x30] sm:$0xf]
        %v641 = vld [vmem:[%s599 + $0x34] sm:$0xf]
        %v642 = vld [vmem:[%s599 + $0x38] sm:$0xf]
        %v643 = vld [vmem:[%s599 + $0x3c] sm:$0xf]
        %v644 = vld [vmem:[%s599 + $0x40] sm:$0xf]
        %v645 = vld [vmem:[%s599 + $0x44] sm:$0xf]
        %v646 = vld [vmem:[%s599 + $0x48] sm:$0xf]
        %v647 = vld [vmem:[%s599 + $0x4c] sm:$0xf]
        %v648 = vld [vmem:[%s599 + $0x50] sm:$0xf]
        %v649 = vld [vmem:[%s599 + $0x54] sm:$0xf]
        %v650 = vld [vmem:[%s599 + $0x58] sm:$0xf]
        %v651 = vld [vmem:[%s599 + $0x5c] sm:$0xf]
        %v652 = vld [vmem:[%s599 + $0x60] sm:$0xf]
        %v653 = vld [vmem:[%s599 + $0x64] sm:$0xf]
        %v654 = vld [vmem:[%s599 + $0x68] sm:$0xf]
        %v655 = vld [vmem:[%s599 + $0x6c] sm:$0xf]
        %v656 = vld [vmem:[%s599 + $0x70] sm:$0xf]
        %v657 = vld [vmem:[%s599 + $0x74] sm:$0xf]
        %v658 = vld [vmem:[%s599 + $0x78] sm:$0xf]
        %v659 = vld [vmem:[%s599 + $0x7c] sm:$0xf]
        %v660 = vld [vmem:[%s599 + $0x80] sm:$0xf]
        %v661 = vld [vmem:[%s599 + $0x84] sm:$0xf]
        %v662 = vld [vmem:[%s599 + $0x88] sm:$0xf]
        %v663 = vld [vmem:[%s599 + $0x8c] sm:$0xf]
        %v664 = vld [vmem:[%s599 + $0x90] sm:$0xf]
        %v665 = vld [vmem:[%s599 + $0x94] sm:$0xf]
        %v666 = vld [vmem:[%s599 + $0x98] sm:$0xf]
        %v667 = vld [vmem:[%s599 + $0x9c] sm:$0xf]
        %v668 = vld [vmem:[%s599 + $0xa0] sm:$0xf]
        %v669 = vld [vmem:[%s599 + $0xa4] sm:$0xf]
        %v670 = vld [vmem:[%s599 + $0xa8] sm:$0xf]
        %v671 = vld [vmem:[%s599 + $0xac] sm:$0xf]
        %v672 = vld [vmem:[%s599 + $0xb0] sm:$0xf]
        %v673 = vld [vmem:[%s599 + $0xb4] sm:$0xf]
        %v674 = vld [vmem:[%s599 + $0xb8] sm:$0xf]
        %v675 = vld [vmem:[%s599 + $0xbc] sm:$0xf]
        %v676 = vld [vmem:[%s599 + $0xc0] sm:$0xf]
        %v677 = vld [vmem:[%s599 + $0xc4] sm:$0xf]
        %v678 = vld [vmem:[%s599 + $0xc8] sm:$0xf]
        %v679 = vld [vmem:[%s599 + $0xcc] sm:$0xf]
        %v680 = vld [vmem:[%s599 + $0xd0] sm:$0xf]
        %v681 = vld [vmem:[%s599 + $0xd4] sm:$0xf]
        %v682 = vld [vmem:[%s599 + $0xd8] sm:$0xf]
        %v683 = vld [vmem:[%s599 + $0xdc] sm:$0xf]
        %v684 = vld [vmem:[%s599 + $0xe0] sm:$0xf]
        %v685 = vld [vmem:[%s599 + $0xe4] sm:$0xf]
        %v686 = vld [vmem:[%s599 + $0xe8] sm:$0xf]
        %v687 = vld [vmem:[%s599 + $0xec] sm:$0xf]
        %v688 = vld [vmem:[%s599 + $0xf0] sm:$0xf]
        %v689 = vld [vmem:[%s599 + $0xf4] sm:$0xf]
        %v690 = vld [vmem:[%s599 + $0xf8] sm:$0xf]
        %v691 = vld [vmem:[%s599 + $0xfc] sm:$0xf]
        %v692 = vld [vmem:[%s599 + $0x100] sm:$0xf]
        %v693 = vld [vmem:[%s599 + $0x104] sm:$0xf]
        %v694 = vld [vmem:[%s599 + $0x108] sm:$0xf]
        %v695 = vld [vmem:[%s599 + $0x10c] sm:$0xf]
        %v696 = vld [vmem:[%s599 + $0x110] sm:$0xf]
        %v697 = vld [vmem:[%s599 + $0x114] sm:$0xf]
        %v698 = vld [vmem:[%s599 + $0x118] sm:$0xf]
        %v699 = vld [vmem:[%s599 + $0x11c] sm:$0xf]
        %v700 = vld [vmem:[%s599 + $0x120] sm:$0xf]
        %v701 = vld [vmem:[%s599 + $0x124] sm:$0xf]
        %v702 = vld [vmem:[%s599 + $0x128] sm:$0xf]
        %v703 = vld [vmem:[%s599 + $0x12c] sm:$0xf]
        %v704 = vld [vmem:[%s599 + $0x130] sm:$0xf]
        %v705 = vld [vmem:[%s599 + $0x134] sm:$0xf]
        %v706 = vld [vmem:[%s599 + $0x138] sm:$0xf]
        %v707 = vld [vmem:[%s599 + $0x13c] sm:$0xf]
        %v708 = vld [vmem:[%s599 + $0x140] sm:$0xf]
        %v709 = vld [vmem:[%s599 + $0x144] sm:$0xf]
        %v710 = vld [vmem:[%s599 + $0x148] sm:$0xf]
        %v711 = vld [vmem:[%s599 + $0x14c] sm:$0xf]
        %v712 = vld [vmem:[%s599 + $0x150] sm:$0xf]
        %v713 = vld [vmem:[%s599 + $0x154] sm:$0xf]
        %v714 = vld [vmem:[%s599 + $0x158] sm:$0xf]
        %v715 = vld [vmem:[%s599 + $0x15c] sm:$0xf]
        %v716 = vld [vmem:[%s599 + $0x160] sm:$0xf]
        %v717 = vld [vmem:[%s599 + $0x164] sm:$0xf]
        %v718 = vld [vmem:[%s599 + $0x168] sm:$0xf]
        %v719 = vld [vmem:[%s599 + $0x16c] sm:$0xf]
        %v720 = vld [vmem:[%s599 + $0x170] sm:$0xf]
        %v721 = vld [vmem:[%s599 + $0x174] sm:$0xf]
        %v722 = vld [vmem:[%s599 + $0x178] sm:$0xf]
        %v723 = vld [vmem:[%s599 + $0x17c] sm:$0xf]
        %v724 = vld [vmem:[%s599 + $0x180] sm:$0xf]
        %v725 = vld [vmem:[%s599 + $0x184] sm:$0xf]
        %v726 = vld [vmem:[%s599 + $0x188] sm:$0xf]
        %v727 = vld [vmem:[%s599 + $0x18c] sm:$0xf]
        %v728 = vld [vmem:[%s599 + $0x190] sm:$0xf]
        %v729 = vld [vmem:[%s599 + $0x194] sm:$0xf]
        %v730 = vld [vmem:[%s599 + $0x198] sm:$0xf]
        %v731 = vld [vmem:[%s599 + $0x19c] sm:$0xf]
        %v732 = vld [vmem:[%s1] sm:$0xf]
        %v733 = vld [vmem:[%s1 + $0x4] sm:$0xf]
        %v734 = vld [vmem:[%s1 + $0x8] sm:$0xf]
        %v735 = vld [vmem:[%s1 + $0xc] sm:$0xf]
        %v736 = vld [vmem:[%s1 + $0x10] sm:$0xf]
        %v737 = vld [vmem:[%s1 + $0x14] sm:$0xf]
        %v738 = vld [vmem:[%s1 + $0x18] sm:$0xf]
        %v739 = vld [vmem:[%s1 + $0x1c] sm:$0xf]
        %v740 = vld [vmem:[%s1 + $0x20] sm:$0xf]
        %v741 = vld [vmem:[%s1 + $0x24] sm:$0x3]
        %v846 = vunpack.c.l.b16 %v628
        %v847 = vunpack.c.l.b16 %v629
        %v848 = vunpack.c.l.b16 %v630
        %v849 = vunpack.c.l.b16 %v631
        %v850 = vunpack.c.l.b16 %v632
        %v851 = vunpack.c.l.b16 %v633
        %v852 = vunpack.c.l.b16 %v634
        %v853 = vunpack.c.l.b16 %v635
        %v854 = vunpack.c.l.b16 %v636
        %v855 = vunpack.c.l.b16 %v637
        %v856 = vunpack.c.l.b16 %v638
        %v857 = vunpack.c.l.b16 %v639
        %v858 = vunpack.c.l.b16 %v640
        %v859 = vunpack.c.l.b16 %v641
        %v860 = vunpack.c.l.b16 %v642
        %v861 = vunpack.c.l.b16 %v643
        %v862 = vunpack.c.l.b16 %v644
        %v863 = vunpack.c.l.b16 %v645
        %v864 = vunpack.c.l.b16 %v646
        %v865 = vunpack.c.l.b16 %v647
        %v866 = vunpack.c.l.b16 %v648
        %v867 = vunpack.c.l.b16 %v649
        %v868 = vunpack.c.l.b16 %v650
        %v869 = vunpack.c.l.b16 %v651
        %v870 = vunpack.c.l.b16 %v652
        %v871 = vunpack.c.l.b16 %v653
        %v872 = vunpack.c.l.b16 %v654
        %v873 = vunpack.c.l.b16 %v655
        %v874 = vunpack.c.l.b16 %v656
        %v875 = vunpack.c.l.b16 %v657
        %v876 = vunpack.c.l.b16 %v658
        %v877 = vunpack.c.l.b16 %v659
        %v878 = vunpack.c.l.b16 %v660
        %v879 = vunpack.c.l.b16 %v661
        %v880 = vunpack.c.l.b16 %v662
        %v881 = vunpack.c.l.b16 %v663
        %v882 = vunpack.c.l.b16 %v664
        %v883 = vunpack.c.l.b16 %v665
        %v884 = vunpack.c.l.b16 %v666
        %v885 = vunpack.c.l.b16 %v667
        %v886 = vunpack.c.l.b16 %v668
        %v887 = vunpack.c.l.b16 %v669
        %v888 = vunpack.c.l.b16 %v670
        %v889 = vunpack.c.l.b16 %v671
        %v890 = vunpack.c.l.b16 %v672
        %v891 = vunpack.c.l.b16 %v673
        %v892 = vunpack.c.l.b16 %v674
        %v893 = vunpack.c.l.b16 %v675
        %v894 = vunpack.c.l.b16 %v676
        %v895 = vunpack.c.l.b16 %v677
        %v896 = vunpack.c.l.b16 %v678
        %v897 = vunpack.c.l.b16 %v679
        %v898 = vunpack.c.l.b16 %v680
        %v899 = vunpack.c.l.b16 %v681
        %v900 = vunpack.c.l.b16 %v682
        %v901 = vunpack.c.l.b16 %v683
        %v902 = vunpack.c.l.b16 %v684
        %v903 = vunpack.c.l.b16 %v685
        %v904 = vunpack.c.l.b16 %v686
        %v905 = vunpack.c.l.b16 %v687
        %v906 = vunpack.c.l.b16 %v688
        %v907 = vunpack.c.l.b16 %v689
        %v908 = vunpack.c.l.b16 %v690
        %v909 = vunpack.c.l.b16 %v691
        %v910 = vunpack.c.l.b16 %v692
        %v911 = vunpack.c.l.b16 %v693
        %v912 = vunpack.c.l.b16 %v694
        %v913 = vunpack.c.l.b16 %v695
        %v914 = vunpack.c.l.b16 %v696
        %v915 = vunpack.c.l.b16 %v697
        %v916 = vunpack.c.l.b16 %v698
        %v917 = vunpack.c.l.b16 %v699
        %v918 = vunpack.c.l.b16 %v700
        %v919 = vunpack.c.l.b16 %v701
        %v920 = vunpack.c.l.b16 %v702
        %v921 = vunpack.c.l.b16 %v703
        %v922 = vunpack.c.l.b16 %v704
        %v923 = vunpack.c.l.b16 %v705
        %v924 = vunpack.c.l.b16 %v706
        %v925 = vunpack.c.l.b16 %v707
        %v926 = vunpack.c.l.b16 %v708
        %v927 = vunpack.c.l.b16 %v709
        %v928 = vunpack.c.l.b16 %v710
        %v929 = vunpack.c.l.b16 %v711
        %v930 = vunpack.c.l.b16 %v712
        %v931 = vunpack.c.l.b16 %v713
        %v932 = vunpack.c.l.b16 %v714
        %v933 = vunpack.c.l.b16 %v715
        %v934 = vunpack.c.l.b16 %v716
        %v935 = vunpack.c.l.b16 %v717
        %v936 = vunpack.c.l.b16 %v718
        %v937 = vunpack.c.l.b16 %v719
        %v938 = vunpack.c.l.b16 %v720
        %v939 = vunpack.c.l.b16 %v721
        %v940 = vunpack.c.l.b16 %v722
        %v941 = vunpack.c.l.b16 %v723
        %v942 = vunpack.c.l.b16 %v724
        %v943 = vunpack.c.l.b16 %v725
        %v944 = vunpack.c.l.b16 %v726
        %v945 = vunpack.c.l.b16 %v727
        %v946 = vunpack.c.l.b16 %v728
        %v947 = vunpack.c.l.b16 %v729
        %v948 = vunpack.c.l.b16 %v730
        %v949 = vunpack.c.l.b16 %v731
        %v950 = vpack.c.b16 %v847, %v846
        %v951 = vpack.c.b16 %v849, %v848
        %v952 = vpack.c.b16 %v851, %v850
        %v953 = vpack.c.b16 %v853, %v852
        %v954 = vpack.c.b16 %v855, %v854
        %v955 = vpack.c.b16 %v857, %v856
        %v956 = vpack.c.b16 %v859, %v858
        %v957 = vpack.c.b16 %v861, %v860
        %v958 = vpack.c.b16 %v863, %v862
        %v959 = vpack.c.b16 %v865, %v864
        %v960 = vpack.c.b16 %v867, %v866
        %v961 = vpack.c.b16 %v869, %v868
        %v962 = vpack.c.b16 %v871, %v870
        %v963 = vpack.c.b16 %v873, %v872
        %v964 = vpack.c.b16 %v875, %v874
        %v965 = vpack.c.b16 %v877, %v876
        %v966 = vpack.c.b16 %v879, %v878
        %v967 = vpack.c.b16 %v881, %v880
        %v968 = vpack.c.b16 %v883, %v882
        %v969 = vpack.c.b16 %v885, %v884
        %v970 = vpack.c.b16 %v887, %v886
        %v971 = vpack.c.b16 %v889, %v888
        %v972 = vpack.c.b16 %v891, %v890
        %v973 = vpack.c.b16 %v893, %v892
        %v974 = vpack.c.b16 %v895, %v894
        %v975 = vpack.c.b16 %v897, %v896
        %v976 = vpack.c.b16 %v899, %v898
        %v977 = vpack.c.b16 %v901, %v900
        %v978 = vpack.c.b16 %v903, %v902
        %v979 = vpack.c.b16 %v905, %v904
        %v980 = vpack.c.b16 %v907, %v906
        %v981 = vpack.c.b16 %v909, %v908
        %v982 = vpack.c.b16 %v911, %v910
        %v983 = vpack.c.b16 %v913, %v912
        %v984 = vpack.c.b16 %v915, %v914
        %v985 = vpack.c.b16 %v917, %v916
        %v986 = vpack.c.b16 %v919, %v918
        %v987 = vpack.c.b16 %v921, %v920
        %v988 = vpack.c.b16 %v923, %v922
        %v989 = vpack.c.b16 %v925, %v924
        %v990 = vpack.c.b16 %v927, %v926
        %v991 = vpack.c.b16 %v929, %v928
        %v992 = vpack.c.b16 %v931, %v930
        %v993 = vpack.c.b16 %v933, %v932
        %v994 = vpack.c.b16 %v935, %v934
        %v995 = vpack.c.b16 %v937, %v936
        %v996 = vpack.c.b16 %v939, %v938
        %v997 = vpack.c.b16 %v941, %v940
        %v998 = vpack.c.b16 %v943, %v942
        %v999 = vpack.c.b16 %v945, %v944
        %v1000 = vpack.c.b16 %v947, %v946
        %v1001 = vpack.c.b16 %v949, %v948
        %v1012 = vunpack.c.l.b16 %v732
        %v1013 = vunpack.c.l.b16 %v733
        %v1014 = vunpack.c.l.b16 %v734
        %v1015 = vunpack.c.l.b16 %v735
        %v1016 = vunpack.c.l.b16 %v736
        %v1017 = vunpack.c.l.b16 %v737
        %v1018 = vunpack.c.l.b16 %v738
        %v1019 = vunpack.c.l.b16 %v739
        %v1020 = vunpack.c.l.b16 %v740
        %v1021 = vunpack.c.l.b16 %v741
        %v1022 = vpack.c.b16 %v1013, %v1012
        %v1023 = vpack.c.b16 %v1015, %v1014
        %v1024 = vpack.c.b16 %v1017, %v1016
        %v1025 = vpack.c.b16 %v1019, %v1018
        %v1026 = vpack.c.b16 %v1021, %v1020
        %vm1031 = vcmask 613376
        %v1033 = vsel %vm1031, %v950, 0
        %v1036 = vsel %vm1031, %v951, 0
        %v1039 = vsel %vm1031, %v952, 0
        %v1042 = vsel %vm1031, %v953, 0
        %v1045 = vsel %vm1031, %v954, 0
        %v1048 = vsel %vm1031, %v955, 0
        %v1051 = vsel %vm1031, %v956, 0
        %v1054 = vsel %vm1031, %v957, 0
        %v1057 = vsel %vm1031, %v958, 0
        %v1060 = vsel %vm1031, %v959, 0
        %v1063 = vsel %vm1031, %v960, 0
        %v1066 = vsel %vm1031, %v961, 0
        %v1069 = vsel %vm1031, %v962, 0
        %v1072 = vsel %vm1031, %v963, 0
        %v1075 = vsel %vm1031, %v964, 0
        %v1078 = vsel %vm1031, %v965, 0
        %v1081 = vsel %vm1031, %v966, 0
        %v1084 = vsel %vm1031, %v967, 0
        %v1087 = vsel %vm1031, %v968, 0
        %v1090 = vsel %vm1031, %v969, 0
        %v1093 = vsel %vm1031, %v970, 0
        %v1096 = vsel %vm1031, %v971, 0
        %v1099 = vsel %vm1031, %v972, 0
        %v1102 = vsel %vm1031, %v973, 0
        %v1105 = vsel %vm1031, %v974, 0
        %v1108 = vsel %vm1031, %v975, 0
        %v1111 = vsel %vm1031, %v976, 0
        %v1114 = vsel %vm1031, %v977, 0
        %v1117 = vsel %vm1031, %v978, 0
        %v1120 = vsel %vm1031, %v979, 0
        %v1123 = vsel %vm1031, %v980, 0
        %v1126 = vsel %vm1031, %v981, 0
        %v1129 = vsel %vm1031, %v982, 0
        %v1132 = vsel %vm1031, %v983, 0
        %v1135 = vsel %vm1031, %v984, 0
        %v1138 = vsel %vm1031, %v985, 0
        %v1141 = vsel %vm1031, %v986, 0
        %v1144 = vsel %vm1031, %v987, 0
        %v1147 = vsel %vm1031, %v988, 0
        %v1150 = vsel %vm1031, %v989, 0
        %v1153 = vsel %vm1031, %v990, 0
        %v1156 = vsel %vm1031, %v991, 0
        %v1159 = vsel %vm1031, %v992, 0
        %v1162 = vsel %vm1031, %v993, 0
        %v1165 = vsel %vm1031, %v994, 0
        %v1168 = vsel %vm1031, %v995, 0
        %v1171 = vsel %vm1031, %v996, 0
        %v1174 = vsel %vm1031, %v997, 0
        %v1177 = vsel %vm1031, %v998, 0
        %v1180 = vsel %vm1031, %v999, 0
        %v1183 = vsel %vm1031, %v1000, 0
        %v1186 = vsel %vm1031, %v1001, 0
        %vm1188 = vcmask 1044480
        %vm1189 = vcmask 1045504
        %v1190 = vsel %vm1188, 4294967295, 65535
        %v1191 = vsel %vm1189, %v1190, 0
        %v1193 = vand.u32 %v1026, %v1191
        %1195 = vmatprep.subr.bf16.mxu0 0
        %1196 = vmatpush1.bf16.msra.mxu0 %v1022
        %1197 = vmatprep.subr.bf16.mxu0 0
        %1198 = vmatpush1.bf16.msra.mxu0 %v1023
        %1199 = vmatprep.subr.bf16.mxu0 0
        %1200 = vmatpush1.bf16.msra.mxu0 %v1024
        %1201 = vmatprep.subr.bf16.mxu0 0
        %1202 = vmatpush1.bf16.msra.mxu0 %v1025
        %1203 = vmatprep.subr.bf16.mxu0 0
        %1204 = vmatpush1.bf16.msra.mxu0 %v1193
        %1205 = vmatprep.subr.bf16.mxu0 0
        %1206 = vmatpush1.bf16.msra.mxu0 0
        %1207 = vmatprep.subr.bf16.mxu0 0
        %1208 = vmatpush1.bf16.msra.mxu0 0
        %1209 = vmatprep.subr.bf16.mxu0 0
        %1210 = vmatpush1.bf16.msra.mxu0 0
        %1211 = vmatprep.subr.bf16.mxu0 0
        %1212 = vmatpush1.bf16.msra.mxu0 0
        %1213 = vmatprep.subr.bf16.mxu0 0
        %1214 = vmatpush1.bf16.msra.mxu0 0
        %1215 = vmatprep.subr.bf16.mxu0 0
        %1216 = vmatpush1.bf16.msra.mxu0 0
        %1217 = vmatprep.subr.bf16.mxu0 0
        %1218 = vmatpush1.bf16.msra.mxu0 0
        %1219 = vmatprep.subr.bf16.mxu0 0
        %1220 = vmatpush1.bf16.msra.mxu0 0
        %1221 = vmatprep.subr.bf16.mxu0 0
        %1222 = vmatpush1.bf16.msra.mxu0 0
        %1223 = vmatprep.subr.bf16.mxu0 0
        %1224 = vmatpush1.bf16.msra.mxu0 0
        %1225 = vmatprep.subr.bf16.mxu0 0
        %1226 = vmatpush1.bf16.msra.mxu0 0
        %1227 = vmatprep.mubr.bf16.mxu0 0
        %1228 = vmatmul.mubr.bf16.gmra.mrb[0].mxu0 %v1033
        %v1229 = vpop.f32.mrb[0].mxu0
        %v1230 = vadd.f32 0.0, %v1229
        %v1231 = vpop.f32.mrb[0].mxu0
        %v1232 = vpop.f32.mrb[0].mxu0
        %v1233 = vadd.f32 0.0, %v1232
        %v1234 = vpop.f32.mrb[0].mxu0
        %1235 = vmatprep.mubr.bf16.mxu0 0
        %1236 = vmatmul.mubr.bf16.gmra.mrb[0].mxu0 %v1036
        %v1237 = vpop.f32.mrb[0].mxu0
        %v1238 = vadd.f32 0.0, %v1237
        %v1239 = vpop.f32.mrb[0].mxu0
        %v1240 = vpop.f32.mrb[0].mxu0
        %v1241 = vadd.f32 0.0, %v1240
        %v1242 = vpop.f32.mrb[0].mxu0
        %1243 = vmatprep.mubr.bf16.mxu0 0
        %1244 = vmatmul.mubr.bf16.gmra.mrb[0].mxu0 %v1039
        %v1245 = vpop.f32.mrb[0].mxu0
        %v1246 = vadd.f32 0.0, %v1245
        %v1247 = vpop.f32.mrb[0].mxu0
        %v1248 = vpop.f32.mrb[0].mxu0
        %v1249 = vadd.f32 0.0, %v1248
        %v1250 = vpop.f32.mrb[0].mxu0
        %1251 = vmatprep.mubr.bf16.mxu0 0
        %1252 = vmatmul.mubr.bf16.gmra.mrb[0].mxu0 %v1042
        %v1253 = vpop.f32.mrb[0].mxu0
        %v1254 = vadd.f32 0.0, %v1253
        %v1255 = vpop.f32.mrb[0].mxu0
        %v1256 = vpop.f32.mrb[0].mxu0
        %v1257 = vadd.f32 0.0, %v1256
        %v1258 = vpop.f32.mrb[0].mxu0
        %1259 = vmatprep.mubr.bf16.mxu0 0
        %1260 = vmatmul.mubr.bf16.gmra.mrb[0].mxu0 %v1045
        %v1261 = vpop.f32.mrb[0].mxu0
        %v1262 = vadd.f32 0.0, %v1261
        %v1263 = vpop.f32.mrb[0].mxu0
        %v1264 = vpop.f32.mrb[0].mxu0
        %v1265 = vadd.f32 0.0, %v1264
        %v1266 = vpop.f32.mrb[0].mxu0
        %1267 = vmatprep.mubr.bf16.mxu0 0
        %1268 = vmatmul.mubr.bf16.gmra.mrb[0].mxu0 %v1048
        %v1269 = vpop.f32.mrb[0].mxu0
        %v1270 = vadd.f32 0.0, %v1269
        %v1271 = vpop.f32.mrb[0].mxu0
        %v1272 = vpop.f32.mrb[0].mxu0
        %v1273 = vadd.f32 0.0, %v1272
        %v1274 = vpop.f32.mrb[0].mxu0
        %1275 = vmatprep.mubr.bf16.mxu0 0
        %1276 = vmatmul.mubr.bf16.gmra.mrb[0].mxu0 %v1051
        %v1277 = vpop.f32.mrb[0].mxu0
        %v1278 = vadd.f32 0.0, %v1277
        %v1279 = vpop.f32.mrb[0].mxu0
        %v1280 = vpop.f32.mrb[0].mxu0
        %v1281 = vadd.f32 0.0, %v1280
        %v1282 = vpop.f32.mrb[0].mxu0
        %1283 = vmatprep.mubr.bf16.mxu0 0
        %1284 = vmatmul.mubr.bf16.gmra.mrb[0].mxu0 %v1054
        %v1285 = vpop.f32.mrb[0].mxu0
        %v1286 = vadd.f32 0.0, %v1285
        %v1287 = vpop.f32.mrb[0].mxu0
        %v1288 = vpop.f32.mrb[0].mxu0
        %v1289 = vadd.f32 0.0, %v1288
        %v1290 = vpop.f32.mrb[0].mxu0
        %1291 = vmatprep.mubr.bf16.mxu0 0
        %1292 = vmatmul.mubr.bf16.gmra.mrb[0].mxu0 %v1057
        %v1293 = vpop.f32.mrb[0].mxu0
        %v1294 = vadd.f32 0.0, %v1293
        %v1295 = vpop.f32.mrb[0].mxu0
        %v1296 = vpop.f32.mrb[0].mxu0
        %v1297 = vadd.f32 0.0, %v1296
        %v1298 = vpop.f32.mrb[0].mxu0
        %1299 = vmatprep.mubr.bf16.mxu0 0
        %1300 = vmatmul.mubr.bf16.gmra.mrb[0].mxu0 %v1060
        %v1301 = vpop.f32.mrb[0].mxu0
        %v1302 = vadd.f32 0.0, %v1301
        %v1303 = vpop.f32.mrb[0].mxu0
        %v1304 = vpop.f32.mrb[0].mxu0
        %v1305 = vadd.f32 0.0, %v1304
        %v1306 = vpop.f32.mrb[0].mxu0
        %1307 = vmatprep.mubr.bf16.mxu0 0
        %1308 = vmatmul.mubr.bf16.gmra.mrb[0].mxu0 %v1063
        %v1309 = vpop.f32.mrb[0].mxu0
        %v1310 = vadd.f32 0.0, %v1309
        %v1311 = vpop.f32.mrb[0].mxu0
        %v1312 = vpop.f32.mrb[0].mxu0
        %v1313 = vadd.f32 0.0, %v1312
        %v1314 = vpop.f32.mrb[0].mxu0
        %1315 = vmatprep.mubr.bf16.mxu0 0
        %1316 = vmatmul.mubr.bf16.gmra.mrb[0].mxu0 %v1066
        %v1317 = vpop.f32.mrb[0].mxu0
        %v1318 = vadd.f32 0.0, %v1317
        %v1319 = vpop.f32.mrb[0].mxu0
        %v1320 = vpop.f32.mrb[0].mxu0
        %v1321 = vadd.f32 0.0, %v1320
        %v1322 = vpop.f32.mrb[0].mxu0
        %1323 = vmatprep.mubr.bf16.mxu0 0
        %1324 = vmatmul.mubr.bf16.gmra.mrb[0].mxu0 %v1069
        %v1325 = vpop.f32.mrb[0].mxu0
        %v1326 = vadd.f32 0.0, %v1325
        %v1327 = vpop.f32.mrb[0].mxu0
        %v1328 = vpop.f32.mrb[0].mxu0
        %v1329 = vadd.f32 0.0, %v1328
        %v1330 = vpop.f32.mrb[0].mxu0
        %1331 = vmatprep.mubr.bf16.mxu0 0
        %1332 = vmatmul.mubr.bf16.gmra.mrb[0].mxu0 %v1072
        %v1333 = vpop.f32.mrb[0].mxu0
        %v1334 = vadd.f32 0.0, %v1333
        %v1335 = vpop.f32.mrb[0].mxu0
        %v1336 = vpop.f32.mrb[0].mxu0
        %v1337 = vadd.f32 0.0, %v1336
        %v1338 = vpop.f32.mrb[0].mxu0
        %1339 = vmatprep.mubr.bf16.mxu0 0
        %1340 = vmatmul.mubr.bf16.gmra.mrb[0].mxu0 %v1075
        %v1341 = vpop.f32.mrb[0].mxu0
        %v1342 = vadd.f32 0.0, %v1341
        %v1343 = vpop.f32.mrb[0].mxu0
        %v1344 = vpop.f32.mrb[0].mxu0
        %v1345 = vadd.f32 0.0, %v1344
        %v1346 = vpop.f32.mrb[0].mxu0
        %1347 = vmatprep.mubr.bf16.mxu0 0
        %1348 = vmatmul.mubr.bf16.gmra.mrb[0].mxu0 %v1078
        %v1349 = vpop.f32.mrb[0].mxu0
        %v1350 = vadd.f32 0.0, %v1349
        %v1351 = vpop.f32.mrb[0].mxu0
        %v1352 = vpop.f32.mrb[0].mxu0
        %v1353 = vadd.f32 0.0, %v1352
        %v1354 = vpop.f32.mrb[0].mxu0
        %1355 = vmatprep.mubr.bf16.mxu0 0
        %1356 = vmatmul.mubr.bf16.gmra.mrb[0].mxu0 %v1081
        %v1357 = vpop.f32.mrb[0].mxu0
        %v1358 = vadd.f32 0.0, %v1357
        %v1359 = vpop.f32.mrb[0].mxu0
        %v1360 = vpop.f32.mrb[0].mxu0
        %v1361 = vadd.f32 0.0, %v1360
        %v1362 = vpop.f32.mrb[0].mxu0
        %1363 = vmatprep.mubr.bf16.mxu0 0
        %1364 = vmatmul.mubr.bf16.gmra.mrb[0].mxu0 %v1084
        %v1365 = vpop.f32.mrb[0].mxu0
        %v1366 = vadd.f32 0.0, %v1365
        %v1367 = vpop.f32.mrb[0].mxu0
        %v1368 = vpop.f32.mrb[0].mxu0
        %v1369 = vadd.f32 0.0, %v1368
        %v1370 = vpop.f32.mrb[0].mxu0
        %1371 = vmatprep.mubr.bf16.mxu0 0
        %1372 = vmatmul.mubr.bf16.gmra.mrb[0].mxu0 %v1087
        %v1373 = vpop.f32.mrb[0].mxu0
        %v1374 = vadd.f32 0.0, %v1373
        %v1375 = vpop.f32.mrb[0].mxu0
        %v1376 = vpop.f32.mrb[0].mxu0
        %v1377 = vadd.f32 0.0, %v1376
        %v1378 = vpop.f32.mrb[0].mxu0
        %1379 = vmatprep.mubr.bf16.mxu0 0
        %1380 = vmatmul.mubr.bf16.gmra.mrb[0].mxu0 %v1090
        %v1381 = vpop.f32.mrb[0].mxu0
        %v1382 = vadd.f32 0.0, %v1381
        %v1383 = vpop.f32.mrb[0].mxu0
        %v1384 = vpop.f32.mrb[0].mxu0
        %v1385 = vadd.f32 0.0, %v1384
        %v1386 = vpop.f32.mrb[0].mxu0
        %1387 = vmatprep.mubr.bf16.mxu0 0
        %1388 = vmatmul.mubr.bf16.gmra.mrb[0].mxu0 %v1093
        %v1389 = vpop.f32.mrb[0].mxu0
        %v1390 = vadd.f32 0.0, %v1389
        %v1391 = vpop.f32.mrb[0].mxu0
        %v1392 = vpop.f32.mrb[0].mxu0
        %v1393 = vadd.f32 0.0, %v1392
        %v1394 = vpop.f32.mrb[0].mxu0
        %1395 = vmatprep.mubr.bf16.mxu0 0
        %1396 = vmatmul.mubr.bf16.gmra.mrb[0].mxu0 %v1096
        %v1397 = vpop.f32.mrb[0].mxu0
        %v1398 = vadd.f32 0.0, %v1397
        %v1399 = vpop.f32.mrb[0].mxu0
        %v1400 = vpop.f32.mrb[0].mxu0
        %v1401 = vadd.f32 0.0, %v1400
        %v1402 = vpop.f32.mrb[0].mxu0
        %1403 = vmatprep.mubr.bf16.mxu0 0
        %1404 = vmatmul.mubr.bf16.gmra.mrb[0].mxu0 %v1099
        %v1405 = vpop.f32.mrb[0].mxu0
        %v1406 = vadd.f32 0.0, %v1405
        %v1407 = vpop.f32.mrb[0].mxu0
        %v1408 = vpop.f32.mrb[0].mxu0
        %v1409 = vadd.f32 0.0, %v1408
        %v1410 = vpop.f32.mrb[0].mxu0
        %1411 = vmatprep.mubr.bf16.mxu0 0
        %1412 = vmatmul.mubr.bf16.gmra.mrb[0].mxu0 %v1102
        %v1413 = vpop.f32.mrb[0].mxu0
        %v1414 = vadd.f32 0.0, %v1413
        %v1415 = vpop.f32.mrb[0].mxu0
        %v1416 = vpop.f32.mrb[0].mxu0
        %v1417 = vadd.f32 0.0, %v1416
        %v1418 = vpop.f32.mrb[0].mxu0
        %1419 = vmatprep.mubr.bf16.mxu0 0
        %1420 = vmatmul.mubr.bf16.gmra.mrb[0].mxu0 %v1105
        %v1421 = vpop.f32.mrb[0].mxu0
        %v1422 = vadd.f32 0.0, %v1421
        %v1423 = vpop.f32.mrb[0].mxu0
        %v1424 = vpop.f32.mrb[0].mxu0
        %v1425 = vadd.f32 0.0, %v1424
        %v1426 = vpop.f32.mrb[0].mxu0
        %1427 = vmatprep.mubr.bf16.mxu0 0
        %1428 = vmatmul.mubr.bf16.gmra.mrb[0].mxu0 %v1108
        %v1429 = vpop.f32.mrb[0].mxu0
        %v1430 = vadd.f32 0.0, %v1429
        %v1431 = vpop.f32.mrb[0].mxu0
        %v1432 = vpop.f32.mrb[0].mxu0
        %v1433 = vadd.f32 0.0, %v1432
        %v1434 = vpop.f32.mrb[0].mxu0
        %1435 = vmatprep.mubr.bf16.mxu0 0
        %1436 = vmatmul.mubr.bf16.gmra.mrb[0].mxu0 %v1111
        %v1437 = vpop.f32.mrb[0].mxu0
        %v1438 = vadd.f32 0.0, %v1437
        %v1439 = vpop.f32.mrb[0].mxu0
        %v1440 = vpop.f32.mrb[0].mxu0
        %v1441 = vadd.f32 0.0, %v1440
        %v1442 = vpop.f32.mrb[0].mxu0
        %1443 = vmatprep.mubr.bf16.mxu0 0
        %1444 = vmatmul.mubr.bf16.gmra.mrb[0].mxu0 %v1114
        %v1445 = vpop.f32.mrb[0].mxu0
        %v1446 = vadd.f32 0.0, %v1445
        %v1447 = vpop.f32.mrb[0].mxu0
        %v1448 = vpop.f32.mrb[0].mxu0
        %v1449 = vadd.f32 0.0, %v1448
        %v1450 = vpop.f32.mrb[0].mxu0
        %1451 = vmatprep.mubr.bf16.mxu0 0
        %1452 = vmatmul.mubr.bf16.gmra.mrb[0].mxu0 %v1117
        %v1453 = vpop.f32.mrb[0].mxu0
        %v1454 = vadd.f32 0.0, %v1453
        %v1455 = vpop.f32.mrb[0].mxu0
        %v1456 = vpop.f32.mrb[0].mxu0
        %v1457 = vadd.f32 0.0, %v1456
        %v1458 = vpop.f32.mrb[0].mxu0
        %1459 = vmatprep.mubr.bf16.mxu0 0
        %1460 = vmatmul.mubr.bf16.gmra.mrb[0].mxu0 %v1120
        %v1461 = vpop.f32.mrb[0].mxu0
        %v1462 = vadd.f32 0.0, %v1461
        %v1463 = vpop.f32.mrb[0].mxu0
        %v1464 = vpop.f32.mrb[0].mxu0
        %v1465 = vadd.f32 0.0, %v1464
        %v1466 = vpop.f32.mrb[0].mxu0
        %1467 = vmatprep.mubr.bf16.mxu0 0
        %1468 = vmatmul.mubr.bf16.gmra.mrb[0].mxu0 %v1123
        %v1469 = vpop.f32.mrb[0].mxu0
        %v1470 = vadd.f32 0.0, %v1469
        %v1471 = vpop.f32.mrb[0].mxu0
        %v1472 = vpop.f32.mrb[0].mxu0
        %v1473 = vadd.f32 0.0, %v1472
        %v1474 = vpop.f32.mrb[0].mxu0
        %1475 = vmatprep.mubr.bf16.mxu0 0
        %1476 = vmatmul.mubr.bf16.gmra.mrb[0].mxu0 %v1126
        %v1477 = vpop.f32.mrb[0].mxu0
        %v1478 = vadd.f32 0.0, %v1477
        %v1479 = vpop.f32.mrb[0].mxu0
        %v1480 = vpop.f32.mrb[0].mxu0
        %v1481 = vadd.f32 0.0, %v1480
        %v1482 = vpop.f32.mrb[0].mxu0
        %1483 = vmatprep.mubr.bf16.mxu0 0
        %1484 = vmatmul.mubr.bf16.gmra.mrb[0].mxu0 %v1129
        %v1485 = vpop.f32.mrb[0].mxu0
        %v1486 = vadd.f32 0.0, %v1485
        %v1487 = vpop.f32.mrb[0].mxu0
        %v1488 = vpop.f32.mrb[0].mxu0
        %v1489 = vadd.f32 0.0, %v1488
        %v1490 = vpop.f32.mrb[0].mxu0
        %1491 = vmatprep.mubr.bf16.mxu0 0
        %1492 = vmatmul.mubr.bf16.gmra.mrb[0].mxu0 %v1132
        %v1493 = vpop.f32.mrb[0].mxu0
        %v1494 = vadd.f32 0.0, %v1493
        %v1495 = vpop.f32.mrb[0].mxu0
        %v1496 = vpop.f32.mrb[0].mxu0
        %v1497 = vadd.f32 0.0, %v1496
        %v1498 = vpop.f32.mrb[0].mxu0
        %1499 = vmatprep.mubr.bf16.mxu0 0
        %1500 = vmatmul.mubr.bf16.gmra.mrb[0].mxu0 %v1135
        %v1501 = vpop.f32.mrb[0].mxu0
        %v1502 = vadd.f32 0.0, %v1501
        %v1503 = vpop.f32.mrb[0].mxu0
        %v1504 = vpop.f32.mrb[0].mxu0
        %v1505 = vadd.f32 0.0, %v1504
        %v1506 = vpop.f32.mrb[0].mxu0
        %1507 = vmatprep.mubr.bf16.mxu0 0
        %1508 = vmatmul.mubr.bf16.gmra.mrb[0].mxu0 %v1138
        %v1509 = vpop.f32.mrb[0].mxu0
        %v1510 = vadd.f32 0.0, %v1509
        %v1511 = vpop.f32.mrb[0].mxu0
        %v1512 = vpop.f32.mrb[0].mxu0
        %v1513 = vadd.f32 0.0, %v1512
        %v1514 = vpop.f32.mrb[0].mxu0
        %1515 = vmatprep.mubr.bf16.mxu0 0
        %1516 = vmatmul.mubr.bf16.gmra.mrb[0].mxu0 %v1141
        %v1517 = vpop.f32.mrb[0].mxu0
        %v1518 = vadd.f32 0.0, %v1517
        %v1519 = vpop.f32.mrb[0].mxu0
        %v1520 = vpop.f32.mrb[0].mxu0
        %v1521 = vadd.f32 0.0, %v1520
        %v1522 = vpop.f32.mrb[0].mxu0
        %1523 = vmatprep.mubr.bf16.mxu0 0
        %1524 = vmatmul.mubr.bf16.gmra.mrb[0].mxu0 %v1144
        %v1525 = vpop.f32.mrb[0].mxu0
        %v1526 = vadd.f32 0.0, %v1525
        %v1527 = vpop.f32.mrb[0].mxu0
        %v1528 = vpop.f32.mrb[0].mxu0
        %v1529 = vadd.f32 0.0, %v1528
        %v1530 = vpop.f32.mrb[0].mxu0
        %1531 = vmatprep.mubr.bf16.mxu0 0
        %1532 = vmatmul.mubr.bf16.gmra.mrb[0].mxu0 %v1147
        %v1533 = vpop.f32.mrb[0].mxu0
        %v1534 = vadd.f32 0.0, %v1533
        %v1535 = vpop.f32.mrb[0].mxu0
        %v1536 = vpop.f32.mrb[0].mxu0
        %v1537 = vadd.f32 0.0, %v1536
        %v1538 = vpop.f32.mrb[0].mxu0
        %1539 = vmatprep.mubr.bf16.mxu0 0
        %1540 = vmatmul.mubr.bf16.gmra.mrb[0].mxu0 %v1150
        %v1541 = vpop.f32.mrb[0].mxu0
        %v1542 = vadd.f32 0.0, %v1541
        %v1543 = vpop.f32.mrb[0].mxu0
        %v1544 = vpop.f32.mrb[0].mxu0
        %v1545 = vadd.f32 0.0, %v1544
        %v1546 = vpop.f32.mrb[0].mxu0
        %1547 = vmatprep.mubr.bf16.mxu0 0
        %1548 = vmatmul.mubr.bf16.gmra.mrb[0].mxu0 %v1153
        %v1549 = vpop.f32.mrb[0].mxu0
        %v1550 = vadd.f32 0.0, %v1549
        %v1551 = vpop.f32.mrb[0].mxu0
        %v1552 = vpop.f32.mrb[0].mxu0
        %v1553 = vadd.f32 0.0, %v1552
        %v1554 = vpop.f32.mrb[0].mxu0
        %1555 = vmatprep.mubr.bf16.mxu0 0
        %1556 = vmatmul.mubr.bf16.gmra.mrb[0].mxu0 %v1156
        %v1557 = vpop.f32.mrb[0].mxu0
        %v1558 = vadd.f32 0.0, %v1557
        %v1559 = vpop.f32.mrb[0].mxu0
        %v1560 = vpop.f32.mrb[0].mxu0
        %v1561 = vadd.f32 0.0, %v1560
        %v1562 = vpop.f32.mrb[0].mxu0
        %1563 = vmatprep.mubr.bf16.mxu0 0
        %1564 = vmatmul.mubr.bf16.gmra.mrb[0].mxu0 %v1159
        %v1565 = vpop.f32.mrb[0].mxu0
        %v1566 = vadd.f32 0.0, %v1565
        %v1567 = vpop.f32.mrb[0].mxu0
        %v1568 = vpop.f32.mrb[0].mxu0
        %v1569 = vadd.f32 0.0, %v1568
        %v1570 = vpop.f32.mrb[0].mxu0
        %1571 = vmatprep.mubr.bf16.mxu0 0
        %1572 = vmatmul.mubr.bf16.gmra.mrb[0].mxu0 %v1162
        %v1573 = vpop.f32.mrb[0].mxu0
        %v1574 = vadd.f32 0.0, %v1573
        %v1575 = vpop.f32.mrb[0].mxu0
        %v1576 = vpop.f32.mrb[0].mxu0
        %v1577 = vadd.f32 0.0, %v1576
        %v1578 = vpop.f32.mrb[0].mxu0
        %1579 = vmatprep.mubr.bf16.mxu0 0
        %1580 = vmatmul.mubr.bf16.gmra.mrb[0].mxu0 %v1165
        %v1581 = vpop.f32.mrb[0].mxu0
        %v1582 = vadd.f32 0.0, %v1581
        %v1583 = vpop.f32.mrb[0].mxu0
        %v1584 = vpop.f32.mrb[0].mxu0
        %v1585 = vadd.f32 0.0, %v1584
        %v1586 = vpop.f32.mrb[0].mxu0
        %1587 = vmatprep.mubr.bf16.mxu0 0
        %1588 = vmatmul.mubr.bf16.gmra.mrb[0].mxu0 %v1168
        %v1589 = vpop.f32.mrb[0].mxu0
        %v1590 = vadd.f32 0.0, %v1589
        %v1591 = vpop.f32.mrb[0].mxu0
        %v1592 = vpop.f32.mrb[0].mxu0
        %v1593 = vadd.f32 0.0, %v1592
        %v1594 = vpop.f32.mrb[0].mxu0
        %1595 = vmatprep.mubr.bf16.mxu0 0
        %1596 = vmatmul.mubr.bf16.gmra.mrb[0].mxu0 %v1171
        %v1597 = vpop.f32.mrb[0].mxu0
        %v1598 = vadd.f32 0.0, %v1597
        %v1599 = vpop.f32.mrb[0].mxu0
        %v1600 = vpop.f32.mrb[0].mxu0
        %v1601 = vadd.f32 0.0, %v1600
        %v1602 = vpop.f32.mrb[0].mxu0
        %1603 = vmatprep.mubr.bf16.mxu0 0
        %1604 = vmatmul.mubr.bf16.gmra.mrb[0].mxu0 %v1174
        %v1605 = vpop.f32.mrb[0].mxu0
        %v1606 = vadd.f32 0.0, %v1605
        %v1607 = vpop.f32.mrb[0].mxu0
        %v1608 = vpop.f32.mrb[0].mxu0
        %v1609 = vadd.f32 0.0, %v1608
        %v1610 = vpop.f32.mrb[0].mxu0
        %1611 = vmatprep.mubr.bf16.mxu0 0
        %1612 = vmatmul.mubr.bf16.gmra.mrb[0].mxu0 %v1177
        %v1613 = vpop.f32.mrb[0].mxu0
        %v1614 = vadd.f32 0.0, %v1613
        %v1615 = vpop.f32.mrb[0].mxu0
        %v1616 = vpop.f32.mrb[0].mxu0
        %v1617 = vadd.f32 0.0, %v1616
        %v1618 = vpop.f32.mrb[0].mxu0
        %1619 = vmatprep.mubr.bf16.mxu0 0
        %1620 = vmatmul.mubr.bf16.gmra.mrb[0].mxu0 %v1180
        %v1621 = vpop.f32.mrb[0].mxu0
        %v1622 = vadd.f32 0.0, %v1621
        %v1623 = vpop.f32.mrb[0].mxu0
        %v1624 = vpop.f32.mrb[0].mxu0
        %v1625 = vadd.f32 0.0, %v1624
        %v1626 = vpop.f32.mrb[0].mxu0
        %1627 = vmatprep.mubr.bf16.mxu0 0
        %1628 = vmatmul.mubr.bf16.gmra.mrb[0].mxu0 %v1183
        %v1629 = vpop.f32.mrb[0].mxu0
        %v1630 = vadd.f32 0.0, %v1629
        %v1631 = vpop.f32.mrb[0].mxu0
        %v1632 = vpop.f32.mrb[0].mxu0
        %v1633 = vadd.f32 0.0, %v1632
        %v1634 = vpop.f32.mrb[0].mxu0
        %1635 = vmatprep.mubr.bf16.mxu0 0
        %1636 = vmatmul.mubr.bf16.gmra.mrb[0].mxu0 %v1186
        %v1637 = vpop.f32.mrb[0].mxu0
        %v1638 = vadd.f32 0.0, %v1637
        %v1639 = vpop.f32.mrb[0].mxu0
        %v1640 = vpop.f32.mrb[0].mxu0
        %v1641 = vadd.f32 0.0, %v1640
        %v1642 = vpop.f32.mrb[0].mxu0
        %1643 = vdwg.mxu0
        %v1644 = vmax.f32 %v1230, %v1334
        %v1645 = vmax.f32 %v1233, %v1337
        %v1646 = vmax.f32 %v1238, %v1342
        %v1647 = vmax.f32 %v1241, %v1345
        %v1648 = vmax.f32 %v1246, %v1350
        %v1649 = vmax.f32 %v1249, %v1353
        %v1650 = vmax.f32 %v1254, %v1358
        %v1651 = vmax.f32 %v1257, %v1361
        %v1652 = vmax.f32 %v1262, %v1366
        %v1653 = vmax.f32 %v1265, %v1369
        %v1654 = vmax.f32 %v1270, %v1374
        %v1655 = vmax.f32 %v1273, %v1377
        %v1656 = vmax.f32 %v1278, %v1382
        %v1657 = vmax.f32 %v1281, %v1385
        %v1658 = vmax.f32 %v1286, %v1390
        %v1659 = vmax.f32 %v1289, %v1393
        %v1660 = vmax.f32 %v1294, %v1398
        %v1661 = vmax.f32 %v1297, %v1401
        %v1662 = vmax.f32 %v1302, %v1406
        %v1663 = vmax.f32 %v1305, %v1409
        %v1664 = vmax.f32 %v1310, %v1414
        %v1665 = vmax.f32 %v1313, %v1417
        %v1666 = vmax.f32 %v1318, %v1422
        %v1667 = vmax.f32 %v1321, %v1425
        %v1668 = vmax.f32 %v1326, %v1430
        %v1669 = vmax.f32 %v1329, %v1433
        %v1670 = vmax.f32 %v1644, %v1438
        %v1671 = vmax.f32 %v1645, %v1441
        %v1672 = vmax.f32 %v1646, %v1446
        %v1673 = vmax.f32 %v1647, %v1449
        %v1674 = vmax.f32 %v1648, %v1454
        %v1675 = vmax.f32 %v1649, %v1457
        %v1676 = vmax.f32 %v1650, %v1462
        %v1677 = vmax.f32 %v1651, %v1465
        %v1678 = vmax.f32 %v1652, %v1470
        %v1679 = vmax.f32 %v1653, %v1473
        %v1680 = vmax.f32 %v1654, %v1478
        %v1681 = vmax.f32 %v1655, %v1481
        %v1682 = vmax.f32 %v1656, %v1486
        %v1683 = vmax.f32 %v1657, %v1489
        %v1684 = vmax.f32 %v1658, %v1494
        %v1685 = vmax.f32 %v1659, %v1497
        %v1686 = vmax.f32 %v1660, %v1502
        %v1687 = vmax.f32 %v1661, %v1505
        %v1688 = vmax.f32 %v1662, %v1510
        %v1689 = vmax.f32 %v1663, %v1513
        %v1690 = vmax.f32 %v1664, %v1518
        %v1691 = vmax.f32 %v1665, %v1521
        %v1692 = vmax.f32 %v1666, %v1526
        %v1693 = vmax.f32 %v1667, %v1529
        %v1694 = vmax.f32 %v1668, %v1534
        %v1695 = vmax.f32 %v1669, %v1537
        %v1696 = vmax.f32 %v1670, %v1542
        %v1697 = vmax.f32 %v1671, %v1545
        %v1698 = vmax.f32 %v1672, %v1550
        %v1699 = vmax.f32 %v1673, %v1553
        %v1700 = vmax.f32 %v1674, %v1558
        %v1701 = vmax.f32 %v1675, %v1561
        %v1702 = vmax.f32 %v1676, %v1566
        %v1703 = vmax.f32 %v1677, %v1569
        %v1704 = vmax.f32 %v1678, %v1574
        %v1705 = vmax.f32 %v1679, %v1577
        %v1706 = vmax.f32 %v1680, %v1582
        %v1707 = vmax.f32 %v1681, %v1585
        %v1708 = vmax.f32 %v1682, %v1590
        %v1709 = vmax.f32 %v1683, %v1593
        %v1710 = vmax.f32 %v1684, %v1598
        %v1711 = vmax.f32 %v1685, %v1601
        %v1712 = vmax.f32 %v1686, %v1606
        %v1713 = vmax.f32 %v1687, %v1609
        %v1714 = vmax.f32 %v1688, %v1614
        %v1715 = vmax.f32 %v1689, %v1617
        %v1716 = vmax.f32 %v1690, %v1622
        %v1717 = vmax.f32 %v1691, %v1625
        %v1718 = vmax.f32 %v1692, %v1630
        %v1719 = vmax.f32 %v1693, %v1633
        %v1720 = vmax.f32 %v1694, %v1638
        %v1721 = vmax.f32 %v1695, %v1641
        %v1722 = vld [vmem:[%s2] sm:$0x1]
        %v1724 = vlaneseq
        %v1725 = vshrl.u32 %v1724, 7
        %v1726 = vsub.s32 0, %v1725
        %v1727 = vrot.slane %v1722, %v1726
        %v1729 = vadd.f32 %v1696, %v1727
        %v1730 = vadd.f32 %v1697, %v1727
        %v1731 = vadd.f32 %v1698, %v1727
        %v1732 = vadd.f32 %v1699, %v1727
        %v1733 = vadd.f32 %v1700, %v1727
        %v1734 = vadd.f32 %v1701, %v1727
        %v1735 = vadd.f32 %v1702, %v1727
        %v1736 = vadd.f32 %v1703, %v1727
        %v1737 = vadd.f32 %v1704, %v1727
        %v1738 = vadd.f32 %v1705, %v1727
        %v1739 = vadd.f32 %v1706, %v1727
        %v1740 = vadd.f32 %v1707, %v1727
        %v1741 = vadd.f32 %v1708, %v1727
        %v1742 = vadd.f32 %v1709, %v1727
        %v1743 = vadd.f32 %v1710, %v1727
        %v1744 = vadd.f32 %v1711, %v1727
        %v1745 = vadd.f32 %v1712, %v1727
        %v1746 = vadd.f32 %v1713, %v1727
        %v1747 = vadd.f32 %v1714, %v1727
        %v1748 = vadd.f32 %v1715, %v1727
        %v1749 = vadd.f32 %v1716, %v1727
        %v1750 = vadd.f32 %v1717, %v1727
        %v1751 = vadd.f32 %v1718, %v1727
        %v1752 = vadd.f32 %v1719, %v1727
        %v1753 = vadd.f32 %v1720, %v1727
        %v1754 = vadd.f32 %v1721, %v1727
        %v1755 = vmax.f32 %v1729, 0.0
        %v1756 = vmax.f32 %v1730, 0.0
        %v1757 = vmax.f32 %v1731, 0.0
        %v1758 = vmax.f32 %v1732, 0.0
        %v1759 = vmax.f32 %v1733, 0.0
        %v1760 = vmax.f32 %v1734, 0.0
        %v1761 = vmax.f32 %v1735, 0.0
        %v1762 = vmax.f32 %v1736, 0.0
        %v1763 = vmax.f32 %v1737, 0.0
        %v1764 = vmax.f32 %v1738, 0.0
        %v1765 = vmax.f32 %v1739, 0.0
        %v1766 = vmax.f32 %v1740, 0.0
        %v1767 = vmax.f32 %v1741, 0.0
        %v1768 = vmax.f32 %v1742, 0.0
        %v1769 = vmax.f32 %v1743, 0.0
        %v1770 = vmax.f32 %v1744, 0.0
        %v1771 = vmax.f32 %v1745, 0.0
        %v1772 = vmax.f32 %v1746, 0.0
        %v1773 = vmax.f32 %v1747, 0.0
        %v1774 = vmax.f32 %v1748, 0.0
        %v1775 = vmax.f32 %v1749, 0.0
        %v1776 = vmax.f32 %v1750, 0.0
        %v1777 = vmax.f32 %v1751, 0.0
        %v1778 = vmax.f32 %v1752, 0.0
        %v1779 = vmax.f32 %v1753, 0.0
        %v1780 = vmax.f32 %v1754, 0.0
        %v1781 = vpack.c.bf16 %v1756, %v1755
        %v1782 = vpack.c.bf16 %v1758, %v1757
        %v1783 = vpack.c.bf16 %v1760, %v1759
        %v1784 = vpack.c.bf16 %v1762, %v1761
        %v1785 = vpack.c.bf16 %v1764, %v1763
        %v1786 = vpack.c.bf16 %v1766, %v1765
        %v1787 = vpack.c.bf16 %v1768, %v1767
        %v1788 = vpack.c.bf16 %v1770, %v1769
        %v1789 = vpack.c.bf16 %v1772, %v1771
        %v1790 = vpack.c.bf16 %v1774, %v1773
        %v1791 = vpack.c.bf16 %v1776, %v1775
        %v1792 = vpack.c.bf16 %v1778, %v1777
        %v1793 = vpack.c.bf16 %v1780, %v1779
        %v1807 = vunpack.c.l.b16 %v1781
        %v1808 = vunpack.c.h.b16 %v1781
        %v1809 = vunpack.c.l.b16 %v1782
        %v1810 = vunpack.c.h.b16 %v1782
        %v1811 = vunpack.c.l.b16 %v1783
        %v1812 = vunpack.c.h.b16 %v1783
        %v1813 = vunpack.c.l.b16 %v1784
        %v1814 = vunpack.c.h.b16 %v1784
        %v1815 = vunpack.c.l.b16 %v1785
        %v1816 = vunpack.c.h.b16 %v1785
        %v1817 = vunpack.c.l.b16 %v1786
        %v1818 = vunpack.c.h.b16 %v1786
        %v1819 = vunpack.c.l.b16 %v1787
        %v1820 = vunpack.c.h.b16 %v1787
        %v1821 = vunpack.c.l.b16 %v1788
        %v1822 = vunpack.c.h.b16 %v1788
        %v1823 = vunpack.c.l.b16 %v1789
        %v1824 = vunpack.c.h.b16 %v1789
        %v1825 = vunpack.c.l.b16 %v1790
        %v1826 = vunpack.c.h.b16 %v1790
        %v1827 = vunpack.c.l.b16 %v1791
        %v1828 = vunpack.c.h.b16 %v1791
        %v1829 = vunpack.c.l.b16 %v1792
        %v1830 = vunpack.c.h.b16 %v1792
        %v1831 = vunpack.c.l.b16 %v1793
        %v1832 = vunpack.c.h.b16 %v1793
        %v1833 = vpack.c.b16 %v1807, %v1807
        %v1834 = vpack.c.b16 %v1808, %v1808
        %v1835 = vpack.c.b16 %v1809, %v1809
        %v1836 = vpack.c.b16 %v1810, %v1810
        %v1837 = vpack.c.b16 %v1811, %v1811
        %v1838 = vpack.c.b16 %v1812, %v1812
        %v1839 = vpack.c.b16 %v1813, %v1813
        %v1840 = vpack.c.b16 %v1814, %v1814
        %v1841 = vpack.c.b16 %v1815, %v1815
        %v1842 = vpack.c.b16 %v1816, %v1816
        %v1843 = vpack.c.b16 %v1817, %v1817
        %v1844 = vpack.c.b16 %v1818, %v1818
        %v1845 = vpack.c.b16 %v1819, %v1819
        %v1846 = vpack.c.b16 %v1820, %v1820
        %v1847 = vpack.c.b16 %v1821, %v1821
        %v1848 = vpack.c.b16 %v1822, %v1822
        %v1849 = vpack.c.b16 %v1823, %v1823
        %v1850 = vpack.c.b16 %v1824, %v1824
        %v1851 = vpack.c.b16 %v1825, %v1825
        %v1852 = vpack.c.b16 %v1826, %v1826
        %v1853 = vpack.c.b16 %v1827, %v1827
        %v1854 = vpack.c.b16 %v1828, %v1828
        %v1855 = vpack.c.b16 %v1829, %v1829
        %v1856 = vpack.c.b16 %v1830, %v1830
        %v1857 = vpack.c.b16 %v1831, %v1831
        %v1858 = vpack.c.b16 %v1832, %v1832
        %1885 = vst [vmem:[%s625] sm:$0xf] %v1833
        %1886 = vst [vmem:[%s625 + $0x4] sm:$0xf] %v1834
        %1887 = vst [vmem:[%s625 + $0x8] sm:$0xf] %v1835
        %1888 = vst [vmem:[%s625 + $0xc] sm:$0xf] %v1836
        %1889 = vst [vmem:[%s625 + $0x10] sm:$0xf] %v1837
        %1890 = vst [vmem:[%s625 + $0x14] sm:$0xf] %v1838
        %1891 = vst [vmem:[%s625 + $0x18] sm:$0xf] %v1839
        %1892 = vst [vmem:[%s625 + $0x1c] sm:$0xf] %v1840
        %1893 = vst [vmem:[%s625 + $0x20] sm:$0xf] %v1841
        %1894 = vst [vmem:[%s625 + $0x24] sm:$0xf] %v1842
        %1895 = vst [vmem:[%s625 + $0x28] sm:$0xf] %v1843
        %1896 = vst [vmem:[%s625 + $0x2c] sm:$0xf] %v1844
        %1897 = vst [vmem:[%s625 + $0x30] sm:$0xf] %v1845
        %1898 = vst [vmem:[%s625 + $0x34] sm:$0xf] %v1846
        %1899 = vst [vmem:[%s625 + $0x38] sm:$0xf] %v1847
        %1900 = vst [vmem:[%s625 + $0x3c] sm:$0xf] %v1848
        %1901 = vst [vmem:[%s625 + $0x40] sm:$0xf] %v1849
        %1902 = vst [vmem:[%s625 + $0x44] sm:$0xf] %v1850
        %1903 = vst [vmem:[%s625 + $0x48] sm:$0xf] %v1851
        %1904 = vst [vmem:[%s625 + $0x4c] sm:$0xf] %v1852
        %1905 = vst [vmem:[%s625 + $0x50] sm:$0xf] %v1853
        %1906 = vst [vmem:[%s625 + $0x54] sm:$0xf] %v1854
        %1907 = vst [vmem:[%s625 + $0x58] sm:$0xf] %v1855
        %1908 = vst [vmem:[%s625 + $0x5c] sm:$0xf] %v1856
        %1909 = vst [vmem:[%s625 + $0x60] sm:$0xf] %v1857
        %1910 = vst [vmem:[%s625 + $0x64] sm:$0xf] %v1858
        %s1911 = smul.u32 26, %s14
        %p1912 = scmp.lt.s32.totalorder %s1911, 51
        %s1913 = scalar_select %p1912, %s1911, 51
        %s1914 = smul.addr %s1913, 4
        %s1915 = scalar_lea.vmem %s3, %s1914
        // Predicated region
        $region74: #{lenet_forward.3} parent=68 // pred_check
          %p1916 = pneg %p100
        $region75: #{lenet_forward.3} parent=68 // pred_check_branch
          %1918 = sbr.rel (%p1916) target = $region77
        $region76: #{lenet_forward.3} parent=68 // pred_region
          %s1919 = smul.u32 26, %s14
        $region77: #{lenet_forward.3} parent=68 // pred_fallthru
          _
      $region69: #{lenet_forward.3} parent=5 // pred_fallthru
        _
      %p1920 = scmp.le.s32.totalorder 2, %s9
      // Predicated region
      $region78: #{lenet_forward.3} parent=5 // pred_check
        %p1921 = pneg %p1920
      $region79: #{lenet_forward.3} parent=5 // pred_check_branch
        %1923 = sbr.rel (%p1921) target = $region81
      $region80: #{lenet_forward.3} parent=5 // pred_region
        %s1924 = ssub.s32 %s9, 2
        // Predicated region
        $region82: #{lenet_forward.3} parent=80 // pred_check
          %p1925 = pneg %p106
        $region83: #{lenet_forward.3} parent=80 // pred_check_branch
          %1927 = sbr.rel (%p1925) target = $region85
        $region84: #{lenet_forward.3} parent=80 // pred_region
          %s1928 = smul.u32 26, %s15
          %p1929 = scmp.lt.s32.totalorder %s1928, 51
          %s1930 = scalar_select %p1929, %s1928, 51
          %s1931 = smul.addr %s1930, 4
          %s1932 = scalar_lea.vmem %s3, %s1931
        $region85: #{lenet_forward.3} parent=80 // pred_fallthru
          _
      $region81: #{lenet_forward.3} parent=5 // pred_fallthru
        _
    $region6: #{lenet_forward.3} parent=1 // loop_footer
      %s13 = sadd.s32 1, %s9
    $region7: #{lenet_forward.3} parent=1 // loop_footer_branch
      %8 = sbr.rel target = $region3
    $region8: #{lenet_forward.3} parent=1 // loop_exit
      _

// kernel: lenet_forward.4
$region0: #{lenet_forward.4}
  #allocation0 [shape = 'u32[]', space=smem, size = 0x4, offset = 0x4, fixed_abs, tag = 'smem constant byte address 0x4 - core index']
  #allocation1 [shape = 'u32[144,128]{1,0:T(1,128)}', space=vmem, size = 0x12000, scoped, tag = 'internal scratch']
  %s0 = inlined_call_operand.vmem [shape: bf16[4,64,400], index: 0, kind: input, shape index: {}]
  %s1 = inlined_call_operand.vmem [shape: bf16[400,128], index: 1, kind: input, shape index: {}]
  %s2 = inlined_call_operand.vmem [shape: f32[1,128], index: 2, kind: input, shape index: {}]
  %s3 = inlined_call_operand.vmem [shape: bf16[64,128], index: 3, kind: output, shape index: {}]
  %s4 = sld [smem:[#allocation0]]
  $region68: #{lenet_forward.4} parent=0
    _
  %s6 = ssub.s32 1, %s4
  %s7 = scalar_select 0, %s6, %s4
  $region1: #{lenet_forward.4} parent=0
    #allocation2 [shape = 'u8[262144]{0}', space=vmem, size = 0x40000, scoped, tag = 'input window, operand 0']
    loop: start=0, step=1, limit=4
    $region2: #{lenet_forward.4} parent=1 // loop_pre_header
      _
    $region3: #{lenet_forward.4} parent=1 // loop_header
      %s9 = sphi 0, %s13
      %p10 = scmp.ge.s32.totalorder %s9, 4
      %s19 = sphi 0, %s21
      %s22 = sphi 0, %s19
      %s23 = sphi 0, %s22
      %s39 = sphi 0, %s23
      %s43 = sphi 0, %s43
      %s45 = sphi 0, %s43
      %s46 = sphi 0, %s45
      %s60 = sphi 0, %s46
      %s64 = sphi 0, %s64
      %s66 = sphi 0, %s64
      %s67 = sphi 0, %s66
      %s81 = sphi 0, %s67
      %s87 = sphi 0, %s89
      %s90 = sphi 0, %s87
      %s91 = sphi 0, %s90
      %s107 = sphi 0, %s91
    $region4: #{lenet_forward.4} parent=1 // loop_header_branch
      %12 = sbr.rel (%p10) target = $region8
    $region5: #{lenet_forward.4} parent=1 // loop_body
      %s14 = ssub.s32 %s9, 1
      %s15 = ssub.s32 %s9, 2
      %s16 = sadd.s32 %s9, 1
      %s17 = ssub.s32 %s9, %s16
      %p18 = scmp.eq.s32.totalorder %s17, 0
      %s20 = sadd.s32 %s19, 1
      %s21 = scalar_select %p18, %s19, %s20
      %p24 = pneg %p18
      %p25 = scmp.eq.s32.totalorder %s9, 1
      %p26 = por %p24, %p25
      %p27 = scmp.ne.s32.totalorder %s19, %s22
      %p28 = scmp.eq.s32.totalorder %s9, 0
      %p29 = por %p27, %p28
      %p30 = scmp.ne.s32.totalorder %s19, %s22
      %p31 = scmp.eq.s32.totalorder %s14, 1
      %p32 = por %p30, %p31
      %p33 = scmp.ne.s32.totalorder %s22, %s23
      %p34 = scmp.eq.s32.totalorder %s14, 0
      %p35 = por %p33, %p34
      %p36 = scmp.ne.s32.totalorder %s22, %s23
      %p37 = scmp.eq.s32.totalorder %s15, 1
      %p38 = por %p36, %p37
      %p40 = scmp.ne.s32.totalorder %s23, %s39
      %p41 = scmp.eq.s32.totalorder %s15, 0
      %p42 = por %p40, %p41
      %s44 = sadd.s32 %s43, 1
      %p47 = scmp.eq.s32.totalorder %s9, 1
      %p48 = scmp.ne.s32.totalorder %s43, %s45
      %p49 = scmp.eq.s32.totalorder %s9, 0
      %p50 = por %p48, %p49
      %p51 = scmp.ne.s32.totalorder %s43, %s45
      %p52 = scmp.eq.s32.totalorder %s14, 1
      %p53 = por %p51, %p52
      %p54 = scmp.ne.s32.totalorder %s45, %s46
      %p55 = scmp.eq.s32.totalorder %s14, 0
      %p56 = por %p54, %p55
      %p57 = scmp.ne.s32.totalorder %s45, %s46
      %p58 = scmp.eq.s32.totalorder %s15, 1
      %p59 = por %p57, %p58
      %p61 = scmp.ne.s32.totalorder %s46, %s60
      %p62 = scmp.eq.s32.totalorder %s15, 0
      %p63 = por %p61, %p62
      %s65 = sadd.s32 %s64, 1
      %p68 = scmp.eq.s32.totalorder %s9, 1
      %p69 = scmp.ne.s32.totalorder %s64, %s66
      %p70 = scmp.eq.s32.totalorder %s9, 0
      %p71 = por %p69, %p70
      %p72 = scmp.ne.s32.totalorder %s64, %s66
      %p73 = scmp.eq.s32.totalorder %s14, 1
      %p74 = por %p72, %p73
      %p75 = scmp.ne.s32.totalorder %s66, %s67
      %p76 = scmp.eq.s32.totalorder %s14, 0
      %p77 = por %p75, %p76
      %p78 = scmp.ne.s32.totalorder %s66, %s67
      %p79 = scmp.eq.s32.totalorder %s15, 1
      %p80 = por %p78, %p79
      %p82 = scmp.ne.s32.totalorder %s67, %s81
      %p83 = scmp.eq.s32.totalorder %s15, 0
      %p84 = por %p82, %p83
      %s85 = ssub.s32 %s9, %s16
      %p86 = scmp.eq.s32.totalorder %s85, 0
      %s88 = sadd.s32 %s87, 1
      %s89 = scalar_select %p86, %s87, %s88
      %p92 = pneg %p86
      %p93 = scmp.eq.s32.totalorder %s9, 1
      %p94 = por %p92, %p93
      %p95 = scmp.ne.s32.totalorder %s87, %s90
      %p96 = scmp.eq.s32.totalorder %s9, 0
      %p97 = por %p95, %p96
      %p98 = scmp.ne.s32.totalorder %s87, %s90
      %p99 = scmp.eq.s32.totalorder %s14, 1
      %p100 = por %p98, %p99
      %p101 = scmp.ne.s32.totalorder %s90, %s91
      %p102 = scmp.eq.s32.totalorder %s14, 0
      %p103 = por %p101, %p102
      %p104 = scmp.ne.s32.totalorder %s90, %s91
      %p105 = scmp.eq.s32.totalorder %s15, 1
      %p106 = por %p104, %p105
      %p108 = scmp.ne.s32.totalorder %s91, %s107
      %p109 = scmp.eq.s32.totalorder %s15, 0
      %p110 = por %p108, %p109
      %p111 = scmp.le.s32.totalorder 1, %s9
      %p112 = scmp.lt.s32.totalorder %s9, 3
      %p113 = pnand %p111, %p112
      %p114 = pneg %p113
      // Predicated region
      $region9: #{lenet_forward.4} parent=5 // pred_check
        _
      $region10: #{lenet_forward.4} parent=5 // pred_check_branch
        %116 = sbr.rel (%p113) target = $region12
      $region11: #{lenet_forward.4} parent=5 // pred_region
        %s117 = ssub.s32 %s9, 1
        // Predicated region
        $region13: #{lenet_forward.4} parent=11 // pred_check
          %p118 = pneg %p56
        $region14: #{lenet_forward.4} parent=11 // pred_check_branch
          %120 = sbr.rel (%p118) target = $region16
        $region15: #{lenet_forward.4} parent=11 // pred_region
          _
        $region16: #{lenet_forward.4} parent=11 // pred_fallthru
          _
        // Predicated region
        $region17: #{lenet_forward.4} parent=11 // pred_check
          %p121 = pneg %p77
        $region18: #{lenet_forward.4} parent=11 // pred_check_branch
          %123 = sbr.rel (%p121) target = $region20
        $region19: #{lenet_forward.4} parent=11 // pred_region
          _
        $region20: #{lenet_forward.4} parent=11 // pred_fallthru
          _
      $region12: #{lenet_forward.4} parent=5 // pred_fallthru
        _
      %p124 = scmp.lt.s32.totalorder %s9, 2
      // Predicated region
      $region21: #{lenet_forward.4} parent=5 // pred_check
        %p125 = pneg %p124
      $region22: #{lenet_forward.4} parent=5 // pred_check_branch
        %127 = sbr.rel (%p125) target = $region24
      $region23: #{lenet_forward.4} parent=5 // pred_region
        // Predicated region
        $region25: #{lenet_forward.4} parent=23 // pred_check
          %p128 = pneg %p29
        $region26: #{lenet_forward.4} parent=23 // pred_check_branch
          %130 = sbr.rel (%p128) target = $region28
        $region27: #{lenet_forward.4} parent=23 // pred_region
          %s131 = sand.u32 %s19, 1
          %s132 = sand.u32 %s19, 1
          %s133 = smul.addr %s132, 256
          %s134 = scalar_lea.vmem [#allocation2], %s133
          %s135 = smul.u32 4, %s9
          %s136 = smul.addr %s135, 4
          %s137 = smul.addr %s136, 4
          %s138 = scalar_lea.vmem %s0, %s137
          // Predicated region
          $region29: #{lenet_forward.4} parent=27 // pred_check
            _
          $region30: #{lenet_forward.4} parent=27 // pred_check_branch
            %140 = sbr.rel (0) target = $region32
          $region31: #{lenet_forward.4} parent=27 // pred_region
            // Predicated region
            $region33: #{lenet_forward.4} parent=31 // pred_check
              _
            $region34: #{lenet_forward.4} parent=31 // pred_check_branch
              %142 = sbr.rel (0) target = $region36
            $region35: #{lenet_forward.4} parent=31 // pred_region
              loop: start=0, step=1, limit=1
              $region37: #{lenet_forward.4} parent=35 // loop_pre_header
                _
              $region38: #{lenet_forward.4} parent=35 // loop_header
                %s144 = sphi 0, %s148
                %p145 = scmp.ge.s32.totalorder %s144, 1
                %s149 = sphi %s138, %s138
                %s150 = sphi %s134, %s134
              $region39: #{lenet_forward.4} parent=35 // loop_header_branch
                %147 = sbr.rel (%p145) target = $region43
              $region40: #{lenet_forward.4} parent=35 // loop_body
                %v151 = vld [vmem:[%s149] sm:$0xff]
                %152 = vst [vmem:[%s150] sm:$0xff] %v151
                %v153 = vld [vmem:[%s149 + $0x8] sm:$0xff]
                %154 = vst [vmem:[%s150 + $0x8] sm:$0xff] %v153
                %v155 = vld [vmem:[%s149 + $0x10] sm:$0xff]
                %156 = vst [vmem:[%s150 + $0x10] sm:$0xff] %v155
                %v157 = vld [vmem:[%s149 + $0x18] sm:$0xff]
                %158 = vst [vmem:[%s150 + $0x18] sm:$0xff] %v157
                %v159 = vld [vmem:[%s149 + $0x20] sm:$0xff]
                %160 = vst [vmem:[%s150 + $0x20] sm:$0xff] %v159
                %v161 = vld [vmem:[%s149 + $0x28] sm:$0xff]
                %162 = vst [vmem:[%s150 + $0x28] sm:$0xff] %v161
                %v163 = vld [vmem:[%s149 + $0x30] sm:$0xff]
                %164 = vst [vmem:[%s150 + $0x30] sm:$0xff] %v163
                %v165 = vld [vmem:[%s149 + $0x38] sm:$0xff]
                %166 = vst [vmem:[%s150 + $0x38] sm:$0xff] %v165
                %v167 = vld [vmem:[%s149 + $0x80] sm:$0xff]
                %168 = vst [vmem:[%s150 + $0x40] sm:$0xff] %v167
                %v169 = vld [vmem:[%s149 + $0x88] sm:$0xff]
                %170 = vst [vmem:[%s150 + $0x48] sm:$0xff] %v169
                %v171 = vld [vmem:[%s149 + $0x90] sm:$0xff]
                %172 = vst [vmem:[%s150 + $0x50] sm:$0xff] %v171
                %v173 = vld [vmem:[%s149 + $0x98] sm:$0xff]
                %174 = vst [vmem:[%s150 + $0x58] sm:$0xff] %v173
                %v175 = vld [vmem:[%s149 + $0xa0] sm:$0xff]
                %176 = vst [vmem:[%s150 + $0x60] sm:$0xff] %v175
                %v177 = vld [vmem:[%s149 + $0xa8] sm:$0xff]
                %178 = vst [vmem:[%s150 + $0x68] sm:$0xff] %v177
                %v179 = vld [vmem:[%s149 + $0xb0] sm:$0xff]
                %180 = vst [vmem:[%s150 + $0x70] sm:$0xff] %v179
                %v181 = vld [vmem:[%s149 + $0xb8] sm:$0xff]
                %182 = vst [vmem:[%s150 + $0x78] sm:$0xff] %v181
                %v183 = vld [vmem:[%s149 + $0x100] sm:$0xff]
                %184 = vst [vmem:[%s150 + $0x80] sm:$0xff] %v183
                %v185 = vld [vmem:[%s149 + $0x108] sm:$0xff]
                %186 = vst [vmem:[%s150 + $0x88] sm:$0xff] %v185
                %v187 = vld [vmem:[%s149 + $0x110] sm:$0xff]
                %188 = vst [vmem:[%s150 + $0x90] sm:$0xff] %v187
                %v189 = vld [vmem:[%s149 + $0x118] sm:$0xff]
                %190 = vst [vmem:[%s150 + $0x98] sm:$0xff] %v189
                %v191 = vld [vmem:[%s149 + $0x120] sm:$0xff]
                %192 = vst [vmem:[%s150 + $0xa0] sm:$0xff] %v191
                %v193 = vld [vmem:[%s149 + $0x128] sm:$0xff]
                %194 = vst [vmem:[%s150 + $0xa8] sm:$0xff] %v193
                %v195 = vld [vmem:[%s149 + $0x130] sm:$0xff]
                %196 = vst [vmem:[%s150 + $0xb0] sm:$0xff] %v195
                %v197 = vld [vmem:[%s149 + $0x138] sm:$0xff]
                %198 = vst [vmem:[%s150 + $0xb8] sm:$0xff] %v197
                %v199 = vld [vmem:[%s149 + $0x180] sm:$0xff]
                %200 = vst [vmem:[%s150 + $0xc0] sm:$0xff] %v199
                %v201 = vld [vmem:[%s149 + $0x188] sm:$0xff]
                %202 = vst [vmem:[%s150 + $0xc8] sm:$0xff] %v201
                %v203 = vld [vmem:[%s149 + $0x190] sm:$0xff]
                %204 = vst [vmem:[%s150 + $0xd0] sm:$0xff] %v203
                %v205 = vld [vmem:[%s149 + $0x198] sm:$0xff]
                %206 = vst [vmem:[%s150 + $0xd8] sm:$0xff] %v205
                %v207 = vld [vmem:[%s149 + $0x1a0] sm:$0xff]
                %208 = vst [vmem:[%s150 + $0xe0] sm:$0xff] %v207
                %v209 = vld [vmem:[%s149 + $0x1a8] sm:$0xff]
                %210 = vst [vmem:[%s150 + $0xe8] sm:$0xff] %v209
                %v211 = vld [vmem:[%s149 + $0x1b0] sm:$0xff]
                %212 = vst [vmem:[%s150 + $0xf0] sm:$0xff] %v211
                %v213 = vld [vmem:[%s149 + $0x1b8] sm:$0xff]
                %214 = vst [vmem:[%s150 + $0xf8] sm:$0xff] %v213
              $region41: #{lenet_forward.4} parent=35 // loop_footer
                %s148 = sadd.s32 1, %s144
              $region42: #{lenet_forward.4} parent=35 // loop_footer_branch
                %143 = sbr.rel target = $region38
              $region43: #{lenet_forward.4} parent=35 // loop_exit
                _
            $region36: #{lenet_forward.4} parent=31 // pred_fallthru
              _
            // Predicated region
            $region44: #{lenet_forward.4} parent=31 // pred_check
              _
            $region45: #{lenet_forward.4} parent=31 // pred_check_branch
              %216 = sbr.rel target = $region47
            $region46: #{lenet_forward.4} parent=31 // pred_region
              _
            $region47: #{lenet_forward.4} parent=31 // pred_fallthru
              _
          $region32: #{lenet_forward.4} parent=27 // pred_fallthru
            _
          %217 = vnop
        $region28: #{lenet_forward.4} parent=23 // pred_fallthru
          _
      $region24: #{lenet_forward.4} parent=5 // pred_fallthru
        _
      %p218 = scmp.le.s32.totalorder 1, %s9
      %p219 = scmp.lt.s32.totalorder %s9, 3
      %p220 = pnand %p218, %p219
      %p221 = pneg %p220
      // Predicated region
      $region48: #{lenet_forward.4} parent=5 // pred_check
        _
      $region49: #{lenet_forward.4} parent=5 // pred_check_branch
        %223 = sbr.rel (%p220) target = $region51
      $region50: #{lenet_forward.4} parent=5 // pred_region
        %s224 = ssub.s32 %s9, 1
        %s225 = sand.u32 %s22, 1
        %s226 = sand.u32 %s22, 1
        %s227 = smul.addr %s226, 256
        %s228 = scalar_lea.vmem [#allocation2], %s227
        // Predicated region
        $region52: #{lenet_forward.4} parent=50 // pred_check
          %p229 = pneg %p35
        $region53: #{lenet_forward.4} parent=50 // pred_check_branch
          %231 = sbr.rel (%p229) target = $region55
        $region54: #{lenet_forward.4} parent=50 // pred_region
          _
        $region55: #{lenet_forward.4} parent=50 // pred_fallthru
          _
        %s232 = sand.u32 %s22, 1
        %s233 = sand.u32 %s22, 1
        %s234 = smul.addr %s233, 256
        %s235 = scalar_lea.vmem [#allocation2], %s234
        %p236 = pneg %p35
        %p237 = pneg %p32
        %p238 = pneg %p56
        %p239 = pneg %p53
        %p240 = pneg %p77
        %p241 = pneg %p74
        %p242 = pneg %p103
        %p243 = pneg %p100
        %s244 = smul.u32 4, %s14
        %p245 = scmp.lt.s32.totalorder %s244, 7
        %s246 = scalar_select %p245, %s244, 7
        %s247 = smul.addr %s246, 4
        %s248 = scalar_lea.vmem %s3, %s247
        %s249 = smul.u32 4, %s14
        %s250 = smul.u32 4, %s14
        %p251 = scmp.lt.s32.totalorder %s250, 7
        %s252 = scalar_select %p251, %s250, 7
        %s253 = smul.addr %s252, 4
        %s254 = scalar_lea.vmem %s3, %s253
        %s255 = smul.u32 4, %s14
        %v257 = vld [vmem:[%s228] sm:$0xff]
        %v258 = vld [vmem:[%s228 + $0x8] sm:$0xff]
        %v259 = vld [vmem:[%s228 + $0x10] sm:$0xff]
        %v260 = vld [vmem:[%s228 + $0x18] sm:$0xff]
        %v261 = vld [vmem:[%s228 + $0x20] sm:$0xff]
        %v262 = vld [vmem:[%s228 + $0x28] sm:$0xff]
        %v263 = vld [vmem:[%s228 + $0x30] sm:$0xff]
        %v264 = vld [vmem:[%s228 + $0x38] sm:$0xff]
        %v265 = vld [vmem:[%s228 + $0x40] sm:$0xff]
        %v266 = vld [vmem:[%s228 + $0x48] sm:$0xff]
        %v267 = vld [vmem:[%s228 + $0x50] sm:$0xff]
        %v268 = vld [vmem:[%s228 + $0x58] sm:$0xff]
        %v269 = vld [vmem:[%s228 + $0x60] sm:$0xff]
        %v270 = vld [vmem:[%s228 + $0x68] sm:$0xff]
        %v271 = vld [vmem:[%s228 + $0x70] sm:$0xff]
        %v272 = vld [vmem:[%s228 + $0x78] sm:$0xff]
        %v273 = vld [vmem:[%s228 + $0x80] sm:$0xff]
        %v274 = vld [vmem:[%s228 + $0x88] sm:$0xff]
        %v275 = vld [vmem:[%s228 + $0x90] sm:$0xff]
        %v276 = vld [vmem:[%s228 + $0x98] sm:$0xff]
        %v277 = vld [vmem:[%s228 + $0xa0] sm:$0xff]
        %v278 = vld [vmem:[%s228 + $0xa8] sm:$0xff]
        %v279 = vld [vmem:[%s228 + $0xb0] sm:$0xff]
        %v280 = vld [vmem:[%s228 + $0xb8] sm:$0xff]
        %v281 = vld [vmem:[%s228 + $0xc0] sm:$0xff]
        %v282 = vld [vmem:[%s228 + $0xc8] sm:$0xff]
        %v283 = vld [vmem:[%s228 + $0xd0] sm:$0xff]
        %v284 = vld [vmem:[%s228 + $0xd8] sm:$0xff]
        %v285 = vld [vmem:[%s228 + $0xe0] sm:$0xff]
        %v286 = vld [vmem:[%s228 + $0xe8] sm:$0xff]
        %v287 = vld [vmem:[%s228 + $0xf0] sm:$0xff]
        %v288 = vld [vmem:[%s228 + $0xf8] sm:$0xff]
        %v289 = vld [vmem:[%s1] sm:$0xf]
        %v290 = vld [vmem:[%s1 + $0x4] sm:$0xf]
        %v291 = vld [vmem:[%s1 + $0x8] sm:$0xf]
        %v292 = vld [vmem:[%s1 + $0xc] sm:$0xf]
        %v293 = vld [vmem:[%s1 + $0x10] sm:$0xf]
        %v294 = vld [vmem:[%s1 + $0x14] sm:$0xf]
        %v295 = vld [vmem:[%s1 + $0x18] sm:$0xf]
        %v296 = vld [vmem:[%s1 + $0x1c] sm:$0xf]
        %v297 = vld [vmem:[%s1 + $0x20] sm:$0xf]
        %v298 = vld [vmem:[%s1 + $0x24] sm:$0xf]
        %v299 = vld [vmem:[%s1 + $0x28] sm:$0xf]
        %v300 = vld [vmem:[%s1 + $0x2c] sm:$0xf]
        %v301 = vld [vmem:[%s1 + $0x30] sm:$0xf]
        %v302 = vld [vmem:[%s1 + $0x34] sm:$0xf]
        %v303 = vld [vmem:[%s1 + $0x38] sm:$0xf]
        %v304 = vld [vmem:[%s1 + $0x3c] sm:$0xf]
        %v305 = vld [vmem:[%s1 + $0x40] sm:$0xf]
        %v306 = vld [vmem:[%s1 + $0x44] sm:$0xf]
        %v307 = vld [vmem:[%s1 + $0x48] sm:$0xf]
        %v308 = vld [vmem:[%s1 + $0x4c] sm:$0xf]
        %v309 = vld [vmem:[%s1 + $0x50] sm:$0xf]
        %v310 = vld [vmem:[%s1 + $0x54] sm:$0xf]
        %v311 = vld [vmem:[%s1 + $0x58] sm:$0xf]
        %v312 = vld [vmem:[%s1 + $0x5c] sm:$0xf]
        %v313 = vld [vmem:[%s1 + $0x60] sm:$0xf]
        %v314 = vld [vmem:[%s1 + $0x64] sm:$0xf]
        %v315 = vld [vmem:[%s1 + $0x68] sm:$0xf]
        %v316 = vld [vmem:[%s1 + $0x6c] sm:$0xf]
        %v317 = vld [vmem:[%s1 + $0x70] sm:$0xf]
        %v318 = vld [vmem:[%s1 + $0x74] sm:$0xf]
        %v319 = vld [vmem:[%s1 + $0x78] sm:$0xf]
        %v320 = vld [vmem:[%s1 + $0x7c] sm:$0xf]
        %v321 = vld [vmem:[%s1 + $0x80] sm:$0xf]
        %v322 = vld [vmem:[%s1 + $0x84] sm:$0xf]
        %v323 = vld [vmem:[%s1 + $0x88] sm:$0xf]
        %v324 = vld [vmem:[%s1 + $0x8c] sm:$0xf]
        %v325 = vld [vmem:[%s1 + $0x90] sm:$0xf]
        %v326 = vld [vmem:[%s1 + $0x94] sm:$0xf]
        %v327 = vld [vmem:[%s1 + $0x98] sm:$0xf]
        %v328 = vld [vmem:[%s1 + $0x9c] sm:$0xf]
        %v329 = vld [vmem:[%s1 + $0xa0] sm:$0xf]
        %v330 = vld [vmem:[%s1 + $0xa4] sm:$0xf]
        %v331 = vld [vmem:[%s1 + $0xa8] sm:$0xf]
        %v332 = vld [vmem:[%s1 + $0xac] sm:$0xf]
        %v333 = vld [vmem:[%s1 + $0xb0] sm:$0xf]
        %v334 = vld [vmem:[%s1 + $0xb4] sm:$0xf]
        %v335 = vld [vmem:[%s1 + $0xb8] sm:$0xf]
        %v336 = vld [vmem:[%s1 + $0xbc] sm:$0xf]
        %v337 = vld [vmem:[%s1 + $0xc0] sm:$0xf]
        %v338 = vld [vmem:[%s1 + $0xc4] sm:$0xf]
        %v371 = vunpack.c.l.b16 %v257
        %v372 = vunpack.c.h.b16 %v257
        %v373 = vunpack.c.l.b16 %v258
        %v374 = vunpack.c.h.b16 %v258
        %v375 = vunpack.c.l.b16 %v259
        %v376 = vunpack.c.h.b16 %v259
        %v377 = vunpack.c.l.b16 %v260
        %v378 = vunpack.c.h.b16 %v260
        %v379 = vunpack.c.l.b16 %v261
        %v380 = vunpack.c.h.b16 %v261
        %v381 = vunpack.c.l.b16 %v262
        %v382 = vunpack.c.h.b16 %v262
        %v383 = vunpack.c.l.b16 %v263
        %v384 = vunpack.c.h.b16 %v263
        %v385 = vunpack.c.l.b16 %v264
        %v386 = vunpack.c.h.b16 %v264
        %v387 = vunpack.c.l.b16 %v265
        %v388 = vunpack.c.h.b16 %v265
        %v389 = vunpack.c.l.b16 %v266
        %v390 = vunpack.c.h.b16 %v266
        %v391 = vunpack.c.l.b16 %v267
        %v392 = vunpack.c.h.b16 %v267
        %v393 = vunpack.c.l.b16 %v268
        %v394 = vunpack.c.h.b16 %v268
        %v395 = vunpack.c.l.b16 %v269
        %v396 = vunpack.c.h.b16 %v269
        %v397 = vunpack.c.l.b16 %v270
        %v398 = vunpack.c.h.b16 %v270
        %v399 = vunpack.c.l.b16 %v271
        %v400 = vunpack.c.h.b16 %v271
        %v401 = vunpack.c.l.b16 %v272
        %v402 = vunpack.c.h.b16 %v272
        %v403 = vunpack.c.l.b16 %v273
        %v404 = vunpack.c.h.b16 %v273
        %v405 = vunpack.c.l.b16 %v274
        %v406 = vunpack.c.h.b16 %v274
        %v407 = vunpack.c.l.b16 %v275
        %v408 = vunpack.c.h.b16 %v275
        %v409 = vunpack.c.l.b16 %v276
        %v410 = vunpack.c.h.b16 %v276
        %v411 = vunpack.c.l.b16 %v277
        %v412 = vunpack.c.h.b16 %v277
        %v413 = vunpack.c.l.b16 %v278
        %v414 = vunpack.c.h.b16 %v278
        %v415 = vunpack.c.l.b16 %v279
        %v416 = vunpack.c.h.b16 %v279
        %v417 = vunpack.c.l.b16 %v280
        %v418 = vunpack.c.h.b16 %v280
        %v419 = vunpack.c.l.b16 %v281
        %v420 = vunpack.c.h.b16 %v281
        %v421 = vunpack.c.l.b16 %v282
        %v422 = vunpack.c.h.b16 %v282
        %v423 = vunpack.c.l.b16 %v283
        %v424 = vunpack.c.h.b16 %v283
        %v425 = vunpack.c.l.b16 %v284
        %v426 = vunpack.c.h.b16 %v284
        %v427 = vunpack.c.l.b16 %v285
        %v428 = vunpack.c.h.b16 %v285
        %v429 = vunpack.c.l.b16 %v286
        %v430 = vunpack.c.h.b16 %v286
        %v431 = vunpack.c.l.b16 %v287
        %v432 = vunpack.c.h.b16 %v287
        %v433 = vunpack.c.l.b16 %v288
        %v434 = vunpack.c.h.b16 %v288
        %v435 = vpack.c.b16 %v375, %v371
        %v436 = vpack.c.b16 %v376, %v372
        %v437 = vpack.c.b16 %v377, %v373
        %v438 = vpack.c.b16 %v378, %v374
        %v439 = vpack.c.b16 %v383, %v379
        %v440 = vpack.c.b16 %v384, %v380
        %v441 = vpack.c.b16 %v385, %v381
        %v442 = vpack.c.b16 %v386, %v382
        %v443 = vpack.c.b16 %v391, %v387
        %v444 = vpack.c.b16 %v392, %v388
        %v445 = vpack.c.b16 %v393, %v389
        %v446 = vpack.c.b16 %v394, %v390
        %v447 = vpack.c.b16 %v399, %v395
        %v448 = vpack.c.b16 %v400, %v396
        %v449 = vpack.c.b16 %v401, %v397
        %v450 = vpack.c.b16 %v402, %v398
        %v451 = vpack.c.b16 %v407, %v403
        %v452 = vpack.c.b16 %v408, %v404
        %v453 = vpack.c.b16 %v409, %v405
        %v454 = vpack.c.b16 %v410, %v406
        %v455 = vpack.c.b16 %v415, %v411
        %v456 = vpack.c.b16 %v416, %v412
        %v457 = vpack.c.b16 %v417, %v413
        %v458 = vpack.c.b16 %v418, %v414
        %v459 = vpack.c.b16 %v423, %v419
        %v460 = vpack.c.b16 %v424, %v420
        %v461 = vpack.c.b16 %v425, %v421
        %v462 = vpack.c.b16 %v426, %v422
        %v463 = vpack.c.b16 %v431, %v427
        %v464 = vpack.c.b16 %v432, %v428
        %v465 = vpack.c.b16 %v433, %v429
        %v466 = vpack.c.b16 %v434, %v430
        %v541 = vunpack.c.l.b16 %v289
        %v542 = vunpack.c.l.b16 %v290
        %v543 = vunpack.c.l.b16 %v291
        %v544 = vunpack.c.l.b16 %v292
        %v545 = vunpack.c.l.b16 %v293
        %v546 = vunpack.c.l.b16 %v294
        %v547 = vunpack.c.l.b16 %v295
        %v548 = vunpack.c.l.b16 %v296
        %v549 = vunpack.c.l.b16 %v297
        %v550 = vunpack.c.l.b16 %v298
        %v551 = vunpack.c.l.b16 %v299
        %v552 = vunpack.c.l.b16 %v300
        %v553 = vunpack.c.l.b16 %v301
        %v554 = vunpack.c.l.b16 %v302
        %v555 = vunpack.c.l.b16 %v303
        %v556 = vunpack.c.l.b16 %v304
        %v557 = vunpack.c.l.b16 %v305
        %v558 = vunpack.c.l.b16 %v306
        %v559 = vunpack.c.l.b16 %v307
        %v560 = vunpack.c.l.b16 %v308
        %v561 = vunpack.c.l.b16 %v309
        %v562 = vunpack.c.l.b16 %v310
        %v563 = vunpack.c.l.b16 %v311
        %v564 = vunpack.c.l.b16 %v312
        %v565 = vunpack.c.l.b16 %v313
        %v566 = vunpack.c.l.b16 %v314
        %v567 = vunpack.c.l.b16 %v315
        %v568 = vunpack.c.l.b16 %v316
        %v569 = vunpack.c.l.b16 %v317
        %v570 = vunpack.c.l.b16 %v318
        %v571 = vunpack.c.l.b16 %v319
        %v572 = vunpack.c.l.b16 %v320
        %v573 = vunpack.c.l.b16 %v321
        %v574 = vunpack.c.l.b16 %v322
        %v575 = vunpack.c.l.b16 %v323
        %v576 = vunpack.c.l.b16 %v324
        %v577 = vunpack.c.l.b16 %v325
        %v578 = vunpack.c.l.b16 %v326
        %v579 = vunpack.c.l.b16 %v327
        %v580 = vunpack.c.l.b16 %v328
        %v581 = vunpack.c.l.b16 %v329
        %v582 = vunpack.c.l.b16 %v330
        %v583 = vunpack.c.l.b16 %v331
        %v584 = vunpack.c.l.b16 %v332
        %v585 = vunpack.c.l.b16 %v333
        %v586 = vunpack.c.l.b16 %v334
        %v587 = vunpack.c.l.b16 %v335
        %v588 = vunpack.c.l.b16 %v336
        %v589 = vunpack.c.l.b16 %v337
        %v590 = vunpack.c.l.b16 %v338
        %v591 = vpack.c.b16 %v542, %v541
        %v592 = vpack.c.b16 %v544, %v543
        %v593 = vpack.c.b16 %v546, %v545
        %v594 = vpack.c.b16 %v548, %v547
        %v595 = vpack.c.b16 %v550, %v549
        %v596 = vpack.c.b16 %v552, %v551
        %v597 = vpack.c.b16 %v554, %v553
        %v598 = vpack.c.b16 %v556, %v555
        %v599 = vpack.c.b16 %v558, %v557
        %v600 = vpack.c.b16 %v560, %v559
        %v601 = vpack.c.b16 %v562, %v561
        %v602 = vpack.c.b16 %v564, %v563
        %v603 = vpack.c.b16 %v566, %v565
        %v604 = vpack.c.b16 %v568, %v567
        %v605 = vpack.c.b16 %v570, %v569
        %v606 = vpack.c.b16 %v572, %v571
        %v607 = vpack.c.b16 %v574, %v573
        %v608 = vpack.c.b16 %v576, %v575
        %v609 = vpack.c.b16 %v578, %v577
        %v610 = vpack.c.b16 %v580, %v579
        %v611 = vpack.c.b16 %v582, %v581
        %v612 = vpack.c.b16 %v584, %v583
        %v613 = vpack.c.b16 %v586, %v585
        %v614 = vpack.c.b16 %v588, %v587
        %v615 = vpack.c.b16 %v590, %v589
        %vm641 = vcmask 130048
        %v643 = vsel %vm641, %v438, 0
        %v646 = vsel %vm641, %v442, 0
        %v649 = vsel %vm641, %v446, 0
        %v652 = vsel %vm641, %v450, 0
        %v655 = vsel %vm641, %v454, 0
        %v658 = vsel %vm641, %v458, 0
        %v661 = vsel %vm641, %v462, 0
        %v664 = vsel %vm641, %v466, 0
        %666 = vmatprep.subr.bf16.mxu0 0
        %667 = vmatpush1.bf16.msra.mxu0 %v591
        %668 = vmatprep.subr.bf16.mxu0 0
        %669 = vmatpush1.bf16.msra.mxu0 %v592
        %670 = vmatprep.subr.bf16.mxu0 0
        %671 = vmatpush1.bf16.msra.mxu0 %v593
        %672 = vmatprep.subr.bf16.mxu0 0
        %673 = vmatpush1.bf16.msra.mxu0 %v594
        %674 = vmatprep.subr.bf16.mxu0 0
        %675 = vmatpush1.bf16.msra.mxu0 %v595
        %676 = vmatprep.subr.bf16.mxu0 0
        %677 = vmatpush1.bf16.msra.mxu0 %v596
        %678 = vmatprep.subr.bf16.mxu0 0
        %679 = vmatpush1.bf16.msra.mxu0 %v597
        %680 = vmatprep.subr.bf16.mxu0 0
        %681 = vmatpush1.bf16.msra.mxu0 %v598
        %682 = vmatprep.subr.bf16.mxu0 0
        %683 = vmatpush1.bf16.msra.mxu0 %v599
        %684 = vmatprep.subr.bf16.mxu0 0
        %685 = vmatpush1.bf16.msra.mxu0 %v600
        %686 = vmatprep.subr.bf16.mxu0 0
        %687 = vmatpush1.bf16.msra.mxu0 %v601
        %688 = vmatprep.subr.bf16.mxu0 0
        %689 = vmatpush1.bf16.msra.mxu0 %v602
        %690 = vmatprep.subr.bf16.mxu0 0
        %691 = vmatpush1.bf16.msra.mxu0 %v603
        %692 = vmatprep.subr.bf16.mxu0 0
        %693 = vmatpush1.bf16.msra.mxu0 %v604
        %694 = vmatprep.subr.bf16.mxu0 0
        %695 = vmatpush1.bf16.msra.mxu0 %v605
        %696 = vmatprep.subr.bf16.mxu0 0
        %697 = vmatpush1.bf16.msra.mxu0 %v606
        %698 = vmatprep.mubr.bf16.mxu0 %v436
        %699 = vmatmul.mubr.bf16.gmra.mrb[0].mxu0 %v435
        %v700 = vpop.f32.mrb[0].mxu0
        %v701 = vadd.f32 0.0, %v700
        %v702 = vpop.f32.mrb[0].mxu0
        %v703 = vpop.f32.mrb[0].mxu0
        %v704 = vadd.f32 0.0, %v703
        %v705 = vpop.f32.mrb[0].mxu0
        %706 = vmatprep.mubr.bf16.mxu0 %v440
        %707 = vmatmul.mubr.bf16.gmra.mrb[0].mxu0 %v439
        %v708 = vpop.f32.mrb[0].mxu0
        %v709 = vadd.f32 0.0, %v708
        %v710 = vpop.f32.mrb[0].mxu0
        %v711 = vpop.f32.mrb[0].mxu0
        %v712 = vadd.f32 0.0, %v711
        %v713 = vpop.f32.mrb[0].mxu0
        %714 = vmatprep.mubr.bf16.mxu0 %v444
        %715 = vmatmul.mubr.bf16.gmra.mrb[0].mxu0 %v443
        %v716 = vpop.f32.mrb[0].mxu0
        %v717 = vadd.f32 0.0, %v716
        %v718 = vpop.f32.mrb[0].mxu0
        %v719 = vpop.f32.mrb[0].mxu0
        %v720 = vadd.f32 0.0, %v719
        %v721 = vpop.f32.mrb[0].mxu0
        %722 = vmatprep.mubr.bf16.mxu0 %v448
        %723 = vmatmul.mubr.bf16.gmra.mrb[0].mxu0 %v447
        %v724 = vpop.f32.mrb[0].mxu0
        %v725 = vadd.f32 0.0, %v724
        %v726 = vpop.f32.mrb[0].mxu0
        %v727 = vpop.f32.mrb[0].mxu0
        %v728 = vadd.f32 0.0, %v727
        %v729 = vpop.f32.mrb[0].mxu0
        %730 = vmatprep.mubr.bf16.mxu0 %v452
        %731 = vmatmul.mubr.bf16.gmra.mrb[0].mxu0 %v451
        %v732 = vpop.f32.mrb[0].mxu0
        %v733 = vadd.f32 0.0, %v732
        %v734 = vpop.f32.mrb[0].mxu0
        %v735 = vpop.f32.mrb[0].mxu0
        %v736 = vadd.f32 0.0, %v735
        %v737 = vpop.f32.mrb[0].mxu0
        %738 = vmatprep.mubr.bf16.mxu0 %v456
        %739 = vmatmul.mubr.bf16.gmra.mrb[0].mxu0 %v455
        %v740 = vpop.f32.mrb[0].mxu0
        %v741 = vadd.f32 0.0, %v740
        %v742 = vpop.f32.mrb[0].mxu0
        %v743 = vpop.f32.mrb[0].mxu0
        %v744 = vadd.f32 0.0, %v743
        %v745 = vpop.f32.mrb[0].mxu0
        %746 = vmatprep.mubr.bf16.mxu0 %v460
        %747 = vmatmul.mubr.bf16.gmra.mrb[0].mxu0 %v459
        %v748 = vpop.f32.mrb[0].mxu0
        %v749 = vadd.f32 0.0, %v748
        %v750 = vpop.f32.mrb[0].mxu0
        %v751 = vpop.f32.mrb[0].mxu0
        %v752 = vadd.f32 0.0, %v751
        %v753 = vpop.f32.mrb[0].mxu0
        %754 = vmatprep.mubr.bf16.mxu0 %v464
        %755 = vmatmul.mubr.bf16.gmra.mrb[0].mxu0 %v463
        %v756 = vpop.f32.mrb[0].mxu0
        %v757 = vadd.f32 0.0, %v756
        %v758 = vpop.f32.mrb[0].mxu0
        %v759 = vpop.f32.mrb[0].mxu0
        %v760 = vadd.f32 0.0, %v759
        %v761 = vpop.f32.mrb[0].mxu0
        %762 = vdwg.mxu0
        %763 = vmatprep.subr.bf16.mxu0 0
        %764 = vmatpush1.bf16.msra.mxu0 %v607
        %765 = vmatprep.subr.bf16.mxu0 0
        %766 = vmatpush1.bf16.msra.mxu0 %v608
        %767 = vmatprep.subr.bf16.mxu0 0
        %768 = vmatpush1.bf16.msra.mxu0 %v609
        %769 = vmatprep.subr.bf16.mxu0 0
        %770 = vmatpush1.bf16.msra.mxu0 %v610
        %771 = vmatprep.subr.bf16.mxu0 0
        %772 = vmatpush1.bf16.msra.mxu0 %v611
        %773 = vmatprep.subr.bf16.mxu0 0
        %774 = vmatpush1.bf16.msra.mxu0 %v612
        %775 = vmatprep.subr.bf16.mxu0 0
        %776 = vmatpush1.bf16.msra.mxu0 %v613
        %777 = vmatprep.subr.bf16.mxu0 0
        %778 = vmatpush1.bf16.msra.mxu0 %v614
        %779 = vmatprep.subr.bf16.mxu0 0
        %780 = vmatpush1.bf16.msra.mxu0 %v615
        %781 = vmatprep.subr.bf16.mxu0 0
        %782 = vmatpush1.bf16.msra.mxu0 0
        %783 = vmatprep.subr.bf16.mxu0 0
        %784 = vmatpush1.bf16.msra.mxu0 0
        %785 = vmatprep.subr.bf16.mxu0 0
        %786 = vmatpush1.bf16.msra.mxu0 0
        %787 = vmatprep.subr.bf16.mxu0 0
        %788 = vmatpush1.bf16.msra.mxu0 0
        %789 = vmatprep.subr.bf16.mxu0 0
        %790 = vmatpush1.bf16.msra.mxu0 0
        %791 = vmatprep.subr.bf16.mxu0 0
        %792 = vmatpush1.bf16.msra.mxu0 0
        %793 = vmatprep.subr.bf16.mxu0 0
        %794 = vmatpush1.bf16.msra.mxu0 0
        %795 = vmatprep.mubr.bf16.mxu0 %v643
        %796 = vmatmul.mubr.bf16.gmra.mrb[0].mxu0 %v437
        %v797 = vpop.f32.mrb[0].mxu0
        %v798 = vadd.f32 %v701, %v797
        %v799 = vpop.f32.mrb[0].mxu0
        %v800 = vpop.f32.mrb[0].mxu0
        %v801 = vadd.f32 %v704, %v800
        %v802 = vpop.f32.mrb[0].mxu0
        %803 = vmatprep.mubr.bf16.mxu0 %v646
        %804 = vmatmul.mubr.bf16.gmra.mrb[0].mxu0 %v441
        %v805 = vpop.f32.mrb[0].mxu0
        %v806 = vadd.f32 %v709, %v805
        %v807 = vpop.f32.mrb[0].mxu0
        %v808 = vpop.f32.mrb[0].mxu0
        %v809 = vadd.f32 %v712, %v808
        %v810 = vpop.f32.mrb[0].mxu0
        %811 = vmatprep.mubr.bf16.mxu0 %v649
        %812 = vmatmul.mubr.bf16.gmra.mrb[0].mxu0 %v445
        %v813 = vpop.f32.mrb[0].mxu0
        %v814 = vadd.f32 %v717, %v813
        %v815 = vpop.f32.mrb[0].mxu0
        %v816 = vpop.f32.mrb[0].mxu0
        %v817 = vadd.f32 %v720, %v816
        %v818 = vpop.f32.mrb[0].mxu0
        %819 = vmatprep.mubr.bf16.mxu0 %v652
        %820 = vmatmul.mubr.bf16.gmra.mrb[0].mxu0 %v449
        %v821 = vpop.f32.mrb[0].mxu0
        %v822 = vadd.f32 %v725, %v821
        %v823 = vpop.f32.mrb[0].mxu0
        %v824 = vpop.f32.mrb[0].mxu0
        %v825 = vadd.f32 %v728, %v824
        %v826 = vpop.f32.mrb[0].mxu0
        %827 = vmatprep.mubr.bf16.mxu0 %v655
        %828 = vmatmul.mubr.bf16.gmra.mrb[0].mxu0 %v453
        %v829 = vpop.f32.mrb[0].mxu0
        %v830 = vadd.f32 %v733, %v829
        %v831 = vpop.f32.mrb[0].mxu0
        %v832 = vpop.f32.mrb[0].mxu0
        %v833 = vadd.f32 %v736, %v832
        %v834 = vpop.f32.mrb[0].mxu0
        %835 = vmatprep.mubr.bf16.mxu0 %v658
        %836 = vmatmul.mubr.bf16.gmra.mrb[0].mxu0 %v457
        %v837 = vpop.f32.mrb[0].mxu0
        %v838 = vadd.f32 %v741, %v837
        %v839 = vpop.f32.mrb[0].mxu0
        %v840 = vpop.f32.mrb[0].mxu0
        %v841 = vadd.f32 %v744, %v840
        %v842 = vpop.f32.mrb[0].mxu0
        %843 = vmatprep.mubr.bf16.mxu0 %v661
        %844 = vmatmul.mubr.bf16.gmra.mrb[0].mxu0 %v461
        %v845 = vpop.f32.mrb[0].mxu0
        %v846 = vadd.f32 %v749, %v845
        %v847 = vpop.f32.mrb[0].mxu0
        %v848 = vpop.f32.mrb[0].mxu0
        %v849 = vadd.f32 %v752, %v848
        %v850 = vpop.f32.mrb[0].mxu0
        %851 = vmatprep.mubr.bf16.mxu0 %v664
        %852 = vmatmul.mubr.bf16.gmra.mrb[0].mxu0 %v465
        %v853 = vpop.f32.mrb[0].mxu0
        %v854 = vadd.f32 %v757, %v853
        %v855 = vpop.f32.mrb[0].mxu0
        %v856 = vpop.f32.mrb[0].mxu0
        %v857 = vadd.f32 %v760, %v856
        %v858 = vpop.f32.mrb[0].mxu0
        %859 = vdwg.mxu0
        %v860 = vmax.f32 %v798, %v814
        %v861 = vmax.f32 %v801, %v817
        %v862 = vmax.f32 %v806, %v822
        %v863 = vmax.f32 %v809, %v825
        %v864 = vmax.f32 %v860, %v830
        %v865 = vmax.f32 %v861, %v833
        %v866 = vmax.f32 %v862, %v838
        %v867 = vmax.f32 %v863, %v841
        %v868 = vmax.f32 %v864, %v846
        %v869 = vmax.f32 %v865, %v849
        %v870 = vmax.f32 %v866, %v854
        %v871 = vmax.f32 %v867, %v857
        %v872 = vld [vmem:[%s2] sm:$0x1]
        %v874 = vlaneseq
        %v875 = vshrl.u32 %v874, 7
        %v876 = vsub.s32 0, %v875
        %v877 = vrot.slane %v872, %v876
        %v879 = vadd.f32 %v868, %v877
        %v880 = vadd.f32 %v869, %v877
        %v881 = vadd.f32 %v870, %v877
        %v882 = vadd.f32 %v871, %v877
        %v883 = vmax.f32 %v879, 0.0
        %v884 = vmax.f32 %v880, 0.0
        %v885 = vmax.f32 %v881, 0.0
        %v886 = vmax.f32 %v882, 0.0
        %v887 = vpack.c.bf16 %v884, %v883
        %v888 = vpack.c.bf16 %v886, %v885
        %v891 = vunpack.c.l.b16 %v887
        %v892 = vunpack.c.h.b16 %v887
        %v893 = vunpack.c.l.b16 %v888
        %v894 = vunpack.c.h.b16 %v888
        %v895 = vpack.c.b16 %v891, %v891
        %v896 = vpack.c.b16 %v892, %v892
        %v897 = vpack.c.b16 %v893, %v893
        %v898 = vpack.c.b16 %v894, %v894
        %903 = vst [vmem:[%s254] sm:$0xf] %v895
        %904 = vst [vmem:[%s254 + $0x4] sm:$0xf] %v896
        %905 = vst [vmem:[%s254 + $0x8] sm:$0xf] %v897
        %906 = vst [vmem:[%s254 + $0xc] sm:$0xf] %v898
        %s907 = smul.u32 4, %s14
        %p908 = scmp.lt.s32.totalorder %s907, 7
        %s909 = scalar_select %p908, %s907, 7
        %s910 = smul.addr %s909, 4
        %s911 = scalar_lea.vmem %s3, %s910
        // Predicated region
        $region56: #{lenet_forward.4} parent=50 // pred_check
          %p912 = pneg %p100
        $region57: #{lenet_forward.4} parent=50 // pred_check_branch
          %914 = sbr.rel (%p912) target = $region59
        $region58: #{lenet_forward.4} parent=50 // pred_region
          %s915 = smul.u32 4, %s14
        $region59: #{lenet_forward.4} parent=50 // pred_fallthru
          _
      $region51: #{lenet_forward.4} parent=5 // pred_fallthru
        _
      %p916 = scmp.le.s32.totalorder 2, %s9
      // Predicated region
      $region60: #{lenet_forward.4} parent=5 // pred_check
        %p917 = pneg %p916
      $region61: #{lenet_forward.4} parent=5 // pred_check_branch
        %919 = sbr.rel (%p917) target = $region63
      $region62: #{lenet_forward.4} parent=5 // pred_region
        %s920 = ssub.s32 %s9, 2
        // Predicated region
        $region64: #{lenet_forward.4} parent=62 // pred_check
          %p921 = pneg %p106
        $region65: #{lenet_forward.4} parent=62 // pred_check_branch
          %923 = sbr.rel (%p921) target = $region67
        $region66: #{lenet_forward.4} parent=62 // pred_region
          %s924 = smul.u32 4, %s15
          %p925 = scmp.lt.s32.totalorder %s924, 7
          %s926 = scalar_select %p925, %s924, 7
          %s927 = smul.addr %s926, 4
          %s928 = scalar_lea.vmem %s3, %s927
        $region67: #{lenet_forward.4} parent=62 // pred_fallthru
          _
      $region63: #{lenet_forward.4} parent=5 // pred_fallthru
        _
    $region6: #{lenet_forward.4} parent=1 // loop_footer
      %s13 = sadd.s32 1, %s9
    $region7: #{lenet_forward.4} parent=1 // loop_footer_branch
      %8 = sbr.rel target = $region3
    $region8: #{lenet_forward.4} parent=1 // loop_exit
      _

// kernel: lenet_forward.5
$region0: #{lenet_forward.5}
  #allocation0 [shape = 'u32[]', space=smem, size = 0x4, offset = 0x4, fixed_abs, tag = 'smem constant byte address 0x4 - core index']
  #allocation1 [shape = 'u32[144,128]{1,0:T(1,128)}', space=vmem, size = 0x12000, scoped, tag = 'internal scratch']
  %s0 = inlined_call_operand.vmem [shape: bf16[16,3200], index: 0, kind: input, shape index: {}]
  %s1 = inlined_call_operand.vmem [shape: bf16[3200,128], index: 1, kind: input, shape index: {}]
  %s2 = inlined_call_operand.vmem [shape: f32[1,128], index: 2, kind: input, shape index: {}]
  %s3 = inlined_call_operand.vmem [shape: bf16[128,128], index: 3, kind: input, shape index: {}]
  %s4 = inlined_call_operand.vmem [shape: f32[1,128], index: 4, kind: input, shape index: {}]
  %s5 = inlined_call_operand.vmem [shape: bf16[128,128], index: 5, kind: input, shape index: {}]
  %s6 = inlined_call_operand.vmem [shape: f32[1,128], index: 6, kind: input, shape index: {}]
  %s7 = inlined_call_operand.vmem [shape: f32[16,128], index: 7, kind: output, shape index: {}]
  %s8 = sld [smem:[#allocation0]]
  $region38: #{lenet_forward.5} parent=0
    _
  %s10 = ssub.s32 1, %s8
  %s11 = scalar_select 0, %s10, %s8
  // Predicated region
  $region2: #{lenet_forward.5} parent=0 // pred_check
    _
  $region3: #{lenet_forward.5} parent=0 // pred_check_branch
    %13 = sbr.rel (0) target = $region5
  $region4: #{lenet_forward.5} parent=0 // pred_region
    _
  $region5: #{lenet_forward.5} parent=0 // pred_fallthru
    _
  // Predicated region
  $region6: #{lenet_forward.5} parent=0 // pred_check
    _
  $region7: #{lenet_forward.5} parent=0 // pred_check_branch
    %15 = sbr.rel (0) target = $region9
  $region8: #{lenet_forward.5} parent=0 // pred_region
    _
  $region9: #{lenet_forward.5} parent=0 // pred_fallthru
    _
  // Predicated region
  $region10: #{lenet_forward.5} parent=0 // pred_check
    _
  $region11: #{lenet_forward.5} parent=0 // pred_check_branch
    %17 = sbr.rel (0) target = $region13
  $region12: #{lenet_forward.5} parent=0 // pred_region
    _
  $region13: #{lenet_forward.5} parent=0 // pred_fallthru
    _
  // Predicated region
  $region14: #{lenet_forward.5} parent=0 // pred_check
    _
  $region15: #{lenet_forward.5} parent=0 // pred_check_branch
    %19 = sbr.rel (0) target = $region17
  $region16: #{lenet_forward.5} parent=0 // pred_region
    _
  $region17: #{lenet_forward.5} parent=0 // pred_fallthru
    _
  // Predicated region
  $region18: #{lenet_forward.5} parent=0 // pred_check
    _
  $region19: #{lenet_forward.5} parent=0 // pred_check_branch
    %21 = sbr.rel (0) target = $region21
  $region20: #{lenet_forward.5} parent=0 // pred_region
    _
  $region21: #{lenet_forward.5} parent=0 // pred_fallthru
    _
  // Predicated region
  $region22: #{lenet_forward.5} parent=0 // pred_check
    _
  $region23: #{lenet_forward.5} parent=0 // pred_check_branch
    %23 = sbr.rel (0) target = $region25
  $region24: #{lenet_forward.5} parent=0 // pred_region
    _
  $region25: #{lenet_forward.5} parent=0 // pred_fallthru
    _
  // Predicated region
  $region26: #{lenet_forward.5} parent=0 // pred_check
    _
  $region27: #{lenet_forward.5} parent=0 // pred_check_branch
    %25 = sbr.rel (0) target = $region29
  $region28: #{lenet_forward.5} parent=0 // pred_region
    _
  $region29: #{lenet_forward.5} parent=0 // pred_fallthru
    _
  %v27 = vld [vmem:[%s0] sm:$0xff]
  %v28 = vld [vmem:[%s0 + $0x8] sm:$0xff]
  %v29 = vld [vmem:[%s0 + $0x10] sm:$0xff]
  %v30 = vld [vmem:[%s0 + $0x18] sm:$0xff]
  %v31 = vld [vmem:[%s0 + $0x20] sm:$0xff]
  %v32 = vld [vmem:[%s0 + $0x28] sm:$0xff]
  %v33 = vld [vmem:[%s0 + $0x30] sm:$0xff]
  %v34 = vld [vmem:[%s0 + $0x38] sm:$0xff]
  %v35 = vld [vmem:[%s0 + $0x40] sm:$0xff]
  %v36 = vld [vmem:[%s0 + $0x48] sm:$0xff]
  %v37 = vld [vmem:[%s0 + $0x50] sm:$0xff]
  %v38 = vld [vmem:[%s0 + $0x58] sm:$0xff]
  %v39 = vld [vmem:[%s0 + $0x60] sm:$0xf]
  %v40 = vld [vmem:[%s0 + $0x64] sm:$0xff]
  %v41 = vld [vmem:[%s0 + $0x6c] sm:$0xff]
  %v42 = vld [vmem:[%s0 + $0x74] sm:$0xff]
  %v43 = vld [vmem:[%s0 + $0x7c] sm:$0xff]
  %v44 = vld [vmem:[%s0 + $0x84] sm:$0xff]
  %v45 = vld [vmem:[%s0 + $0x8c] sm:$0xff]
  %v46 = vld [vmem:[%s0 + $0x94] sm:$0xff]
  %v47 = vld [vmem:[%s0 + $0x9c] sm:$0xff]
  %v48 = vld [vmem:[%s0 + $0xa4] sm:$0xff]
  %v49 = vld [vmem:[%s0 + $0xac] sm:$0xff]
  %v50 = vld [vmem:[%s0 + $0xb4] sm:$0xff]
  %v51 = vld [vmem:[%s0 + $0xbc] sm:$0xff]
  %v52 = vld [vmem:[%s0 + $0xc4] sm:$0xf]
  %v53 = vld [vmem:[%s1] sm:$0xf]
  %v54 = vld [vmem:[%s1 + $0x4] sm:$0xf]
  %v55 = vld [vmem:[%s1 + $0x8] sm:$0xf]
  %v56 = vld [vmem:[%s1 + $0xc] sm:$0xf]
  %v57 = vld [vmem:[%s1 + $0x10] sm:$0xf]
  %v58 = vld [vmem:[%s1 + $0x14] sm:$0xf]
  %v59 = vld [vmem:[%s1 + $0x18] sm:$0xf]
  %v60 = vld [vmem:[%s1 + $0x1c] sm:$0xf]
  %v61 = vld [vmem:[%s1 + $0x20] sm:$0xf]
  %v62 = vld [vmem:[%s1 + $0x24] sm:$0xf]
  %v63 = vld [vmem:[%s1 + $0x28] sm:$0xf]
  %v64 = vld [vmem:[%s1 + $0x2c] sm:$0xf]
  %v65 = vld [vmem:[%s1 + $0x30] sm:$0xf]
  %v66 = vld [vmem:[%s1 + $0x34] sm:$0xf]
  %v67 = vld [vmem:[%s1 + $0x38] sm:$0xf]
  %v68 = vld [vmem:[%s1 + $0x3c] sm:$0xf]
  %v69 = vld [vmem:[%s1 + $0x40] sm:$0xf]
  %v70 = vld [vmem:[%s1 + $0x44] sm:$0xf]
  %v71 = vld [vmem:[%s1 + $0x48] sm:$0xf]
  %v72 = vld [vmem:[%s1 + $0x4c] sm:$0xf]
  %v73 = vld [vmem:[%s1 + $0x50] sm:$0xf]
  %v74 = vld [vmem:[%s1 + $0x54] sm:$0xf]
  %v75 = vld [vmem:[%s1 + $0x58] sm:$0xf]
  %v76 = vld [vmem:[%s1 + $0x5c] sm:$0xf]
  %v77 = vld [vmem:[%s1 + $0x60] sm:$0xf]
  %v78 = vld [vmem:[%s1 + $0x64] sm:$0xf]
  %v79 = vld [vmem:[%s1 + $0x68] sm:$0xf]
  %v80 = vld [vmem:[%s1 + $0x6c] sm:$0xf]
  %v81 = vld [vmem:[%s1 + $0x70] sm:$0xf]
  %v82 = vld [vmem:[%s1 + $0x74] sm:$0xf]
  %v83 = vld [vmem:[%s1 + $0x78] sm:$0xf]
  %v84 = vld [vmem:[%s1 + $0x7c] sm:$0xf]
  %v85 = vld [vmem:[%s1 + $0x80] sm:$0xf]
  %v86 = vld [vmem:[%s1 + $0x84] sm:$0xf]
  %v87 = vld [vmem:[%s1 + $0x88] sm:$0xf]
  %v88 = vld [vmem:[%s1 + $0x8c] sm:$0xf]
  %v89 = vld [vmem:[%s1 + $0x90] sm:$0xf]
  %v90 = vld [vmem:[%s1 + $0x94] sm:$0xf]
  %v91 = vld [vmem:[%s1 + $0x98] sm:$0xf]
  %v92 = vld [vmem:[%s1 + $0x9c] sm:$0xf]
  %v93 = vld [vmem:[%s1 + $0xa0] sm:$0xf]
  %v94 = vld [vmem:[%s1 + $0xa4] sm:$0xf]
  %v95 = vld [vmem:[%s1 + $0xa8] sm:$0xf]
  %v96 = vld [vmem:[%s1 + $0xac] sm:$0xf]
  %v97 = vld [vmem:[%s1 + $0xb0] sm:$0xf]
  %v98 = vld [vmem:[%s1 + $0xb4] sm:$0xf]
  %v99 = vld [vmem:[%s1 + $0xb8] sm:$0xf]
  %v100 = vld [vmem:[%s1 + $0xbc] sm:$0xf]
  %v101 = vld [vmem:[%s1 + $0xc0] sm:$0xf]
  %v102 = vld [vmem:[%s1 + $0xc4] sm:$0xf]
  %v103 = vld [vmem:[%s1 + $0xc8] sm:$0xf]
  %v104 = vld [vmem:[%s1 + $0xcc] sm:$0xf]
  %v105 = vld [vmem:[%s1 + $0xd0] sm:$0xf]
  %v106 = vld [vmem:[%s1 + $0xd4] sm:$0xf]
  %v107 = vld [vmem:[%s1 + $0xd8] sm:$0xf]
  %v108 = vld [vmem:[%s1 + $0xdc] sm:$0xf]
  %v109 = vld [vmem:[%s1 + $0xe0] sm:$0xf]
  %v110 = vld [vmem:[%s1 + $0xe4] sm:$0xf]
  %v111 = vld [vmem:[%s1 + $0xe8] sm:$0xf]
  %v112 = vld [vmem:[%s1 + $0xec] sm:$0xf]
  %v113 = vld [vmem:[%s1 + $0xf0] sm:$0xf]
  %v114 = vld [vmem:[%s1 + $0xf4] sm:$0xf]
  %v115 = vld [vmem:[%s1 + $0xf8] sm:$0xf]
  %v116 = vld [vmem:[%s1 + $0xfc] sm:$0xf]
  %v117 = vld [vmem:[%s1 + $0x100] sm:$0xf]
  %v118 = vld [vmem:[%s1 + $0x104] sm:$0xf]
  %v119 = vld [vmem:[%s1 + $0x108] sm:$0xf]
  %v120 = vld [vmem:[%s1 + $0x10c] sm:$0xf]
  %v121 = vld [vmem:[%s1 + $0x110] sm:$0xf]
  %v122 = vld [vmem:[%s1 + $0x114] sm:$0xf]
  %v123 = vld [vmem:[%s1 + $0x118] sm:$0xf]
  %v124 = vld [vmem:[%s1 + $0x11c] sm:$0xf]
  %v125 = vld [vmem:[%s1 + $0x120] sm:$0xf]
  %v126 = vld [vmem:[%s1 + $0x124] sm:$0xf]
  %v127 = vld [vmem:[%s1 + $0x128] sm:$0xf]
  %v128 = vld [vmem:[%s1 + $0x12c] sm:$0xf]
  %v129 = vld [vmem:[%s1 + $0x130] sm:$0xf]
  %v130 = vld [vmem:[%s1 + $0x134] sm:$0xf]
  %v131 = vld [vmem:[%s1 + $0x138] sm:$0xf]
  %v132 = vld [vmem:[%s1 + $0x13c] sm:$0xf]
  %v133 = vld [vmem:[%s1 + $0x140] sm:$0xf]
  %v134 = vld [vmem:[%s1 + $0x144] sm:$0xf]
  %v135 = vld [vmem:[%s1 + $0x148] sm:$0xf]
  %v136 = vld [vmem:[%s1 + $0x14c] sm:$0xf]
  %v137 = vld [vmem:[%s1 + $0x150] sm:$0xf]
  %v138 = vld [vmem:[%s1 + $0x154] sm:$0xf]
  %v139 = vld [vmem:[%s1 + $0x158] sm:$0xf]
  %v140 = vld [vmem:[%s1 + $0x15c] sm:$0xf]
  %v141 = vld [vmem:[%s1 + $0x160] sm:$0xf]
  %v142 = vld [vmem:[%s1 + $0x164] sm:$0xf]
  %v143 = vld [vmem:[%s1 + $0x168] sm:$0xf]
  %v144 = vld [vmem:[%s1 + $0x16c] sm:$0xf]
  %v145 = vld [vmem:[%s1 + $0x170] sm:$0xf]
  %v146 = vld [vmem:[%s1 + $0x174] sm:$0xf]
  %v147 = vld [vmem:[%s1 + $0x178] sm:$0xf]
  %v148 = vld [vmem:[%s1 + $0x17c] sm:$0xf]
  %v149 = vld [vmem:[%s1 + $0x180] sm:$0xf]
  %v150 = vld [vmem:[%s1 + $0x184] sm:$0xf]
  %v151 = vld [vmem:[%s1 + $0x188] sm:$0xf]
  %v152 = vld [vmem:[%s1 + $0x18c] sm:$0xf]
  %v153 = vld [vmem:[%s1 + $0x190] sm:$0xf]
  %v154 = vld [vmem:[%s1 + $0x194] sm:$0xf]
  %v155 = vld [vmem:[%s1 + $0x198] sm:$0xf]
  %v156 = vld [vmem:[%s1 + $0x19c] sm:$0xf]
  %v157 = vld [vmem:[%s1 + $0x1a0] sm:$0xf]
  %v158 = vld [vmem:[%s1 + $0x1a4] sm:$0xf]
  %v159 = vld [vmem:[%s1 + $0x1a8] sm:$0xf]
  %v160 = vld [vmem:[%s1 + $0x1ac] sm:$0xf]
  %v161 = vld [vmem:[%s1 + $0x1b0] sm:$0xf]
  %v162 = vld [vmem:[%s1 + $0x1b4] sm:$0xf]
  %v163 = vld [vmem:[%s1 + $0x1b8] sm:$0xf]
  %v164 = vld [vmem:[%s1 + $0x1bc] sm:$0xf]
  %v165 = vld [vmem:[%s1 + $0x1c0] sm:$0xf]
  %v166 = vld [vmem:[%s1 + $0x1c4] sm:$0xf]
  %v167 = vld [vmem:[%s1 + $0x1c8] sm:$0xf]
  %v168 = vld [vmem:[%s1 + $0x1cc] sm:$0xf]
  %v169 = vld [vmem:[%s1 + $0x1d0] sm:$0xf]
  %v170 = vld [vmem:[%s1 + $0x1d4] sm:$0xf]
  %v171 = vld [vmem:[%s1 + $0x1d8] sm:$0xf]
  %v172 = vld [vmem:[%s1 + $0x1dc] sm:$0xf]
  %v173 = vld [vmem:[%s1 + $0x1e0] sm:$0xf]
  %v174 = vld [vmem:[%s1 + $0x1e4] sm:$0xf]
  %v175 = vld [vmem:[%s1 + $0x1e8] sm:$0xf]
  %v176 = vld [vmem:[%s1 + $0x1ec] sm:$0xf]
  %v177 = vld [vmem:[%s1 + $0x1f0] sm:$0xf]
  %v178 = vld [vmem:[%s1 + $0x1f4] sm:$0xf]
  %v179 = vld [vmem:[%s1 + $0x1f8] sm:$0xf]
  %v180 = vld [vmem:[%s1 + $0x1fc] sm:$0xf]
  %v181 = vld [vmem:[%s1 + $0x200] sm:$0xf]
  %v182 = vld [vmem:[%s1 + $0x204] sm:$0xf]
  %v183 = vld [vmem:[%s1 + $0x208] sm:$0xf]
  %v184 = vld [vmem:[%s1 + $0x20c] sm:$0xf]
  %v185 = vld [vmem:[%s1 + $0x210] sm:$0xf]
  %v186 = vld [vmem:[%s1 + $0x214] sm:$0xf]
  %v187 = vld [vmem:[%s1 + $0x218] sm:$0xf]
  %v188 = vld [vmem:[%s1 + $0x21c] sm:$0xf]
  %v189 = vld [vmem:[%s1 + $0x220] sm:$0xf]
  %v190 = vld [vmem:[%s1 + $0x224] sm:$0xf]
  %v191 = vld [vmem:[%s1 + $0x228] sm:$0xf]
  %v192 = vld [vmem:[%s1 + $0x22c] sm:$0xf]
  %v193 = vld [vmem:[%s1 + $0x230] sm:$0xf]
  %v194 = vld [vmem:[%s1 + $0x234] sm:$0xf]
  %v195 = vld [vmem:[%s1 + $0x238] sm:$0xf]
  %v196 = vld [vmem:[%s1 + $0x23c] sm:$0xf]
  %v197 = vld [vmem:[%s1 + $0x240] sm:$0xf]
  %v198 = vld [vmem:[%s1 + $0x244] sm:$0xf]
  %v199 = vld [vmem:[%s1 + $0x248] sm:$0xf]
  %v200 = vld [vmem:[%s1 + $0x24c] sm:$0xf]
  %v201 = vld [vmem:[%s1 + $0x250] sm:$0xf]
  %v202 = vld [vmem:[%s1 + $0x254] sm:$0xf]
  %v203 = vld [vmem:[%s1 + $0x258] sm:$0xf]
  %v204 = vld [vmem:[%s1 + $0x25c] sm:$0xf]
  %v205 = vld [vmem:[%s1 + $0x260] sm:$0xf]
  %v206 = vld [vmem:[%s1 + $0x264] sm:$0xf]
  %v207 = vld [vmem:[%s1 + $0x268] sm:$0xf]
  %v208 = vld [vmem:[%s1 + $0x26c] sm:$0xf]
  %v209 = vld [vmem:[%s1 + $0x270] sm:$0xf]
  %v210 = vld [vmem:[%s1 + $0x274] sm:$0xf]
  %v211 = vld [vmem:[%s1 + $0x278] sm:$0xf]
  %v212 = vld [vmem:[%s1 + $0x27c] sm:$0xf]
  %v213 = vld [vmem:[%s1 + $0x280] sm:$0xf]
  %v214 = vld [vmem:[%s1 + $0x284] sm:$0xf]
  %v215 = vld [vmem:[%s1 + $0x288] sm:$0xf]
  %v216 = vld [vmem:[%s1 + $0x28c] sm:$0xf]
  %v217 = vld [vmem:[%s1 + $0x290] sm:$0xf]
  %v218 = vld [vmem:[%s1 + $0x294] sm:$0xf]
  %v219 = vld [vmem:[%s1 + $0x298] sm:$0xf]
  %v220 = vld [vmem:[%s1 + $0x29c] sm:$0xf]
  %v221 = vld [vmem:[%s1 + $0x2a0] sm:$0xf]
  %v222 = vld [vmem:[%s1 + $0x2a4] sm:$0xf]
  %v223 = vld [vmem:[%s1 + $0x2a8] sm:$0xf]
  %v224 = vld [vmem:[%s1 + $0x2ac] sm:$0xf]
  %v225 = vld [vmem:[%s1 + $0x2b0] sm:$0xf]
  %v226 = vld [vmem:[%s1 + $0x2b4] sm:$0xf]
  %v227 = vld [vmem:[%s1 + $0x2b8] sm:$0xf]
  %v228 = vld [vmem:[%s1 + $0x2bc] sm:$0xf]
  %v229 = vld [vmem:[%s1 + $0x2c0] sm:$0xf]
  %v230 = vld [vmem:[%s1 + $0x2c4] sm:$0xf]
  %v231 = vld [vmem:[%s1 + $0x2c8] sm:$0xf]
  %v232 = vld [vmem:[%s1 + $0x2cc] sm:$0xf]
  %v233 = vld [vmem:[%s1 + $0x2d0] sm:$0xf]
  %v234 = vld [vmem:[%s1 + $0x2d4] sm:$0xf]
  %v235 = vld [vmem:[%s1 + $0x2d8] sm:$0xf]
  %v236 = vld [vmem:[%s1 + $0x2dc] sm:$0xf]
  %v237 = vld [vmem:[%s1 + $0x2e0] sm:$0xf]
  %v238 = vld [vmem:[%s1 + $0x2e4] sm:$0xf]
  %v239 = vld [vmem:[%s1 + $0x2e8] sm:$0xf]
  %v240 = vld [vmem:[%s1 + $0x2ec] sm:$0xf]
  %v241 = vld [vmem:[%s1 + $0x2f0] sm:$0xf]
  %v242 = vld [vmem:[%s1 + $0x2f4] sm:$0xf]
  %v243 = vld [vmem:[%s1 + $0x2f8] sm:$0xf]
  %v244 = vld [vmem:[%s1 + $0x2fc] sm:$0xf]
  %v245 = vld [vmem:[%s1 + $0x300] sm:$0xf]
  %v246 = vld [vmem:[%s1 + $0x304] sm:$0xf]
  %v247 = vld [vmem:[%s1 + $0x308] sm:$0xf]
  %v248 = vld [vmem:[%s1 + $0x30c] sm:$0xf]
  %v249 = vld [vmem:[%s1 + $0x310] sm:$0xf]
  %v250 = vld [vmem:[%s1 + $0x314] sm:$0xf]
  %v251 = vld [vmem:[%s1 + $0x318] sm:$0xf]
  %v252 = vld [vmem:[%s1 + $0x31c] sm:$0xf]
  %v253 = vld [vmem:[%s1 + $0x320] sm:$0xf]
  %v254 = vld [vmem:[%s1 + $0x324] sm:$0xf]
  %v255 = vld [vmem:[%s1 + $0x328] sm:$0xf]
  %v256 = vld [vmem:[%s1 + $0x32c] sm:$0xf]
  %v257 = vld [vmem:[%s1 + $0x330] sm:$0xf]
  %v258 = vld [vmem:[%s1 + $0x334] sm:$0xf]
  %v259 = vld [vmem:[%s1 + $0x338] sm:$0xf]
  %v260 = vld [vmem:[%s1 + $0x33c] sm:$0xf]
  %v261 = vld [vmem:[%s1 + $0x340] sm:$0xf]
  %v262 = vld [vmem:[%s1 + $0x344] sm:$0xf]
  %v263 = vld [vmem:[%s1 + $0x348] sm:$0xf]
  %v264 = vld [vmem:[%s1 + $0x34c] sm:$0xf]
  %v265 = vld [vmem:[%s1 + $0x350] sm:$0xf]
  %v266 = vld [vmem:[%s1 + $0x354] sm:$0xf]
  %v267 = vld [vmem:[%s1 + $0x358] sm:$0xf]
  %v268 = vld [vmem:[%s1 + $0x35c] sm:$0xf]
  %v269 = vld [vmem:[%s1 + $0x360] sm:$0xf]
  %v270 = vld [vmem:[%s1 + $0x364] sm:$0xf]
  %v271 = vld [vmem:[%s1 + $0x368] sm:$0xf]
  %v272 = vld [vmem:[%s1 + $0x36c] sm:$0xf]
  %v273 = vld [vmem:[%s1 + $0x370] sm:$0xf]
  %v274 = vld [vmem:[%s1 + $0x374] sm:$0xf]
  %v275 = vld [vmem:[%s1 + $0x378] sm:$0xf]
  %v276 = vld [vmem:[%s1 + $0x37c] sm:$0xf]
  %v277 = vld [vmem:[%s1 + $0x380] sm:$0xf]
  %v278 = vld [vmem:[%s1 + $0x384] sm:$0xf]
  %v279 = vld [vmem:[%s1 + $0x388] sm:$0xf]
  %v280 = vld [vmem:[%s1 + $0x38c] sm:$0xf]
  %v281 = vld [vmem:[%s1 + $0x390] sm:$0xf]
  %v282 = vld [vmem:[%s1 + $0x394] sm:$0xf]
  %v283 = vld [vmem:[%s1 + $0x398] sm:$0xf]
  %v284 = vld [vmem:[%s1 + $0x39c] sm:$0xf]
  %v285 = vld [vmem:[%s1 + $0x3a0] sm:$0xf]
  %v286 = vld [vmem:[%s1 + $0x3a4] sm:$0xf]
  %v287 = vld [vmem:[%s1 + $0x3a8] sm:$0xf]
  %v288 = vld [vmem:[%s1 + $0x3ac] sm:$0xf]
  %v289 = vld [vmem:[%s1 + $0x3b0] sm:$0xf]
  %v290 = vld [vmem:[%s1 + $0x3b4] sm:$0xf]
  %v291 = vld [vmem:[%s1 + $0x3b8] sm:$0xf]
  %v292 = vld [vmem:[%s1 + $0x3bc] sm:$0xf]
  %v293 = vld [vmem:[%s1 + $0x3c0] sm:$0xf]
  %v294 = vld [vmem:[%s1 + $0x3c4] sm:$0xf]
  %v295 = vld [vmem:[%s1 + $0x3c8] sm:$0xf]
  %v296 = vld [vmem:[%s1 + $0x3cc] sm:$0xf]
  %v297 = vld [vmem:[%s1 + $0x3d0] sm:$0xf]
  %v298 = vld [vmem:[%s1 + $0x3d4] sm:$0xf]
  %v299 = vld [vmem:[%s1 + $0x3d8] sm:$0xf]
  %v300 = vld [vmem:[%s1 + $0x3dc] sm:$0xf]
  %v301 = vld [vmem:[%s1 + $0x3e0] sm:$0xf]
  %v302 = vld [vmem:[%s1 + $0x3e4] sm:$0xf]
  %v303 = vld [vmem:[%s1 + $0x3e8] sm:$0xf]
  %v304 = vld [vmem:[%s1 + $0x3ec] sm:$0xf]
  %v305 = vld [vmem:[%s1 + $0x3f0] sm:$0xf]
  %v306 = vld [vmem:[%s1 + $0x3f4] sm:$0xf]
  %v307 = vld [vmem:[%s1 + $0x3f8] sm:$0xf]
  %v308 = vld [vmem:[%s1 + $0x3fc] sm:$0xf]
  %v309 = vld [vmem:[%s1 + $0x400] sm:$0xf]
  %v310 = vld [vmem:[%s1 + $0x404] sm:$0xf]
  %v311 = vld [vmem:[%s1 + $0x408] sm:$0xf]
  %v312 = vld [vmem:[%s1 + $0x40c] sm:$0xf]
  %v313 = vld [vmem:[%s1 + $0x410] sm:$0xf]
  %v314 = vld [vmem:[%s1 + $0x414] sm:$0xf]
  %v315 = vld [vmem:[%s1 + $0x418] sm:$0xf]
  %v316 = vld [vmem:[%s1 + $0x41c] sm:$0xf]
  %v317 = vld [vmem:[%s1 + $0x420] sm:$0xf]
  %v318 = vld [vmem:[%s1 + $0x424] sm:$0xf]
  %v319 = vld [vmem:[%s1 + $0x428] sm:$0xf]
  %v320 = vld [vmem:[%s1 + $0x42c] sm:$0xf]
  %v321 = vld [vmem:[%s1 + $0x430] sm:$0xf]
  %v322 = vld [vmem:[%s1 + $0x434] sm:$0xf]
  %v323 = vld [vmem:[%s1 + $0x438] sm:$0xf]
  %v324 = vld [vmem:[%s1 + $0x43c] sm:$0xf]
  %v325 = vld [vmem:[%s1 + $0x440] sm:$0xf]
  %v326 = vld [vmem:[%s1 + $0x444] sm:$0xf]
  %v327 = vld [vmem:[%s1 + $0x448] sm:$0xf]
  %v328 = vld [vmem:[%s1 + $0x44c] sm:$0xf]
  %v329 = vld [vmem:[%s1 + $0x450] sm:$0xf]
  %v330 = vld [vmem:[%s1 + $0x454] sm:$0xf]
  %v331 = vld [vmem:[%s1 + $0x458] sm:$0xf]
  %v332 = vld [vmem:[%s1 + $0x45c] sm:$0xf]
  %v333 = vld [vmem:[%s1 + $0x460] sm:$0xf]
  %v334 = vld [vmem:[%s1 + $0x464] sm:$0xf]
  %v335 = vld [vmem:[%s1 + $0x468] sm:$0xf]
  %v336 = vld [vmem:[%s1 + $0x46c] sm:$0xf]
  %v337 = vld [vmem:[%s1 + $0x470] sm:$0xf]
  %v338 = vld [vmem:[%s1 + $0x474] sm:$0xf]
  %v339 = vld [vmem:[%s1 + $0x478] sm:$0xf]
  %v340 = vld [vmem:[%s1 + $0x47c] sm:$0xf]
  %v341 = vld [vmem:[%s1 + $0x480] sm:$0xf]
  %v342 = vld [vmem:[%s1 + $0x484] sm:$0xf]
  %v343 = vld [vmem:[%s1 + $0x488] sm:$0xf]
  %v344 = vld [vmem:[%s1 + $0x48c] sm:$0xf]
  %v345 = vld [vmem:[%s1 + $0x490] sm:$0xf]
  %v346 = vld [vmem:[%s1 + $0x494] sm:$0xf]
  %v347 = vld [vmem:[%s1 + $0x498] sm:$0xf]
  %v348 = vld [vmem:[%s1 + $0x49c] sm:$0xf]
  %v349 = vld [vmem:[%s1 + $0x4a0] sm:$0xf]
  %v350 = vld [vmem:[%s1 + $0x4a4] sm:$0xf]
  %v351 = vld [vmem:[%s1 + $0x4a8] sm:$0xf]
  %v352 = vld [vmem:[%s1 + $0x4ac] sm:$0xf]
  %v353 = vld [vmem:[%s1 + $0x4b0] sm:$0xf]
  %v354 = vld [vmem:[%s1 + $0x4b4] sm:$0xf]
  %v355 = vld [vmem:[%s1 + $0x4b8] sm:$0xf]
  %v356 = vld [vmem:[%s1 + $0x4bc] sm:$0xf]
  %v357 = vld [vmem:[%s1 + $0x4c0] sm:$0xf]
  %v358 = vld [vmem:[%s1 + $0x4c4] sm:$0xf]
  %v359 = vld [vmem:[%s1 + $0x4c8] sm:$0xf]
  %v360 = vld [vmem:[%s1 + $0x4cc] sm:$0xf]
  %v361 = vld [vmem:[%s1 + $0x4d0] sm:$0xf]
  %v362 = vld [vmem:[%s1 + $0x4d4] sm:$0xf]
  %v363 = vld [vmem:[%s1 + $0x4d8] sm:$0xf]
  %v364 = vld [vmem:[%s1 + $0x4dc] sm:$0xf]
  %v365 = vld [vmem:[%s1 + $0x4e0] sm:$0xf]
  %v366 = vld [vmem:[%s1 + $0x4e4] sm:$0xf]
  %v367 = vld [vmem:[%s1 + $0x4e8] sm:$0xf]
  %v368 = vld [vmem:[%s1 + $0x4ec] sm:$0xf]
  %v369 = vld [vmem:[%s1 + $0x4f0] sm:$0xf]
  %v370 = vld [vmem:[%s1 + $0x4f4] sm:$0xf]
  %v371 = vld [vmem:[%s1 + $0x4f8] sm:$0xf]
  %v372 = vld [vmem:[%s1 + $0x4fc] sm:$0xf]
  %v373 = vld [vmem:[%s1 + $0x500] sm:$0xf]
  %v374 = vld [vmem:[%s1 + $0x504] sm:$0xf]
  %v375 = vld [vmem:[%s1 + $0x508] sm:$0xf]
  %v376 = vld [vmem:[%s1 + $0x50c] sm:$0xf]
  %v377 = vld [vmem:[%s1 + $0x510] sm:$0xf]
  %v378 = vld [vmem:[%s1 + $0x514] sm:$0xf]
  %v379 = vld [vmem:[%s1 + $0x518] sm:$0xf]
  %v380 = vld [vmem:[%s1 + $0x51c] sm:$0xf]
  %v381 = vld [vmem:[%s1 + $0x520] sm:$0xf]
  %v382 = vld [vmem:[%s1 + $0x524] sm:$0xf]
  %v383 = vld [vmem:[%s1 + $0x528] sm:$0xf]
  %v384 = vld [vmem:[%s1 + $0x52c] sm:$0xf]
  %v385 = vld [vmem:[%s1 + $0x530] sm:$0xf]
  %v386 = vld [vmem:[%s1 + $0x534] sm:$0xf]
  %v387 = vld [vmem:[%s1 + $0x538] sm:$0xf]
  %v388 = vld [vmem:[%s1 + $0x53c] sm:$0xf]
  %v389 = vld [vmem:[%s1 + $0x540] sm:$0xf]
  %v390 = vld [vmem:[%s1 + $0x544] sm:$0xf]
  %v391 = vld [vmem:[%s1 + $0x548] sm:$0xf]
  %v392 = vld [vmem:[%s1 + $0x54c] sm:$0xf]
  %v393 = vld [vmem:[%s1 + $0x550] sm:$0xf]
  %v394 = vld [vmem:[%s1 + $0x554] sm:$0xf]
  %v395 = vld [vmem:[%s1 + $0x558] sm:$0xf]
  %v396 = vld [vmem:[%s1 + $0x55c] sm:$0xf]
  %v397 = vld [vmem:[%s1 + $0x560] sm:$0xf]
  %v398 = vld [vmem:[%s1 + $0x564] sm:$0xf]
  %v399 = vld [vmem:[%s1 + $0x568] sm:$0xf]
  %v400 = vld [vmem:[%s1 + $0x56c] sm:$0xf]
  %v401 = vld [vmem:[%s1 + $0x570] sm:$0xf]
  %v402 = vld [vmem:[%s1 + $0x574] sm:$0xf]
  %v403 = vld [vmem:[%s1 + $0x578] sm:$0xf]
  %v404 = vld [vmem:[%s1 + $0x57c] sm:$0xf]
  %v405 = vld [vmem:[%s1 + $0x580] sm:$0xf]
  %v406 = vld [vmem:[%s1 + $0x584] sm:$0xf]
  %v407 = vld [vmem:[%s1 + $0x588] sm:$0xf]
  %v408 = vld [vmem:[%s1 + $0x58c] sm:$0xf]
  %v409 = vld [vmem:[%s1 + $0x590] sm:$0xf]
  %v410 = vld [vmem:[%s1 + $0x594] sm:$0xf]
  %v411 = vld [vmem:[%s1 + $0x598] sm:$0xf]
  %v412 = vld [vmem:[%s1 + $0x59c] sm:$0xf]
  %v413 = vld [vmem:[%s1 + $0x5a0] sm:$0xf]
  %v414 = vld [vmem:[%s1 + $0x5a4] sm:$0xf]
  %v415 = vld [vmem:[%s1 + $0x5a8] sm:$0xf]
  %v416 = vld [vmem:[%s1 + $0x5ac] sm:$0xf]
  %v417 = vld [vmem:[%s1 + $0x5b0] sm:$0xf]
  %v418 = vld [vmem:[%s1 + $0x5b4] sm:$0xf]
  %v419 = vld [vmem:[%s1 + $0x5b8] sm:$0xf]
  %v420 = vld [vmem:[%s1 + $0x5bc] sm:$0xf]
  %v421 = vld [vmem:[%s1 + $0x5c0] sm:$0xf]
  %v422 = vld [vmem:[%s1 + $0x5c4] sm:$0xf]
  %v423 = vld [vmem:[%s1 + $0x5c8] sm:$0xf]
  %v424 = vld [vmem:[%s1 + $0x5cc] sm:$0xf]
  %v425 = vld [vmem:[%s1 + $0x5d0] sm:$0xf]
  %v426 = vld [vmem:[%s1 + $0x5d4] sm:$0xf]
  %v427 = vld [vmem:[%s1 + $0x5d8] sm:$0xf]
  %v428 = vld [vmem:[%s1 + $0x5dc] sm:$0xf]
  %v429 = vld [vmem:[%s1 + $0x5e0] sm:$0xf]
  %v430 = vld [vmem:[%s1 + $0x5e4] sm:$0xf]
  %v431 = vld [vmem:[%s1 + $0x5e8] sm:$0xf]
  %v432 = vld [vmem:[%s1 + $0x5ec] sm:$0xf]
  %v433 = vld [vmem:[%s1 + $0x5f0] sm:$0xf]
  %v434 = vld [vmem:[%s1 + $0x5f4] sm:$0xf]
  %v435 = vld [vmem:[%s1 + $0x5f8] sm:$0xf]
  %v436 = vld [vmem:[%s1 + $0x5fc] sm:$0xf]
  %v437 = vld [vmem:[%s1 + $0x600] sm:$0xf]
  %v438 = vld [vmem:[%s1 + $0x604] sm:$0xf]
  %v439 = vld [vmem:[%s1 + $0x608] sm:$0xf]
  %v440 = vld [vmem:[%s1 + $0x60c] sm:$0xf]
  %v441 = vld [vmem:[%s1 + $0x610] sm:$0xf]
  %v442 = vld [vmem:[%s1 + $0x614] sm:$0xf]
  %v443 = vld [vmem:[%s1 + $0x618] sm:$0xf]
  %v444 = vld [vmem:[%s1 + $0x61c] sm:$0xf]
  %v445 = vld [vmem:[%s1 + $0x620] sm:$0xf]
  %v446 = vld [vmem:[%s1 + $0x624] sm:$0xf]
  %v447 = vld [vmem:[%s1 + $0x628] sm:$0xf]
  %v448 = vld [vmem:[%s1 + $0x62c] sm:$0xf]
  %v449 = vld [vmem:[%s1 + $0x630] sm:$0xf]
  %v450 = vld [vmem:[%s1 + $0x634] sm:$0xf]
  %v451 = vld [vmem:[%s1 + $0x638] sm:$0xf]
  %v452 = vld [vmem:[%s1 + $0x63c] sm:$0xf]
  %v453 = vld [vmem:[%s2] sm:$0x1]
  %v455 = vlaneseq
  %v456 = vshrl.u32 %v455, 7
  %v457 = vsub.s32 0, %v456
  %v458 = vrot.slane %v453, %v457
  %v486 = vunpack.c.l.b16 %v27
  %v487 = vunpack.c.h.b16 %v27
  %v488 = vunpack.c.l.b16 %v28
  %v489 = vunpack.c.h.b16 %v28
  %v490 = vunpack.c.l.b16 %v29
  %v491 = vunpack.c.h.b16 %v29
  %v492 = vunpack.c.l.b16 %v30
  %v493 = vunpack.c.h.b16 %v30
  %v494 = vunpack.c.l.b16 %v31
  %v495 = vunpack.c.h.b16 %v31
  %v496 = vunpack.c.l.b16 %v32
  %v497 = vunpack.c.h.b16 %v32
  %v498 = vunpack.c.l.b16 %v33
  %v499 = vunpack.c.h.b16 %v33
  %v500 = vunpack.c.l.b16 %v34
  %v501 = vunpack.c.h.b16 %v34
  %v502 = vunpack.c.l.b16 %v35
  %v503 = vunpack.c.h.b16 %v35
  %v504 = vunpack.c.l.b16 %v36
  %v505 = vunpack.c.h.b16 %v36
  %v506 = vunpack.c.l.b16 %v37
  %v507 = vunpack.c.h.b16 %v37
  %v508 = vunpack.c.l.b16 %v38
  %v509 = vunpack.c.h.b16 %v38
  %v510 = vunpack.c.l.b16 %v39
  %v511 = vunpack.c.l.b16 %v40
  %v512 = vunpack.c.h.b16 %v40
  %v513 = vunpack.c.l.b16 %v41
  %v514 = vunpack.c.h.b16 %v41
  %v515 = vunpack.c.l.b16 %v42
  %v516 = vunpack.c.h.b16 %v42
  %v517 = vunpack.c.l.b16 %v43
  %v518 = vunpack.c.h.b16 %v43
  %v519 = vunpack.c.l.b16 %v44
  %v520 = vunpack.c.h.b16 %v44
  %v521 = vunpack.c.l.b16 %v45
  %v522 = vunpack.c.h.b16 %v45
  %v523 = vunpack.c.l.b16 %v46
  %v524 = vunpack.c.h.b16 %v46
  %v525 = vunpack.c.l.b16 %v47
  %v526 = vunpack.c.h.b16 %v47
  %v527 = vunpack.c.l.b16 %v48
  %v528 = vunpack.c.h.b16 %v48
  %v529 = vunpack.c.l.b16 %v49
  %v530 = vunpack.c.h.b16 %v49
  %v531 = vunpack.c.l.b16 %v50
  %v532 = vunpack.c.h.b16 %v50
  %v533 = vunpack.c.l.b16 %v51
  %v534 = vunpack.c.h.b16 %v51
  %v535 = vunpack.c.l.b16 %v52
  %v536 = vpack.c.b16 %v511, %v486
  %v537 = vpack.c.b16 %v512, %v487
  %v538 = vpack.c.b16 %v513, %v488
  %v539 = vpack.c.b16 %v514, %v489
  %v540 = vpack.c.b16 %v515, %v490
  %v541 = vpack.c.b16 %v516, %v491
  %v542 = vpack.c.b16 %v517, %v492
  %v543 = vpack.c.b16 %v518, %v493
  %v544 = vpack.c.b16 %v519, %v494
  %v545 = vpack.c.b16 %v520, %v495
  %v546 = vpack.c.b16 %v521, %v496
  %v547 = vpack.c.b16 %v522, %v497
  %v548 = vpack.c.b16 %v523, %v498
  %v549 = vpack.c.b16 %v524, %v499
  %v550 = vpack.c.b16 %v525, %v500
  %v551 = vpack.c.b16 %v526, %v501
  %v552 = vpack.c.b16 %v527, %v502
  %v553 = vpack.c.b16 %v528, %v503
  %v554 = vpack.c.b16 %v529, %v504
  %v555 = vpack.c.b16 %v530, %v505
  %v556 = vpack.c.b16 %v531, %v506
  %v557 = vpack.c.b16 %v532, %v507
  %v558 = vpack.c.b16 %v533, %v508
  %v559 = vpack.c.b16 %v534, %v509
  %v560 = vpack.c.b16 %v535, %v510
  %v986 = vunpack.c.l.b16 %v53
  %v987 = vunpack.c.l.b16 %v54
  %v988 = vunpack.c.l.b16 %v55
  %v989 = vunpack.c.l.b16 %v56
  %v990 = vunpack.c.l.b16 %v57
  %v991 = vunpack.c.l.b16 %v58
  %v992 = vunpack.c.l.b16 %v59
  %v993 = vunpack.c.l.b16 %v60
  %v994 = vunpack.c.l.b16 %v61
  %v995 = vunpack.c.l.b16 %v62
  %v996 = vunpack.c.l.b16 %v63
  %v997 = vunpack.c.l.b16 %v64
  %v998 = vunpack.c.l.b16 %v65
  %v999 = vunpack.c.l.b16 %v66
  %v1000 = vunpack.c.l.b16 %v67
  %v1001 = vunpack.c.l.b16 %v68
  %v1002 = vunpack.c.l.b16 %v69
  %v1003 = vunpack.c.l.b16 %v70
  %v1004 = vunpack.c.l.b16 %v71
  %v1005 = vunpack.c.l.b16 %v72
  %v1006 = vunpack.c.l.b16 %v73
  %v1007 = vunpack.c.l.b16 %v74
  %v1008 = vunpack.c.l.b16 %v75
  %v1009 = vunpack.c.l.b16 %v76
  %v1010 = vunpack.c.l.b16 %v77
  %v1011 = vunpack.c.l.b16 %v78
  %v1012 = vunpack.c.l.b16 %v79
  %v1013 = vunpack.c.l.b16 %v80
  %v1014 = vunpack.c.l.b16 %v81
  %v1015 = vunpack.c.l.b16 %v82
  %v1016 = vunpack.c.l.b16 %v83
  %v1017 = vunpack.c.l.b16 %v84
  %v1018 = vunpack.c.l.b16 %v85
  %v1019 = vunpack.c.l.b16 %v86
  %v1020 = vunpack.c.l.b16 %v87
  %v1021 = vunpack.c.l.b16 %v88
  %v1022 = vunpack.c.l.b16 %v89
  %v1023 = vunpack.c.l.b16 %v90
  %v1024 = vunpack.c.l.b16 %v91
  %v1025 = vunpack.c.l.b16 %v92
  %v1026 = vunpack.c.l.b16 %v93
  %v1027 = vunpack.c.l.b16 %v94
  %v1028 = vunpack.c.l.b16 %v95
  %v1029 = vunpack.c.l.b16 %v96
  %v1030 = vunpack.c.l.b16 %v97
  %v1031 = vunpack.c.l.b16 %v98
  %v1032 = vunpack.c.l.b16 %v99
  %v1033 = vunpack.c.l.b16 %v100
  %v1034 = vunpack.c.l.b16 %v101
  %v1035 = vunpack.c.l.b16 %v102
  %v1036 = vunpack.c.l.b16 %v103
  %v1037 = vunpack.c.l.b16 %v104
  %v1038 = vunpack.c.l.b16 %v105
  %v1039 = vunpack.c.l.b16 %v106
  %v1040 = vunpack.c.l.b16 %v107
  %v1041 = vunpack.c.l.b16 %v108
  %v1042 = vunpack.c.l.b16 %v109
  %v1043 = vunpack.c.l.b16 %v110
  %v1044 = vunpack.c.l.b16 %v111
  %v1045 = vunpack.c.l.b16 %v112
  %v1046 = vunpack.c.l.b16 %v113
  %v1047 = vunpack.c.l.b16 %v114
  %v1048 = vunpack.c.l.b16 %v115
  %v1049 = vunpack.c.l.b16 %v116
  %v1050 = vunpack.c.l.b16 %v117
  %v1051 = vunpack.c.l.b16 %v118
  %v1052 = vunpack.c.l.b16 %v119
  %v1053 = vunpack.c.l.b16 %v120
  %v1054 = vunpack.c.l.b16 %v121
  %v1055 = vunpack.c.l.b16 %v122
  %v1056 = vunpack.c.l.b16 %v123
  %v1057 = vunpack.c.l.b16 %v124
  %v1058 = vunpack.c.l.b16 %v125
  %v1059 = vunpack.c.l.b16 %v126
  %v1060 = vunpack.c.l.b16 %v127
  %v1061 = vunpack.c.l.b16 %v128
  %v1062 = vunpack.c.l.b16 %v129
  %v1063 = vunpack.c.l.b16 %v130
  %v1064 = vunpack.c.l.b16 %v131
  %v1065 = vunpack.c.l.b16 %v132
  %v1066 = vunpack.c.l.b16 %v133
  %v1067 = vunpack.c.l.b16 %v134
  %v1068 = vunpack.c.l.b16 %v135
  %v1069 = vunpack.c.l.b16 %v136
  %v1070 = vunpack.c.l.b16 %v137
  %v1071 = vunpack.c.l.b16 %v138
  %v1072 = vunpack.c.l.b16 %v139
  %v1073 = vunpack.c.l.b16 %v140
  %v1074 = vunpack.c.l.b16 %v141
  %v1075 = vunpack.c.l.b16 %v142
  %v1076 = vunpack.c.l.b16 %v143
  %v1077 = vunpack.c.l.b16 %v144
  %v1078 = vunpack.c.l.b16 %v145
  %v1079 = vunpack.c.l.b16 %v146
  %v1080 = vunpack.c.l.b16 %v147
  %v1081 = vunpack.c.l.b16 %v148
  %v1082 = vunpack.c.l.b16 %v149
  %v1083 = vunpack.c.l.b16 %v150
  %v1084 = vunpack.c.l.b16 %v151
  %v1085 = vunpack.c.l.b16 %v152
  %v1086 = vunpack.c.l.b16 %v153
  %v1087 = vunpack.c.l.b16 %v154
  %v1088 = vunpack.c.l.b16 %v155
  %v1089 = vunpack.c.l.b16 %v156
  %v1090 = vunpack.c.l.b16 %v157
  %v1091 = vunpack.c.l.b16 %v158
  %v1092 = vunpack.c.l.b16 %v159
  %v1093 = vunpack.c.l.b16 %v160
  %v1094 = vunpack.c.l.b16 %v161
  %v1095 = vunpack.c.l.b16 %v162
  %v1096 = vunpack.c.l.b16 %v163
  %v1097 = vunpack.c.l.b16 %v164
  %v1098 = vunpack.c.l.b16 %v165
  %v1099 = vunpack.c.l.b16 %v166
  %v1100 = vunpack.c.l.b16 %v167
  %v1101 = vunpack.c.l.b16 %v168
  %v1102 = vunpack.c.l.b16 %v169
  %v1103 = vunpack.c.l.b16 %v170
  %v1104 = vunpack.c.l.b16 %v171
  %v1105 = vunpack.c.l.b16 %v172
  %v1106 = vunpack.c.l.b16 %v173
  %v1107 = vunpack.c.l.b16 %v174
  %v1108 = vunpack.c.l.b16 %v175
  %v1109 = vunpack.c.l.b16 %v176
  %v1110 = vunpack.c.l.b16 %v177
  %v1111 = vunpack.c.l.b16 %v178
  %v1112 = vunpack.c.l.b16 %v179
  %v1113 = vunpack.c.l.b16 %v180
  %v1114 = vunpack.c.l.b16 %v181
  %v1115 = vunpack.c.l.b16 %v182
  %v1116 = vunpack.c.l.b16 %v183
  %v1117 = vunpack.c.l.b16 %v184
  %v1118 = vunpack.c.l.b16 %v185
  %v1119 = vunpack.c.l.b16 %v186
  %v1120 = vunpack.c.l.b16 %v187
  %v1121 = vunpack.c.l.b16 %v188
  %v1122 = vunpack.c.l.b16 %v189
  %v1123 = vunpack.c.l.b16 %v190
  %v1124 = vunpack.c.l.b16 %v191
  %v1125 = vunpack.c.l.b16 %v192
  %v1126 = vunpack.c.l.b16 %v193
  %v1127 = vunpack.c.l.b16 %v194
  %v1128 = vunpack.c.l.b16 %v195
  %v1129 = vunpack.c.l.b16 %v196
  %v1130 = vunpack.c.l.b16 %v197
  %v1131 = vunpack.c.l.b16 %v198
  %v1132 = vunpack.c.l.b16 %v199
  %v1133 = vunpack.c.l.b16 %v200
  %v1134 = vunpack.c.l.b16 %v201
  %v1135 = vunpack.c.l.b16 %v202
  %v1136 = vunpack.c.l.b16 %v203
  %v1137 = vunpack.c.l.b16 %v204
  %v1138 = vunpack.c.l.b16 %v205
  %v1139 = vunpack.c.l.b16 %v206
  %v1140 = vunpack.c.l.b16 %v207
  %v1141 = vunpack.c.l.b16 %v208
  %v1142 = vunpack.c.l.b16 %v209
  %v1143 = vunpack.c.l.b16 %v210
  %v1144 = vunpack.c.l.b16 %v211
  %v1145 = vunpack.c.l.b16 %v212
  %v1146 = vunpack.c.l.b16 %v213
  %v1147 = vunpack.c.l.b16 %v214
  %v1148 = vunpack.c.l.b16 %v215
  %v1149 = vunpack.c.l.b16 %v216
  %v1150 = vunpack.c.l.b16 %v217
  %v1151 = vunpack.c.l.b16 %v218
  %v1152 = vunpack.c.l.b16 %v219
  %v1153 = vunpack.c.l.b16 %v220
  %v1154 = vunpack.c.l.b16 %v221
  %v1155 = vunpack.c.l.b16 %v222
  %v1156 = vunpack.c.l.b16 %v223
  %v1157 = vunpack.c.l.b16 %v224
  %v1158 = vunpack.c.l.b16 %v225
  %v1159 = vunpack.c.l.b16 %v226
  %v1160 = vunpack.c.l.b16 %v227
  %v1161 = vunpack.c.l.b16 %v228
  %v1162 = vunpack.c.l.b16 %v229
  %v1163 = vunpack.c.l.b16 %v230
  %v1164 = vunpack.c.l.b16 %v231
  %v1165 = vunpack.c.l.b16 %v232
  %v1166 = vunpack.c.l.b16 %v233
  %v1167 = vunpack.c.l.b16 %v234
  %v1168 = vunpack.c.l.b16 %v235
  %v1169 = vunpack.c.l.b16 %v236
  %v1170 = vunpack.c.l.b16 %v237
  %v1171 = vunpack.c.l.b16 %v238
  %v1172 = vunpack.c.l.b16 %v239
  %v1173 = vunpack.c.l.b16 %v240
  %v1174 = vunpack.c.l.b16 %v241
  %v1175 = vunpack.c.l.b16 %v242
  %v1176 = vunpack.c.l.b16 %v243
  %v1177 = vunpack.c.l.b16 %v244
  %v1178 = vunpack.c.l.b16 %v245
  %v1179 = vunpack.c.l.b16 %v246
  %v1180 = vunpack.c.l.b16 %v247
  %v1181 = vunpack.c.l.b16 %v248
  %v1182 = vunpack.c.l.b16 %v249
  %v1183 = vunpack.c.l.b16 %v250
  %v1184 = vunpack.c.l.b16 %v251
  %v1185 = vunpack.c.l.b16 %v252
  %v1186 = vunpack.c.l.b16 %v253
  %v1187 = vunpack.c.l.b16 %v254
  %v1188 = vunpack.c.l.b16 %v255
  %v1189 = vunpack.c.l.b16 %v256
  %v1190 = vunpack.c.l.b16 %v257
  %v1191 = vunpack.c.l.b16 %v258
  %v1192 = vunpack.c.l.b16 %v259
  %v1193 = vunpack.c.l.b16 %v260
  %v1194 = vunpack.c.l.b16 %v261
  %v1195 = vunpack.c.l.b16 %v262
  %v1196 = vunpack.c.l.b16 %v263
  %v1197 = vunpack.c.l.b16 %v264
  %v1198 = vunpack.c.l.b16 %v265
  %v1199 = vunpack.c.l.b16 %v266
  %v1200 = vunpack.c.l.b16 %v267
  %v1201 = vunpack.c.l.b16 %v268
  %v1202 = vunpack.c.l.b16 %v269
  %v1203 = vunpack.c.l.b16 %v270
  %v1204 = vunpack.c.l.b16 %v271
  %v1205 = vunpack.c.l.b16 %v272
  %v1206 = vunpack.c.l.b16 %v273
  %v1207 = vunpack.c.l.b16 %v274
  %v1208 = vunpack.c.l.b16 %v275
  %v1209 = vunpack.c.l.b16 %v276
  %v1210 = vunpack.c.l.b16 %v277
  %v1211 = vunpack.c.l.b16 %v278
  %v1212 = vunpack.c.l.b16 %v279
  %v1213 = vunpack.c.l.b16 %v280
  %v1214 = vunpack.c.l.b16 %v281
  %v1215 = vunpack.c.l.b16 %v282
  %v1216 = vunpack.c.l.b16 %v283
  %v1217 = vunpack.c.l.b16 %v284
  %v1218 = vunpack.c.l.b16 %v285
  %v1219 = vunpack.c.l.b16 %v286
  %v1220 = vunpack.c.l.b16 %v287
  %v1221 = vunpack.c.l.b16 %v288
  %v1222 = vunpack.c.l.b16 %v289
  %v1223 = vunpack.c.l.b16 %v290
  %v1224 = vunpack.c.l.b16 %v291
  %v1225 = vunpack.c.l.b16 %v292
  %v1226 = vunpack.c.l.b16 %v293
  %v1227 = vunpack.c.l.b16 %v294
  %v1228 = vunpack.c.l.b16 %v295
  %v1229 = vunpack.c.l.b16 %v296
  %v1230 = vunpack.c.l.b16 %v297
  %v1231 = vunpack.c.l.b16 %v298
  %v1232 = vunpack.c.l.b16 %v299
  %v1233 = vunpack.c.l.b16 %v300
  %v1234 = vunpack.c.l.b16 %v301
  %v1235 = vunpack.c.l.b16 %v302
  %v1236 = vunpack.c.l.b16 %v303
  %v1237 = vunpack.c.l.b16 %v304
  %v1238 = vunpack.c.l.b16 %v305
  %v1239 = vunpack.c.l.b16 %v306
  %v1240 = vunpack.c.l.b16 %v307
  %v1241 = vunpack.c.l.b16 %v308
  %v1242 = vunpack.c.l.b16 %v309
  %v1243 = vunpack.c.l.b16 %v310
  %v1244 = vunpack.c.l.b16 %v311
  %v1245 = vunpack.c.l.b16 %v312
  %v1246 = vunpack.c.l.b16 %v313
  %v1247 = vunpack.c.l.b16 %v314
  %v1248 = vunpack.c.l.b16 %v315
  %v1249 = vunpack.c.l.b16 %v316
  %v1250 = vunpack.c.l.b16 %v317
  %v1251 = vunpack.c.l.b16 %v318
  %v1252 = vunpack.c.l.b16 %v319
  %v1253 = vunpack.c.l.b16 %v320
  %v1254 = vunpack.c.l.b16 %v321
  %v1255 = vunpack.c.l.b16 %v322
  %v1256 = vunpack.c.l.b16 %v323
  %v1257 = vunpack.c.l.b16 %v324
  %v1258 = vunpack.c.l.b16 %v325
  %v1259 = vunpack.c.l.b16 %v326
  %v1260 = vunpack.c.l.b16 %v327
  %v1261 = vunpack.c.l.b16 %v328
  %v1262 = vunpack.c.l.b16 %v329
  %v1263 = vunpack.c.l.b16 %v330
  %v1264 = vunpack.c.l.b16 %v331
  %v1265 = vunpack.c.l.b16 %v332
  %v1266 = vunpack.c.l.b16 %v333
  %v1267 = vunpack.c.l.b16 %v334
  %v1268 = vunpack.c.l.b16 %v335
  %v1269 = vunpack.c.l.b16 %v336
  %v1270 = vunpack.c.l.b16 %v337
  %v1271 = vunpack.c.l.b16 %v338
  %v1272 = vunpack.c.l.b16 %v339
  %v1273 = vunpack.c.l.b16 %v340
  %v1274 = vunpack.c.l.b16 %v341
  %v1275 = vunpack.c.l.b16 %v342
  %v1276 = vunpack.c.l.b16 %v343
  %v1277 = vunpack.c.l.b16 %v344
  %v1278 = vunpack.c.l.b16 %v345
  %v1279 = vunpack.c.l.b16 %v346
  %v1280 = vunpack.c.l.b16 %v347
  %v1281 = vunpack.c.l.b16 %v348
  %v1282 = vunpack.c.l.b16 %v349
  %v1283 = vunpack.c.l.b16 %v350
  %v1284 = vunpack.c.l.b16 %v351
  %v1285 = vunpack.c.l.b16 %v352
  %v1286 = vunpack.c.l.b16 %v353
  %v1287 = vunpack.c.l.b16 %v354
  %v1288 = vunpack.c.l.b16 %v355
  %v1289 = vunpack.c.l.b16 %v356
  %v1290 = vunpack.c.l.b16 %v357
  %v1291 = vunpack.c.l.b16 %v358
  %v1292 = vunpack.c.l.b16 %v359
  %v1293 = vunpack.c.l.b16 %v360
  %v1294 = vunpack.c.l.b16 %v361
  %v1295 = vunpack.c.l.b16 %v362
  %v1296 = vunpack.c.l.b16 %v363
  %v1297 = vunpack.c.l.b16 %v364
  %v1298 = vunpack.c.l.b16 %v365
  %v1299 = vunpack.c.l.b16 %v366
  %v1300 = vunpack.c.l.b16 %v367
  %v1301 = vunpack.c.l.b16 %v368
  %v1302 = vunpack.c.l.b16 %v369
  %v1303 = vunpack.c.l.b16 %v370
  %v1304 = vunpack.c.l.b16 %v371
  %v1305 = vunpack.c.l.b16 %v372
  %v1306 = vunpack.c.l.b16 %v373
  %v1307 = vunpack.c.l.b16 %v374
  %v1308 = vunpack.c.l.b16 %v375
  %v1309 = vunpack.c.l.b16 %v376
  %v1310 = vunpack.c.l.b16 %v377
  %v1311 = vunpack.c.l.b16 %v378
  %v1312 = vunpack.c.l.b16 %v379
  %v1313 = vunpack.c.l.b16 %v380
  %v1314 = vunpack.c.l.b16 %v381
  %v1315 = vunpack.c.l.b16 %v382
  %v1316 = vunpack.c.l.b16 %v383
  %v1317 = vunpack.c.l.b16 %v384
  %v1318 = vunpack.c.l.b16 %v385
  %v1319 = vunpack.c.l.b16 %v386
  %v1320 = vunpack.c.l.b16 %v387
  %v1321 = vunpack.c.l.b16 %v388
  %v1322 = vunpack.c.l.b16 %v389
  %v1323 = vunpack.c.l.b16 %v390
  %v1324 = vunpack.c.l.b16 %v391
  %v1325 = vunpack.c.l.b16 %v392
  %v1326 = vunpack.c.l.b16 %v393
  %v1327 = vunpack.c.l.b16 %v394
  %v1328 = vunpack.c.l.b16 %v395
  %v1329 = vunpack.c.l.b16 %v396
  %v1330 = vunpack.c.l.b16 %v397
  %v1331 = vunpack.c.l.b16 %v398
  %v1332 = vunpack.c.l.b16 %v399
  %v1333 = vunpack.c.l.b16 %v400
  %v1334 = vunpack.c.l.b16 %v401
  %v1335 = vunpack.c.l.b16 %v402
  %v1336 = vunpack.c.l.b16 %v403
  %v1337 = vunpack.c.l.b16 %v404
  %v1338 = vunpack.c.l.b16 %v405
  %v1339 = vunpack.c.l.b16 %v406
  %v1340 = vunpack.c.l.b16 %v407
  %v1341 = vunpack.c.l.b16 %v408
  %v1342 = vunpack.c.l.b16 %v409
  %v1343 = vunpack.c.l.b16 %v410
  %v1344 = vunpack.c.l.b16 %v411
  %v1345 = vunpack.c.l.b16 %v412
  %v1346 = vunpack.c.l.b16 %v413
  %v1347 = vunpack.c.l.b16 %v414
  %v1348 = vunpack.c.l.b16 %v415
  %v1349 = vunpack.c.l.b16 %v416
  %v1350 = vunpack.c.l.b16 %v417
  %v1351 = vunpack.c.l.b16 %v418
  %v1352 = vunpack.c.l.b16 %v419
  %v1353 = vunpack.c.l.b16 %v420
  %v1354 = vunpack.c.l.b16 %v421
  %v1355 = vunpack.c.l.b16 %v422
  %v1356 = vunpack.c.l.b16 %v423
  %v1357 = vunpack.c.l.b16 %v424
  %v1358 = vunpack.c.l.b16 %v425
  %v1359 = vunpack.c.l.b16 %v426
  %v1360 = vunpack.c.l.b16 %v427
  %v1361 = vunpack.c.l.b16 %v428
  %v1362 = vunpack.c.l.b16 %v429
  %v1363 = vunpack.c.l.b16 %v430
  %v1364 = vunpack.c.l.b16 %v431
  %v1365 = vunpack.c.l.b16 %v432
  %v1366 = vunpack.c.l.b16 %v433
  %v1367 = vunpack.c.l.b16 %v434
  %v1368 = vunpack.c.l.b16 %v435
  %v1369 = vunpack.c.l.b16 %v436
  %v1370 = vunpack.c.l.b16 %v437
  %v1371 = vunpack.c.l.b16 %v438
  %v1372 = vunpack.c.l.b16 %v439
  %v1373 = vunpack.c.l.b16 %v440
  %v1374 = vunpack.c.l.b16 %v441
  %v1375 = vunpack.c.l.b16 %v442
  %v1376 = vunpack.c.l.b16 %v443
  %v1377 = vunpack.c.l.b16 %v444
  %v1378 = vunpack.c.l.b16 %v445
  %v1379 = vunpack.c.l.b16 %v446
  %v1380 = vunpack.c.l.b16 %v447
  %v1381 = vunpack.c.l.b16 %v448
  %v1382 = vunpack.c.l.b16 %v449
  %v1383 = vunpack.c.l.b16 %v450
  %v1384 = vunpack.c.l.b16 %v451
  %v1385 = vunpack.c.l.b16 %v452
  %v1386 = vpack.c.b16 %v987, %v986
  %v1387 = vpack.c.b16 %v989, %v988
  %v1388 = vpack.c.b16 %v991, %v990
  %v1389 = vpack.c.b16 %v993, %v992
  %v1390 = vpack.c.b16 %v995, %v994
  %v1391 = vpack.c.b16 %v997, %v996
  %v1392 = vpack.c.b16 %v999, %v998
  %v1393 = vpack.c.b16 %v1001, %v1000
  %v1394 = vpack.c.b16 %v1003, %v1002
  %v1395 = vpack.c.b16 %v1005, %v1004
  %v1396 = vpack.c.b16 %v1007, %v1006
  %v1397 = vpack.c.b16 %v1009, %v1008
  %v1398 = vpack.c.b16 %v1011, %v1010
  %v1399 = vpack.c.b16 %v1013, %v1012
  %v1400 = vpack.c.b16 %v1015, %v1014
  %v1401 = vpack.c.b16 %v1017, %v1016
  %v1402 = vpack.c.b16 %v1019, %v1018
  %v1403 = vpack.c.b16 %v1021, %v1020
  %v1404 = vpack.c.b16 %v1023, %v1022
  %v1405 = vpack.c.b16 %v1025, %v1024
  %v1406 = vpack.c.b16 %v1027, %v1026
  %v1407 = vpack.c.b16 %v1029, %v1028
  %v1408 = vpack.c.b16 %v1031, %v1030
  %v1409 = vpack.c.b16 %v1033, %v1032
  %v1410 = vpack.c.b16 %v1035, %v1034
  %v1411 = vpack.c.b16 %v1037, %v1036
  %v1412 = vpack.c.b16 %v1039, %v1038
  %v1413 = vpack.c.b16 %v1041, %v1040
  %v1414 = vpack.c.b16 %v1043, %v1042
  %v1415 = vpack.c.b16 %v1045, %v1044
  %v1416 = vpack.c.b16 %v1047, %v1046
  %v1417 = vpack.c.b16 %v1049, %v1048
  %v1418 = vpack.c.b16 %v1051, %v1050
  %v1419 = vpack.c.b16 %v1053, %v1052
  %v1420 = vpack.c.b16 %v1055, %v1054
  %v1421 = vpack.c.b16 %v1057, %v1056
  %v1422 = vpack.c.b16 %v1059, %v1058
  %v1423 = vpack.c.b16 %v1061, %v1060
  %v1424 = vpack.c.b16 %v1063, %v1062
  %v1425 = vpack.c.b16 %v1065, %v1064
  %v1426 = vpack.c.b16 %v1067, %v1066
  %v1427 = vpack.c.b16 %v1069, %v1068
  %v1428 = vpack.c.b16 %v1071, %v1070
  %v1429 = vpack.c.b16 %v1073, %v1072
  %v1430 = vpack.c.b16 %v1075, %v1074
  %v1431 = vpack.c.b16 %v1077, %v1076
  %v1432 = vpack.c.b16 %v1079, %v1078
  %v1433 = vpack.c.b16 %v1081, %v1080
  %v1434 = vpack.c.b16 %v1083, %v1082
  %v1435 = vpack.c.b16 %v1085, %v1084
  %v1436 = vpack.c.b16 %v1087, %v1086
  %v1437 = vpack.c.b16 %v1089, %v1088
  %v1438 = vpack.c.b16 %v1091, %v1090
  %v1439 = vpack.c.b16 %v1093, %v1092
  %v1440 = vpack.c.b16 %v1095, %v1094
  %v1441 = vpack.c.b16 %v1097, %v1096
  %v1442 = vpack.c.b16 %v1099, %v1098
  %v1443 = vpack.c.b16 %v1101, %v1100
  %v1444 = vpack.c.b16 %v1103, %v1102
  %v1445 = vpack.c.b16 %v1105, %v1104
  %v1446 = vpack.c.b16 %v1107, %v1106
  %v1447 = vpack.c.b16 %v1109, %v1108
  %v1448 = vpack.c.b16 %v1111, %v1110
  %v1449 = vpack.c.b16 %v1113, %v1112
  %v1450 = vpack.c.b16 %v1115, %v1114
  %v1451 = vpack.c.b16 %v1117, %v1116
  %v1452 = vpack.c.b16 %v1119, %v1118
  %v1453 = vpack.c.b16 %v1121, %v1120
  %v1454 = vpack.c.b16 %v1123, %v1122
  %v1455 = vpack.c.b16 %v1125, %v1124
  %v1456 = vpack.c.b16 %v1127, %v1126
  %v1457 = vpack.c.b16 %v1129, %v1128
  %v1458 = vpack.c.b16 %v1131, %v1130
  %v1459 = vpack.c.b16 %v1133, %v1132
  %v1460 = vpack.c.b16 %v1135, %v1134
  %v1461 = vpack.c.b16 %v1137, %v1136
  %v1462 = vpack.c.b16 %v1139, %v1138
  %v1463 = vpack.c.b16 %v1141, %v1140
  %v1464 = vpack.c.b16 %v1143, %v1142
  %v1465 = vpack.c.b16 %v1145, %v1144
  %v1466 = vpack.c.b16 %v1147, %v1146
  %v1467 = vpack.c.b16 %v1149, %v1148
  %v1468 = vpack.c.b16 %v1151, %v1150
  %v1469 = vpack.c.b16 %v1153, %v1152
  %v1470 = vpack.c.b16 %v1155, %v1154
  %v1471 = vpack.c.b16 %v1157, %v1156
  %v1472 = vpack.c.b16 %v1159, %v1158
  %v1473 = vpack.c.b16 %v1161, %v1160
  %v1474 = vpack.c.b16 %v1163, %v1162
  %v1475 = vpack.c.b16 %v1165, %v1164
  %v1476 = vpack.c.b16 %v1167, %v1166
  %v1477 = vpack.c.b16 %v1169, %v1168
  %v1478 = vpack.c.b16 %v1171, %v1170
  %v1479 = vpack.c.b16 %v1173, %v1172
  %v1480 = vpack.c.b16 %v1175, %v1174
  %v1481 = vpack.c.b16 %v1177, %v1176
  %v1482 = vpack.c.b16 %v1179, %v1178
  %v1483 = vpack.c.b16 %v1181, %v1180
  %v1484 = vpack.c.b16 %v1183, %v1182
  %v1485 = vpack.c.b16 %v1185, %v1184
  %v1486 = vpack.c.b16 %v1187, %v1186
  %v1487 = vpack.c.b16 %v1189, %v1188
  %v1488 = vpack.c.b16 %v1191, %v1190
  %v1489 = vpack.c.b16 %v1193, %v1192
  %v1490 = vpack.c.b16 %v1195, %v1194
  %v1491 = vpack.c.b16 %v1197, %v1196
  %v1492 = vpack.c.b16 %v1199, %v1198
  %v1493 = vpack.c.b16 %v1201, %v1200
  %v1494 = vpack.c.b16 %v1203, %v1202
  %v1495 = vpack.c.b16 %v1205, %v1204
  %v1496 = vpack.c.b16 %v1207, %v1206
  %v1497 = vpack.c.b16 %v1209, %v1208
  %v1498 = vpack.c.b16 %v1211, %v1210
  %v1499 = vpack.c.b16 %v1213, %v1212
  %v1500 = vpack.c.b16 %v1215, %v1214
  %v1501 = vpack.c.b16 %v1217, %v1216
  %v1502 = vpack.c.b16 %v1219, %v1218
  %v1503 = vpack.c.b16 %v1221, %v1220
  %v1504 = vpack.c.b16 %v1223, %v1222
  %v1505 = vpack.c.b16 %v1225, %v1224
  %v1506 = vpack.c.b16 %v1227, %v1226
  %v1507 = vpack.c.b16 %v1229, %v1228
  %v1508 = vpack.c.b16 %v1231, %v1230
  %v1509 = vpack.c.b16 %v1233, %v1232
  %v1510 = vpack.c.b16 %v1235, %v1234
  %v1511 = vpack.c.b16 %v1237, %v1236
  %v1512 = vpack.c.b16 %v1239, %v1238
  %v1513 = vpack.c.b16 %v1241, %v1240
  %v1514 = vpack.c.b16 %v1243, %v1242
  %v1515 = vpack.c.b16 %v1245, %v1244
  %v1516 = vpack.c.b16 %v1247, %v1246
  %v1517 = vpack.c.b16 %v1249, %v1248
  %v1518 = vpack.c.b16 %v1251, %v1250
  %v1519 = vpack.c.b16 %v1253, %v1252
  %v1520 = vpack.c.b16 %v1255, %v1254
  %v1521 = vpack.c.b16 %v1257, %v1256
  %v1522 = vpack.c.b16 %v1259, %v1258
  %v1523 = vpack.c.b16 %v1261, %v1260
  %v1524 = vpack.c.b16 %v1263, %v1262
  %v1525 = vpack.c.b16 %v1265, %v1264
  %v1526 = vpack.c.b16 %v1267, %v1266
  %v1527 = vpack.c.b16 %v1269, %v1268
  %v1528 = vpack.c.b16 %v1271, %v1270
  %v1529 = vpack.c.b16 %v1273, %v1272
  %v1530 = vpack.c.b16 %v1275, %v1274
  %v1531 = vpack.c.b16 %v1277, %v1276
  %v1532 = vpack.c.b16 %v1279, %v1278
  %v1533 = vpack.c.b16 %v1281, %v1280
  %v1534 = vpack.c.b16 %v1283, %v1282
  %v1535 = vpack.c.b16 %v1285, %v1284
  %v1536 = vpack.c.b16 %v1287, %v1286
  %v1537 = vpack.c.b16 %v1289, %v1288
  %v1538 = vpack.c.b16 %v1291, %v1290
  %v1539 = vpack.c.b16 %v1293, %v1292
  %v1540 = vpack.c.b16 %v1295, %v1294
  %v1541 = vpack.c.b16 %v1297, %v1296
  %v1542 = vpack.c.b16 %v1299, %v1298
  %v1543 = vpack.c.b16 %v1301, %v1300
  %v1544 = vpack.c.b16 %v1303, %v1302
  %v1545 = vpack.c.b16 %v1305, %v1304
  %v1546 = vpack.c.b16 %v1307, %v1306
  %v1547 = vpack.c.b16 %v1309, %v1308
  %v1548 = vpack.c.b16 %v1311, %v1310
  %v1549 = vpack.c.b16 %v1313, %v1312
  %v1550 = vpack.c.b16 %v1315, %v1314
  %v1551 = vpack.c.b16 %v1317, %v1316
  %v1552 = vpack.c.b16 %v1319, %v1318
  %v1553 = vpack.c.b16 %v1321, %v1320
  %v1554 = vpack.c.b16 %v1323, %v1322
  %v1555 = vpack.c.b16 %v1325, %v1324
  %v1556 = vpack.c.b16 %v1327, %v1326
  %v1557 = vpack.c.b16 %v1329, %v1328
  %v1558 = vpack.c.b16 %v1331, %v1330
  %v1559 = vpack.c.b16 %v1333, %v1332
  %v1560 = vpack.c.b16 %v1335, %v1334
  %v1561 = vpack.c.b16 %v1337, %v1336
  %v1562 = vpack.c.b16 %v1339, %v1338
  %v1563 = vpack.c.b16 %v1341, %v1340
  %v1564 = vpack.c.b16 %v1343, %v1342
  %v1565 = vpack.c.b16 %v1345, %v1344
  %v1566 = vpack.c.b16 %v1347, %v1346
  %v1567 = vpack.c.b16 %v1349, %v1348
  %v1568 = vpack.c.b16 %v1351, %v1350
  %v1569 = vpack.c.b16 %v1353, %v1352
  %v1570 = vpack.c.b16 %v1355, %v1354
  %v1571 = vpack.c.b16 %v1357, %v1356
  %v1572 = vpack.c.b16 %v1359, %v1358
  %v1573 = vpack.c.b16 %v1361, %v1360
  %v1574 = vpack.c.b16 %v1363, %v1362
  %v1575 = vpack.c.b16 %v1365, %v1364
  %v1576 = vpack.c.b16 %v1367, %v1366
  %v1577 = vpack.c.b16 %v1369, %v1368
  %v1578 = vpack.c.b16 %v1371, %v1370
  %v1579 = vpack.c.b16 %v1373, %v1372
  %v1580 = vpack.c.b16 %v1375, %v1374
  %v1581 = vpack.c.b16 %v1377, %v1376
  %v1582 = vpack.c.b16 %v1379, %v1378
  %v1583 = vpack.c.b16 %v1381, %v1380
  %v1584 = vpack.c.b16 %v1383, %v1382
  %v1585 = vpack.c.b16 %v1385, %v1384
  %1786 = vmatprep.subr.bf16.mxu0 0
  %1787 = vmatpush1.bf16.msra.mxu0 %v1386
  %1788 = vmatprep.subr.bf16.mxu0 0
  %1789 = vmatpush1.bf16.msra.mxu0 %v1387
  %1790 = vmatprep.subr.bf16.mxu0 0
  %1791 = vmatpush1.bf16.msra.mxu0 %v1388
  %1792 = vmatprep.subr.bf16.mxu0 0
  %1793 = vmatpush1.bf16.msra.mxu0 %v1389
  %1794 = vmatprep.subr.bf16.mxu0 0
  %1795 = vmatpush1.bf16.msra.mxu0 %v1390
  %1796 = vmatprep.subr.bf16.mxu0 0
  %1797 = vmatpush1.bf16.msra.mxu0 %v1391
  %1798 = vmatprep.subr.bf16.mxu0 0
  %1799 = vmatpush1.bf16.msra.mxu0 %v1392
  %1800 = vmatprep.subr.bf16.mxu0 0
  %1801 = vmatpush1.bf16.msra.mxu0 %v1393
  %1802 = vmatprep.subr.bf16.mxu0 0
  %1803 = vmatpush1.bf16.msra.mxu0 %v1394
  %1804 = vmatprep.subr.bf16.mxu0 0
  %1805 = vmatpush1.bf16.msra.mxu0 %v1395
  %1806 = vmatprep.subr.bf16.mxu0 0
  %1807 = vmatpush1.bf16.msra.mxu0 %v1396
  %1808 = vmatprep.subr.bf16.mxu0 0
  %1809 = vmatpush1.bf16.msra.mxu0 %v1397
  %1810 = vmatprep.subr.bf16.mxu0 0
  %1811 = vmatpush1.bf16.msra.mxu0 %v1398
  %1812 = vmatprep.subr.bf16.mxu0 0
  %1813 = vmatpush1.bf16.msra.mxu0 %v1399
  %1814 = vmatprep.subr.bf16.mxu0 0
  %1815 = vmatpush1.bf16.msra.mxu0 %v1400
  %1816 = vmatprep.subr.bf16.mxu0 0
  %1817 = vmatpush1.bf16.msra.mxu0 %v1401
  %1818 = vmatprep.mubr.bf16.mxu0 %v537
  %1819 = vmatmul.mubr.bf16.gmra.mrb[0].mxu0 %v536
  %v1820 = vpop.f32.mrb[0].mxu0
  %v1821 = vadd.f32 %v458, %v1820
  %v1822 = vpop.f32.mrb[0].mxu0
  %v1823 = vpop.f32.mrb[0].mxu0
  %v1824 = vadd.f32 %v458, %v1823
  %v1825 = vpop.f32.mrb[0].mxu0
  %1826 = vdwg.mxu0
  %1827 = vmatprep.subr.bf16.mxu0 0
  %1828 = vmatpush1.bf16.msra.mxu0 %v1402
  %1829 = vmatprep.subr.bf16.mxu0 0
  %1830 = vmatpush1.bf16.msra.mxu0 %v1403
  %1831 = vmatprep.subr.bf16.mxu0 0
  %1832 = vmatpush1.bf16.msra.mxu0 %v1404
  %1833 = vmatprep.subr.bf16.mxu0 0
  %1834 = vmatpush1.bf16.msra.mxu0 %v1405
  %1835 = vmatprep.subr.bf16.mxu0 0
  %1836 = vmatpush1.bf16.msra.mxu0 %v1406
  %1837 = vmatprep.subr.bf16.mxu0 0
  %1838 = vmatpush1.bf16.msra.mxu0 %v1407
  %1839 = vmatprep.subr.bf16.mxu0 0
  %1840 = vmatpush1.bf16.msra.mxu0 %v1408
  %1841 = vmatprep.subr.bf16.mxu0 0
  %1842 = vmatpush1.bf16.msra.mxu0 %v1409
  %1843 = vmatprep.subr.bf16.mxu0 0
  %1844 = vmatpush1.bf16.msra.mxu0 %v1410
  %1845 = vmatprep.subr.bf16.mxu0 0
  %1846 = vmatpush1.bf16.msra.mxu0 %v1411
  %1847 = vmatprep.subr.bf16.mxu0 0
  %1848 = vmatpush1.bf16.msra.mxu0 %v1412
  %1849 = vmatprep.subr.bf16.mxu0 0
  %1850 = vmatpush1.bf16.msra.mxu0 %v1413
  %1851 = vmatprep.subr.bf16.mxu0 0
  %1852 = vmatpush1.bf16.msra.mxu0 %v1414
  %1853 = vmatprep.subr.bf16.mxu0 0
  %1854 = vmatpush1.bf16.msra.mxu0 %v1415
  %1855 = vmatprep.subr.bf16.mxu0 0
  %1856 = vmatpush1.bf16.msra.mxu0 %v1416
  %1857 = vmatprep.subr.bf16.mxu0 0
  %1858 = vmatpush1.bf16.msra.mxu0 %v1417
  %1859 = vmatprep.mubr.bf16.mxu0 %v539
  %1860 = vmatmul.mubr.bf16.gmra.mrb[0].mxu0 %v538
  %v1861 = vpop.f32.mrb[0].mxu0
  %v1862 = vadd.f32 %v1821, %v1861
  %v1863 = vpop.f32.mrb[0].mxu0
  %v1864 = vpop.f32.mrb[0].mxu0
  %v1865 = vadd.f32 %v1824, %v1864
  %v1866 = vpop.f32.mrb[0].mxu0
  %1867 = vdwg.mxu0
  %1868 = vmatprep.subr.bf16.mxu0 0
  %1869 = vmatpush1.bf16.msra.mxu0 %v1418
  %1870 = vmatprep.subr.bf16.mxu0 0
  %1871 = vmatpush1.bf16.msra.mxu0 %v1419
  %1872 = vmatprep.subr.bf16.mxu0 0
  %1873 = vmatpush1.bf16.msra.mxu0 %v1420
  %1874 = vmatprep.subr.bf16.mxu0 0
  %1875 = vmatpush1.bf16.msra.mxu0 %v1421
  %1876 = vmatprep.subr.bf16.mxu0 0
  %1877 = vmatpush1.bf16.msra.mxu0 %v1422
  %1878 = vmatprep.subr.bf16.mxu0 0
  %1879 = vmatpush1.bf16.msra.mxu0 %v1423
  %1880 = vmatprep.subr.bf16.mxu0 0
  %1881 = vmatpush1.bf16.msra.mxu0 %v1424
  %1882 = vmatprep.subr.bf16.mxu0 0
  %1883 = vmatpush1.bf16.msra.mxu0 %v1425
  %1884 = vmatprep.subr.bf16.mxu0 0
  %1885 = vmatpush1.bf16.msra.mxu0 %v1426
  %1886 = vmatprep.subr.bf16.mxu0 0
  %1887 = vmatpush1.bf16.msra.mxu0 %v1427
  %1888 = vmatprep.subr.bf16.mxu0 0
  %1889 = vmatpush1.bf16.msra.mxu0 %v1428
  %1890 = vmatprep.subr.bf16.mxu0 0
  %1891 = vmatpush1.bf16.msra.mxu0 %v1429
  %1892 = vmatprep.subr.bf16.mxu0 0
  %1893 = vmatpush1.bf16.msra.mxu0 %v1430
  %1894 = vmatprep.subr.bf16.mxu0 0
  %1895 = vmatpush1.bf16.msra.mxu0 %v1431
  %1896 = vmatprep.subr.bf16.mxu0 0
  %1897 = vmatpush1.bf16.msra.mxu0 %v1432
  %1898 = vmatprep.subr.bf16.mxu0 0
  %1899 = vmatpush1.bf16.msra.mxu0 %v1433
  %1900 = vmatprep.mubr.bf16.mxu0 %v541
  %1901 = vmatmul.mubr.bf16.gmra.mrb[0].mxu0 %v540
  %v1902 = vpop.f32.mrb[0].mxu0
  %v1903 = vadd.f32 %v1862, %v1902
  %v1904 = vpop.f32.mrb[0].mxu0
  %v1905 = vpop.f32.mrb[0].mxu0
  %v1906 = vadd.f32 %v1865, %v1905
  %v1907 = vpop.f32.mrb[0].mxu0
  %1908 = vdwg.mxu0
  %1909 = vmatprep.subr.bf16.mxu0 0
  %1910 = vmatpush1.bf16.msra.mxu0 %v1434
  %1911 = vmatprep.subr.bf16.mxu0 0
  %1912 = vmatpush1.bf16.msra.mxu0 %v1435
  %1913 = vmatprep.subr.bf16.mxu0 0
  %1914 = vmatpush1.bf16.msra.mxu0 %v1436
  %1915 = vmatprep.subr.bf16.mxu0 0
  %1916 = vmatpush1.bf16.msra.mxu0 %v1437
  %1917 = vmatprep.subr.bf16.mxu0 0
  %1918 = vmatpush1.bf16.msra.mxu0 %v1438
  %1919 = vmatprep.subr.bf16.mxu0 0
  %1920 = vmatpush1.bf16.msra.mxu0 %v1439
  %1921 = vmatprep.subr.bf16.mxu0 0
  %1922 = vmatpush1.bf16.msra.mxu0 %v1440
  %1923 = vmatprep.subr.bf16.mxu0 0
  %1924 = vmatpush1.bf16.msra.mxu0 %v1441
  %1925 = vmatprep.subr.bf16.mxu0 0
  %1926 = vmatpush1.bf16.msra.mxu0 %v1442
  %1927 = vmatprep.subr.bf16.mxu0 0
  %1928 = vmatpush1.bf16.msra.mxu0 %v1443
  %1929 = vmatprep.subr.bf16.mxu0 0
  %1930 = vmatpush1.bf16.msra.mxu0 %v1444
  %1931 = vmatprep.subr.bf16.mxu0 0
  %1932 = vmatpush1.bf16.msra.mxu0 %v1445
  %1933 = vmatprep.subr.bf16.mxu0 0
  %1934 = vmatpush1.bf16.msra.mxu0 %v1446
  %1935 = vmatprep.subr.bf16.mxu0 0
  %1936 = vmatpush1.bf16.msra.mxu0 %v1447
  %1937 = vmatprep.subr.bf16.mxu0 0
  %1938 = vmatpush1.bf16.msra.mxu0 %v1448
  %1939 = vmatprep.subr.bf16.mxu0 0
  %1940 = vmatpush1.bf16.msra.mxu0 %v1449
  %1941 = vmatprep.mubr.bf16.mxu0 %v543
  %1942 = vmatmul.mubr.bf16.gmra.mrb[0].mxu0 %v542
  %v1943 = vpop.f32.mrb[0].mxu0
  %v1944 = vadd.f32 %v1903, %v1943
  %v1945 = vpop.f32.mrb[0].mxu0
  %v1946 = vpop.f32.mrb[0].mxu0
  %v1947 = vadd.f32 %v1906, %v1946
  %v1948 = vpop.f32.mrb[0].mxu0
  %1949 = vdwg.mxu0
  %1950 = vmatprep.subr.bf16.mxu0 0
  %1951 = vmatpush1.bf16.msra.mxu0 %v1450
  %1952 = vmatprep.subr.bf16.mxu0 0
  %1953 = vmatpush1.bf16.msra.mxu0 %v1451
  %1954 = vmatprep.subr.bf16.mxu0 0
  %1955 = vmatpush1.bf16.msra.mxu0 %v1452
  %1956 = vmatprep.subr.bf16.mxu0 0
  %1957 = vmatpush1.bf16.msra.mxu0 %v1453
  %1958 = vmatprep.subr.bf16.mxu0 0
  %1959 = vmatpush1.bf16.msra.mxu0 %v1454
  %1960 = vmatprep.subr.bf16.mxu0 0
  %1961 = vmatpush1.bf16.msra.mxu0 %v1455
  %1962 = vmatprep.subr.bf16.mxu0 0
  %1963 = vmatpush1.bf16.msra.mxu0 %v1456
  %1964 = vmatprep.subr.bf16.mxu0 0
  %1965 = vmatpush1.bf16.msra.mxu0 %v1457
  %1966 = vmatprep.subr.bf16.mxu0 0
  %1967 = vmatpush1.bf16.msra.mxu0 %v1458
  %1968 = vmatprep.subr.bf16.mxu0 0
  %1969 = vmatpush1.bf16.msra.mxu0 %v1459
  %1970 = vmatprep.subr.bf16.mxu0 0
  %1971 = vmatpush1.bf16.msra.mxu0 %v1460
  %1972 = vmatprep.subr.bf16.mxu0 0
  %1973 = vmatpush1.bf16.msra.mxu0 %v1461
  %1974 = vmatprep.subr.bf16.mxu0 0
  %1975 = vmatpush1.bf16.msra.mxu0 %v1462
  %1976 = vmatprep.subr.bf16.mxu0 0
  %1977 = vmatpush1.bf16.msra.mxu0 %v1463
  %1978 = vmatprep.subr.bf16.mxu0 0
  %1979 = vmatpush1.bf16.msra.mxu0 %v1464
  %1980 = vmatprep.subr.bf16.mxu0 0
  %1981 = vmatpush1.bf16.msra.mxu0 %v1465
  %1982 = vmatprep.mubr.bf16.mxu0 %v545
  %1983 = vmatmul.mubr.bf16.gmra.mrb[0].mxu0 %v544
  %v1984 = vpop.f32.mrb[0].mxu0
  %v1985 = vadd.f32 %v1944, %v1984
  %v1986 = vpop.f32.mrb[0].mxu0
  %v1987 = vpop.f32.mrb[0].mxu0
  %v1988 = vadd.f32 %v1947, %v1987
  %v1989 = vpop.f32.mrb[0].mxu0
  %1990 = vdwg.mxu0
  %1991 = vmatprep.subr.bf16.mxu0 0
  %1992 = vmatpush1.bf16.msra.mxu0 %v1466
  %1993 = vmatprep.subr.bf16.mxu0 0
  %1994 = vmatpush1.bf16.msra.mxu0 %v1467
  %1995 = vmatprep.subr.bf16.mxu0 0
  %1996 = vmatpush1.bf16.msra.mxu0 %v1468
  %1997 = vmatprep.subr.bf16.mxu0 0
  %1998 = vmatpush1.bf16.msra.mxu0 %v1469
  %1999 = vmatprep.subr.bf16.mxu0 0
  %2000 = vmatpush1.bf16.msra.mxu0 %v1470
  %2001 = vmatprep.subr.bf16.mxu0 0
  %2002 = vmatpush1.bf16.msra.mxu0 %v1471
  %2003 = vmatprep.subr.bf16.mxu0 0
  %2004 = vmatpush1.bf16.msra.mxu0 %v1472
  %2005 = vmatprep.subr.bf16.mxu0 0
  %2006 = vmatpush1.bf16.msra.mxu0 %v1473
  %2007 = vmatprep.subr.bf16.mxu0 0
  %2008 = vmatpush1.bf16.msra.mxu0 %v1474
  %2009 = vmatprep.subr.bf16.mxu0 0
  %2010 = vmatpush1.bf16.msra.mxu0 %v1475
  %2011 = vmatprep.subr.bf16.mxu0 0
  %2012 = vmatpush1.bf16.msra.mxu0 %v1476
  %2013 = vmatprep.subr.bf16.mxu0 0
  %2014 = vmatpush1.bf16.msra.mxu0 %v1477
  %2015 = vmatprep.subr.bf16.mxu0 0
  %2016 = vmatpush1.bf16.msra.mxu0 %v1478
  %2017 = vmatprep.subr.bf16.mxu0 0
  %2018 = vmatpush1.bf16.msra.mxu0 %v1479
  %2019 = vmatprep.subr.bf16.mxu0 0
  %2020 = vmatpush1.bf16.msra.mxu0 %v1480
  %2021 = vmatprep.subr.bf16.mxu0 0
  %2022 = vmatpush1.bf16.msra.mxu0 %v1481
  %2023 = vmatprep.mubr.bf16.mxu0 %v547
  %2024 = vmatmul.mubr.bf16.gmra.mrb[0].mxu0 %v546
  %v2025 = vpop.f32.mrb[0].mxu0
  %v2026 = vadd.f32 %v1985, %v2025
  %v2027 = vpop.f32.mrb[0].mxu0
  %v2028 = vpop.f32.mrb[0].mxu0
  %v2029 = vadd.f32 %v1988, %v2028
  %v2030 = vpop.f32.mrb[0].mxu0
  %2031 = vdwg.mxu0
  %2032 = vmatprep.subr.bf16.mxu0 0
  %2033 = vmatpush1.bf16.msra.mxu0 %v1482
  %2034 = vmatprep.subr.bf16.mxu0 0
  %2035 = vmatpush1.bf16.msra.mxu0 %v1483
  %2036 = vmatprep.subr.bf16.mxu0 0
  %2037 = vmatpush1.bf16.msra.mxu0 %v1484
  %2038 = vmatprep.subr.bf16.mxu0 0
  %2039 = vmatpush1.bf16.msra.mxu0 %v1485
  %2040 = vmatprep.subr.bf16.mxu0 0
  %2041 = vmatpush1.bf16.msra.mxu0 %v1486
  %2042 = vmatprep.subr.bf16.mxu0 0
  %2043 = vmatpush1.bf16.msra.mxu0 %v1487
  %2044 = vmatprep.subr.bf16.mxu0 0
  %2045 = vmatpush1.bf16.msra.mxu0 %v1488
  %2046 = vmatprep.subr.bf16.mxu0 0
  %2047 = vmatpush1.bf16.msra.mxu0 %v1489
  %2048 = vmatprep.subr.bf16.mxu0 0
  %2049 = vmatpush1.bf16.msra.mxu0 %v1490
  %2050 = vmatprep.subr.bf16.mxu0 0
  %2051 = vmatpush1.bf16.msra.mxu0 %v1491
  %2052 = vmatprep.subr.bf16.mxu0 0
  %2053 = vmatpush1.bf16.msra.mxu0 %v1492
  %2054 = vmatprep.subr.bf16.mxu0 0
  %2055 = vmatpush1.bf16.msra.mxu0 %v1493
  %2056 = vmatprep.subr.bf16.mxu0 0
  %2057 = vmatpush1.bf16.msra.mxu0 %v1494
  %2058 = vmatprep.subr.bf16.mxu0 0
  %2059 = vmatpush1.bf16.msra.mxu0 %v1495
  %2060 = vmatprep.subr.bf16.mxu0 0
  %2061 = vmatpush1.bf16.msra.mxu0 %v1496
  %2062 = vmatprep.subr.bf16.mxu0 0
  %2063 = vmatpush1.bf16.msra.mxu0 %v1497
  %2064 = vmatprep.mubr.bf16.mxu0 %v549
  %2065 = vmatmul.mubr.bf16.gmra.mrb[0].mxu0 %v548
  %v2066 = vpop.f32.mrb[0].mxu0
  %v2067 = vadd.f32 %v2026, %v2066
  %v2068 = vpop.f32.mrb[0].mxu0
  %v2069 = vpop.f32.mrb[0].mxu0
  %v2070 = vadd.f32 %v2029, %v2069
  %v2071 = vpop.f32.mrb[0].mxu0
  %2072 = vdwg.mxu0
  %2073 = vmatprep.subr.bf16.mxu0 0
  %2074 = vmatpush1.bf16.msra.mxu0 %v1498
  %2075 = vmatprep.subr.bf16.mxu0 0
  %2076 = vmatpush1.bf16.msra.mxu0 %v1499
  %2077 = vmatprep.subr.bf16.mxu0 0
  %2078 = vmatpush1.bf16.msra.mxu0 %v1500
  %2079 = vmatprep.subr.bf16.mxu0 0
  %2080 = vmatpush1.bf16.msra.mxu0 %v1501
  %2081 = vmatprep.subr.bf16.mxu0 0
  %2082 = vmatpush1.bf16.msra.mxu0 %v1502
  %2083 = vmatprep.subr.bf16.mxu0 0
  %2084 = vmatpush1.bf16.msra.mxu0 %v1503
  %2085 = vmatprep.subr.bf16.mxu0 0
  %2086 = vmatpush1.bf16.msra.mxu0 %v1504
  %2087 = vmatprep.subr.bf16.mxu0 0
  %2088 = vmatpush1.bf16.msra.mxu0 %v1505
  %2089 = vmatprep.subr.bf16.mxu0 0
  %2090 = vmatpush1.bf16.msra.mxu0 %v1506
  %2091 = vmatprep.subr.bf16.mxu0 0
  %2092 = vmatpush1.bf16.msra.mxu0 %v1507
  %2093 = vmatprep.subr.bf16.mxu0 0
  %2094 = vmatpush1.bf16.msra.mxu0 %v1508
  %2095 = vmatprep.subr.bf16.mxu0 0
  %2096 = vmatpush1.bf16.msra.mxu0 %v1509
  %2097 = vmatprep.subr.bf16.mxu0 0
  %2098 = vmatpush1.bf16.msra.mxu0 %v1510
  %2099 = vmatprep.subr.bf16.mxu0 0
  %2100 = vmatpush1.bf16.msra.mxu0 %v1511
  %2101 = vmatprep.subr.bf16.mxu0 0
  %2102 = vmatpush1.bf16.msra.mxu0 %v1512
  %2103 = vmatprep.subr.bf16.mxu0 0
  %2104 = vmatpush1.bf16.msra.mxu0 %v1513
  %2105 = vmatprep.mubr.bf16.mxu0 %v551
  %2106 = vmatmul.mubr.bf16.gmra.mrb[0].mxu0 %v550
  %v2107 = vpop.f32.mrb[0].mxu0
  %v2108 = vadd.f32 %v2067, %v2107
  %v2109 = vpop.f32.mrb[0].mxu0
  %v2110 = vpop.f32.mrb[0].mxu0
  %v2111 = vadd.f32 %v2070, %v2110
  %v2112 = vpop.f32.mrb[0].mxu0
  %2113 = vdwg.mxu0
  %2114 = vmatprep.subr.bf16.mxu0 0
  %2115 = vmatpush1.bf16.msra.mxu0 %v1514
  %2116 = vmatprep.subr.bf16.mxu0 0
  %2117 = vmatpush1.bf16.msra.mxu0 %v1515
  %2118 = vmatprep.subr.bf16.mxu0 0
  %2119 = vmatpush1.bf16.msra.mxu0 %v1516
  %2120 = vmatprep.subr.bf16.mxu0 0
  %2121 = vmatpush1.bf16.msra.mxu0 %v1517
  %2122 = vmatprep.subr.bf16.mxu0 0
  %2123 = vmatpush1.bf16.msra.mxu0 %v1518
  %2124 = vmatprep.subr.bf16.mxu0 0
  %2125 = vmatpush1.bf16.msra.mxu0 %v1519
  %2126 = vmatprep.subr.bf16.mxu0 0
  %2127 = vmatpush1.bf16.msra.mxu0 %v1520
  %2128 = vmatprep.subr.bf16.mxu0 0
  %2129 = vmatpush1.bf16.msra.mxu0 %v1521
  %2130 = vmatprep.subr.bf16.mxu0 0
  %2131 = vmatpush1.bf16.msra.mxu0 %v1522
  %2132 = vmatprep.subr.bf16.mxu0 0
  %2133 = vmatpush1.bf16.msra.mxu0 %v1523
  %2134 = vmatprep.subr.bf16.mxu0 0
  %2135 = vmatpush1.bf16.msra.mxu0 %v1524
  %2136 = vmatprep.subr.bf16.mxu0 0
  %2137 = vmatpush1.bf16.msra.mxu0 %v1525
  %2138 = vmatprep.subr.bf16.mxu0 0
  %2139 = vmatpush1.bf16.msra.mxu0 %v1526
  %2140 = vmatprep.subr.bf16.mxu0 0
  %2141 = vmatpush1.bf16.msra.mxu0 %v1527
  %2142 = vmatprep.subr.bf16.mxu0 0
  %2143 = vmatpush1.bf16.msra.mxu0 %v1528
  %2144 = vmatprep.subr.bf16.mxu0 0
  %2145 = vmatpush1.bf16.msra.mxu0 %v1529
  %2146 = vmatprep.mubr.bf16.mxu0 %v553
  %2147 = vmatmul.mubr.bf16.gmra.mrb[0].mxu0 %v552
  %v2148 = vpop.f32.mrb[0].mxu0
  %v2149 = vadd.f32 %v2108, %v2148
  %v2150 = vpop.f32.mrb[0].mxu0
  %v2151 = vpop.f32.mrb[0].mxu0
  %v2152 = vadd.f32 %v2111, %v2151
  %v2153 = vpop.f32.mrb[0].mxu0
  %2154 = vdwg.mxu0
  %2155 = vmatprep.subr.bf16.mxu0 0
  %2156 = vmatpush1.bf16.msra.mxu0 %v1530
  %2157 = vmatprep.subr.bf16.mxu0 0
  %2158 = vmatpush1.bf16.msra.mxu0 %v1531
  %2159 = vmatprep.subr.bf16.mxu0 0
  %2160 = vmatpush1.bf16.msra.mxu0 %v1532
  %2161 = vmatprep.subr.bf16.mxu0 0
  %2162 = vmatpush1.bf16.msra.mxu0 %v1533
  %2163 = vmatprep.subr.bf16.mxu0 0
  %2164 = vmatpush1.bf16.msra.mxu0 %v1534
  %2165 = vmatprep.subr.bf16.mxu0 0
  %2166 = vmatpush1.bf16.msra.mxu0 %v1535
  %2167 = vmatprep.subr.bf16.mxu0 0
  %2168 = vmatpush1.bf16.msra.mxu0 %v1536
  %2169 = vmatprep.subr.bf16.mxu0 0
  %2170 = vmatpush1.bf16.msra.mxu0 %v1537
  %2171 = vmatprep.subr.bf16.mxu0 0
  %2172 = vmatpush1.bf16.msra.mxu0 %v1538
  %2173 = vmatprep.subr.bf16.mxu0 0
  %2174 = vmatpush1.bf16.msra.mxu0 %v1539
  %2175 = vmatprep.subr.bf16.mxu0 0
  %2176 = vmatpush1.bf16.msra.mxu0 %v1540
  %2177 = vmatprep.subr.bf16.mxu0 0
  %2178 = vmatpush1.bf16.msra.mxu0 %v1541
  %2179 = vmatprep.subr.bf16.mxu0 0
  %2180 = vmatpush1.bf16.msra.mxu0 %v1542
  %2181 = vmatprep.subr.bf16.mxu0 0
  %2182 = vmatpush1.bf16.msra.mxu0 %v1543
  %2183 = vmatprep.subr.bf16.mxu0 0
  %2184 = vmatpush1.bf16.msra.mxu0 %v1544
  %2185 = vmatprep.subr.bf16.mxu0 0
  %2186 = vmatpush1.bf16.msra.mxu0 %v1545
  %2187 = vmatprep.mubr.bf16.mxu0 %v555
  %2188 = vmatmul.mubr.bf16.gmra.mrb[0].mxu0 %v554
  %v2189 = vpop.f32.mrb[0].mxu0
  %v2190 = vadd.f32 %v2149, %v2189
  %v2191 = vpop.f32.mrb[0].mxu0
  %v2192 = vpop.f32.mrb[0].mxu0
  %v2193 = vadd.f32 %v2152, %v2192
  %v2194 = vpop.f32.mrb[0].mxu0
  %2195 = vdwg.mxu0
  %2196 = vmatprep.subr.bf16.mxu0 0
  %2197 = vmatpush1.bf16.msra.mxu0 %v1546
  %2198 = vmatprep.subr.bf16.mxu0 0
  %2199 = vmatpush1.bf16.msra.mxu0 %v1547
  %2200 = vmatprep.subr.bf16.mxu0 0
  %2201 = vmatpush1.bf16.msra.mxu0 %v1548
  %2202 = vmatprep.subr.bf16.mxu0 0
  %2203 = vmatpush1.bf16.msra.mxu0 %v1549
  %2204 = vmatprep.subr.bf16.mxu0 0
  %2205 = vmatpush1.bf16.msra.mxu0 %v1550
  %2206 = vmatprep.subr.bf16.mxu0 0
  %2207 = vmatpush1.bf16.msra.mxu0 %v1551
  %2208 = vmatprep.subr.bf16.mxu0 0
  %2209 = vmatpush1.bf16.msra.mxu0 %v1552
  %2210 = vmatprep.subr.bf16.mxu0 0
  %2211 = vmatpush1.bf16.msra.mxu0 %v1553
  %2212 = vmatprep.subr.bf16.mxu0 0
  %2213 = vmatpush1.bf16.msra.mxu0 %v1554
  %2214 = vmatprep.subr.bf16.mxu0 0
  %2215 = vmatpush1.bf16.msra.mxu0 %v1555
  %2216 = vmatprep.subr.bf16.mxu0 0
  %2217 = vmatpush1.bf16.msra.mxu0 %v1556
  %2218 = vmatprep.subr.bf16.mxu0 0
  %2219 = vmatpush1.bf16.msra.mxu0 %v1557
  %2220 = vmatprep.subr.bf16.mxu0 0
  %2221 = vmatpush1.bf16.msra.mxu0 %v1558
  %2222 = vmatprep.subr.bf16.mxu0 0
  %2223 = vmatpush1.bf16.msra.mxu0 %v1559
  %2224 = vmatprep.subr.bf16.mxu0 0
  %2225 = vmatpush1.bf16.msra.mxu0 %v1560
  %2226 = vmatprep.subr.bf16.mxu0 0
  %2227 = vmatpush1.bf16.msra.mxu0 %v1561
  %2228 = vmatprep.mubr.bf16.mxu0 %v557
  %2229 = vmatmul.mubr.bf16.gmra.mrb[0].mxu0 %v556
  %v2230 = vpop.f32.mrb[0].mxu0
  %v2231 = vadd.f32 %v2190, %v2230
  %v2232 = vpop.f32.mrb[0].mxu0
  %v2233 = vpop.f32.mrb[0].mxu0
  %v2234 = vadd.f32 %v2193, %v2233
  %v2235 = vpop.f32.mrb[0].mxu0
  %2236 = vdwg.mxu0
  %2237 = vmatprep.subr.bf16.mxu0 0
  %2238 = vmatpush1.bf16.msra.mxu0 %v1562
  %2239 = vmatprep.subr.bf16.mxu0 0
  %2240 = vmatpush1.bf16.msra.mxu0 %v1563
  %2241 = vmatprep.subr.bf16.mxu0 0
  %2242 = vmatpush1.bf16.msra.mxu0 %v1564
  %2243 = vmatprep.subr.bf16.mxu0 0
  %2244 = vmatpush1.bf16.msra.mxu0 %v1565
  %2245 = vmatprep.subr.bf16.mxu0 0
  %2246 = vmatpush1.bf16.msra.mxu0 %v1566
  %2247 = vmatprep.subr.bf16.mxu0 0
  %2248 = vmatpush1.bf16.msra.mxu0 %v1567
  %2249 = vmatprep.subr.bf16.mxu0 0
  %2250 = vmatpush1.bf16.msra.mxu0 %v1568
  %2251 = vmatprep.subr.bf16.mxu0 0
  %2252 = vmatpush1.bf16.msra.mxu0 %v1569
  %2253 = vmatprep.subr.bf16.mxu0 0
  %2254 = vmatpush1.bf16.msra.mxu0 %v1570
  %2255 = vmatprep.subr.bf16.mxu0 0
  %2256 = vmatpush1.bf16.msra.mxu0 %v1571
  %2257 = vmatprep.subr.bf16.mxu0 0
  %2258 = vmatpush1.bf16.msra.mxu0 %v1572
  %2259 = vmatprep.subr.bf16.mxu0 0
  %2260 = vmatpush1.bf16.msra.mxu0 %v1573
  %2261 = vmatprep.subr.bf16.mxu0 0
  %2262 = vmatpush1.bf16.msra.mxu0 %v1574
  %2263 = vmatprep.subr.bf16.mxu0 0
  %2264 = vmatpush1.bf16.msra.mxu0 %v1575
  %2265 = vmatprep.subr.bf16.mxu0 0
  %2266 = vmatpush1.bf16.msra.mxu0 %v1576
  %2267 = vmatprep.subr.bf16.mxu0 0
  %2268 = vmatpush1.bf16.msra.mxu0 %v1577
  %2269 = vmatprep.mubr.bf16.mxu0 %v559
  %2270 = vmatmul.mubr.bf16.gmra.mrb[0].mxu0 %v558
  %v2271 = vpop.f32.mrb[0].mxu0
  %v2272 = vadd.f32 %v2231, %v2271
  %v2273 = vpop.f32.mrb[0].mxu0
  %v2274 = vpop.f32.mrb[0].mxu0
  %v2275 = vadd.f32 %v2234, %v2274
  %v2276 = vpop.f32.mrb[0].mxu0
  %2277 = vdwg.mxu0
  %2278 = vmatprep.subr.bf16.mxu0 0
  %2279 = vmatpush1.bf16.msra.mxu0 %v1578
  %2280 = vmatprep.subr.bf16.mxu0 0
  %2281 = vmatpush1.bf16.msra.mxu0 %v1579
  %2282 = vmatprep.subr.bf16.mxu0 0
  %2283 = vmatpush1.bf16.msra.mxu0 %v1580
  %2284 = vmatprep.subr.bf16.mxu0 0
  %2285 = vmatpush1.bf16.msra.mxu0 %v1581
  %2286 = vmatprep.subr.bf16.mxu0 0
  %2287 = vmatpush1.bf16.msra.mxu0 %v1582
  %2288 = vmatprep.subr.bf16.mxu0 0
  %2289 = vmatpush1.bf16.msra.mxu0 %v1583
  %2290 = vmatprep.subr.bf16.mxu0 0
  %2291 = vmatpush1.bf16.msra.mxu0 %v1584
  %2292 = vmatprep.subr.bf16.mxu0 0
  %2293 = vmatpush1.bf16.msra.mxu0 %v1585
  %2294 = vmatprep.subr.bf16.mxu0 0
  %2295 = vmatpush1.bf16.msra.mxu0 0
  %2296 = vmatprep.subr.bf16.mxu0 0
  %2297 = vmatpush1.bf16.msra.mxu0 0
  %2298 = vmatprep.subr.bf16.mxu0 0
  %2299 = vmatpush1.bf16.msra.mxu0 0
  %2300 = vmatprep.subr.bf16.mxu0 0
  %2301 = vmatpush1.bf16.msra.mxu0 0
  %2302 = vmatprep.subr.bf16.mxu0 0
  %2303 = vmatpush1.bf16.msra.mxu0 0
  %2304 = vmatprep.subr.bf16.mxu0 0
  %2305 = vmatpush1.bf16.msra.mxu0 0
  %2306 = vmatprep.subr.bf16.mxu0 0
  %2307 = vmatpush1.bf16.msra.mxu0 0
  %2308 = vmatprep.subr.bf16.mxu0 0
  %2309 = vmatpush1.bf16.msra.mxu0 0
  %2310 = vmatprep.mubr.bf16.mxu0 0
  %2311 = vmatmul.mubr.bf16.gmra.mrb[0].mxu0 %v560
  %v2312 = vpop.f32.mrb[0].mxu0
  %v2313 = vadd.f32 %v2272, %v2312
  %v2314 = vpop.f32.mrb[0].mxu0
  %v2315 = vpop.f32.mrb[0].mxu0
  %v2316 = vadd.f32 %v2275, %v2315
  %v2317 = vpop.f32.mrb[0].mxu0
  %2318 = vdwg.mxu0
  %v2319 = vmax.f32 %v2313, 0.0
  %v2320 = vmax.f32 %v2316, 0.0
  %v2321 = vpack.c.bf16 %v2320, %v2319
  %v2322 = vld [vmem:[%s3] sm:$0xf]
  %v2323 = vld [vmem:[%s3 + $0x4] sm:$0xf]
  %v2324 = vld [vmem:[%s3 + $0x8] sm:$0xf]
  %v2325 = vld [vmem:[%s3 + $0xc] sm:$0xf]
  %v2326 = vld [vmem:[%s3 + $0x10] sm:$0xf]
  %v2327 = vld [vmem:[%s3 + $0x14] sm:$0xf]
  %v2328 = vld [vmem:[%s3 + $0x18] sm:$0xf]
  %v2329 = vld [vmem:[%s3 + $0x1c] sm:$0xf]
  %v2330 = vld [vmem:[%s3 + $0x20] sm:$0xf]
  %v2331 = vld [vmem:[%s3 + $0x24] sm:$0xf]
  %v2332 = vld [vmem:[%s3 + $0x28] sm:$0xf]
  %v2333 = vld [vmem:[%s3 + $0x2c] sm:$0xf]
  %v2334 = vld [vmem:[%s3 + $0x30] sm:$0xf]
  %v2335 = vld [vmem:[%s3 + $0x34] sm:$0xf]
  %v2336 = vld [vmem:[%s3 + $0x38] sm:$0xf]
  %v2337 = vld [vmem:[%s3 + $0x3c] sm:$0xf]
  %v2338 = vld [vmem:[%s4] sm:$0x1]
  %v2340 = vlaneseq
  %v2341 = vshrl.u32 %v2340, 7
  %v2342 = vsub.s32 0, %v2341
  %v2343 = vrot.slane %v2338, %v2342
  %v2361 = vunpack.c.l.b16 %v2322
  %v2362 = vunpack.c.l.b16 %v2323
  %v2363 = vunpack.c.l.b16 %v2324
  %v2364 = vunpack.c.l.b16 %v2325
  %v2365 = vunpack.c.l.b16 %v2326
  %v2366 = vunpack.c.l.b16 %v2327
  %v2367 = vunpack.c.l.b16 %v2328
  %v2368 = vunpack.c.l.b16 %v2329
  %v2369 = vunpack.c.l.b16 %v2330
  %v2370 = vunpack.c.l.b16 %v2331
  %v2371 = vunpack.c.l.b16 %v2332
  %v2372 = vunpack.c.l.b16 %v2333
  %v2373 = vunpack.c.l.b16 %v2334
  %v2374 = vunpack.c.l.b16 %v2335
  %v2375 = vunpack.c.l.b16 %v2336
  %v2376 = vunpack.c.l.b16 %v2337
  %v2377 = vpack.c.b16 %v2362, %v2361
  %v2378 = vpack.c.b16 %v2364, %v2363
  %v2379 = vpack.c.b16 %v2366, %v2365
  %v2380 = vpack.c.b16 %v2368, %v2367
  %v2381 = vpack.c.b16 %v2370, %v2369
  %v2382 = vpack.c.b16 %v2372, %v2371
  %v2383 = vpack.c.b16 %v2374, %v2373
  %v2384 = vpack.c.b16 %v2376, %v2375
  %2393 = vmatprep.subr.bf16.mxu0 0
  %2394 = vmatpush1.bf16.msra.mxu0 %v2377
  %2395 = vmatprep.subr.bf16.mxu0 0
  %2396 = vmatpush1.bf16.msra.mxu0 %v2378
  %2397 = vmatprep.subr.bf16.mxu0 0
  %2398 = vmatpush1.bf16.msra.mxu0 %v2379
  %2399 = vmatprep.subr.bf16.mxu0 0
  %2400 = vmatpush1.bf16.msra.mxu0 %v2380
  %2401 = vmatprep.subr.bf16.mxu0 0
  %2402 = vmatpush1.bf16.msra.mxu0 %v2381
  %2403 = vmatprep.subr.bf16.mxu0 0
  %2404 = vmatpush1.bf16.msra.mxu0 %v2382
  %2405 = vmatprep.subr.bf16.mxu0 0
  %2406 = vmatpush1.bf16.msra.mxu0 %v2383
  %2407 = vmatprep.subr.bf16.mxu0 0
  %2408 = vmatpush1.bf16.msra.mxu0 %v2384
  %2409 = vmatprep.subr.bf16.mxu0 0
  %2410 = vmatpush1.bf16.msra.mxu0 0
  %2411 = vmatprep.subr.bf16.mxu0 0
  %2412 = vmatpush1.bf16.msra.mxu0 0
  %2413 = vmatprep.subr.bf16.mxu0 0
  %2414 = vmatpush1.bf16.msra.mxu0 0
  %2415 = vmatprep.subr.bf16.mxu0 0
  %2416 = vmatpush1.bf16.msra.mxu0 0
  %2417 = vmatprep.subr.bf16.mxu0 0
  %2418 = vmatpush1.bf16.msra.mxu0 0
  %2419 = vmatprep.subr.bf16.mxu0 0
  %2420 = vmatpush1.bf16.msra.mxu0 0
  %2421 = vmatprep.subr.bf16.mxu0 0
  %2422 = vmatpush1.bf16.msra.mxu0 0
  %2423 = vmatprep.subr.bf16.mxu0 0
  %2424 = vmatpush1.bf16.msra.mxu0 0
  %2425 = vmatprep.mubr.bf16.mxu0 0
  %2426 = vmatmul.mubr.bf16.gmra.mrb[0].mxu0 %v2321
  %v2427 = vpop.f32.mrb[0].mxu0
  %v2428 = vadd.f32 %v2343, %v2427
  %v2429 = vpop.f32.mrb[0].mxu0
  %v2430 = vpop.f32.mrb[0].mxu0
  %v2431 = vadd.f32 %v2343, %v2430
  %v2432 = vpop.f32.mrb[0].mxu0
  %2433 = vdwg.mxu0
  %v2434 = vmax.f32 %v2428, 0.0
  %v2435 = vmax.f32 %v2431, 0.0
  %v2436 = vpack.c.bf16 %v2435, %v2434
  %v2437 = vld [vmem:[%s5] sm:$0xf]
  %v2438 = vld [vmem:[%s5 + $0x4] sm:$0xf]
  %v2439 = vld [vmem:[%s5 + $0x8] sm:$0xf]
  %v2440 = vld [vmem:[%s5 + $0xc] sm:$0xf]
  %v2441 = vld [vmem:[%s5 + $0x10] sm:$0xf]
  %v2442 = vld [vmem:[%s5 + $0x14] sm:$0xf]
  %v2443 = vld [vmem:[%s5 + $0x18] sm:$0xf]
  %v2444 = vld [vmem:[%s5 + $0x1c] sm:$0xf]
  %v2445 = vld [vmem:[%s5 + $0x20] sm:$0xf]
  %v2446 = vld [vmem:[%s5 + $0x24] sm:$0xf]
  %v2447 = vld [vmem:[%s5 + $0x28] sm:$0xf]
  %v2448 = vld [vmem:[%s5 + $0x2c] sm:$0xf]
  %v2449 = vld [vmem:[%s5 + $0x30] sm:$0xf]
  %v2450 = vld [vmem:[%s5 + $0x34] sm:$0xf]
  %v2451 = vld [vmem:[%s5 + $0x38] sm:$0xf]
  %v2452 = vld [vmem:[%s5 + $0x3c] sm:$0xf]
  %v2453 = vld [vmem:[%s6] sm:$0x1]
  %v2455 = vlaneseq
  %v2456 = vshrl.u32 %v2455, 7
  %v2457 = vsub.s32 0, %v2456
  %v2458 = vrot.slane %v2453, %v2457
  %v2476 = vunpack.c.l.b16 %v2437
  %v2477 = vunpack.c.l.b16 %v2438
  %v2478 = vunpack.c.l.b16 %v2439
  %v2479 = vunpack.c.l.b16 %v2440
  %v2480 = vunpack.c.l.b16 %v2441
  %v2481 = vunpack.c.l.b16 %v2442
  %v2482 = vunpack.c.l.b16 %v2443
  %v2483 = vunpack.c.l.b16 %v2444
  %v2484 = vunpack.c.l.b16 %v2445
  %v2485 = vunpack.c.l.b16 %v2446
  %v2486 = vunpack.c.l.b16 %v2447
  %v2487 = vunpack.c.l.b16 %v2448
  %v2488 = vunpack.c.l.b16 %v2449
  %v2489 = vunpack.c.l.b16 %v2450
  %v2490 = vunpack.c.l.b16 %v2451
  %v2491 = vunpack.c.l.b16 %v2452
  %v2492 = vpack.c.b16 %v2477, %v2476
  %v2493 = vpack.c.b16 %v2479, %v2478
  %v2494 = vpack.c.b16 %v2481, %v2480
  %v2495 = vpack.c.b16 %v2483, %v2482
  %v2496 = vpack.c.b16 %v2485, %v2484
  %v2497 = vpack.c.b16 %v2487, %v2486
  %v2498 = vpack.c.b16 %v2489, %v2488
  %v2499 = vpack.c.b16 %v2491, %v2490
  %2508 = vmatprep.subr.bf16.mxu0 0
  %2509 = vmatpush1.bf16.msra.mxu0 %v2492
  %2510 = vmatprep.subr.bf16.mxu0 0
  %2511 = vmatpush1.bf16.msra.mxu0 %v2493
  %2512 = vmatprep.subr.bf16.mxu0 0
  %2513 = vmatpush1.bf16.msra.mxu0 %v2494
  %2514 = vmatprep.subr.bf16.mxu0 0
  %2515 = vmatpush1.bf16.msra.mxu0 %v2495
  %2516 = vmatprep.subr.bf16.mxu0 0
  %2517 = vmatpush1.bf16.msra.mxu0 %v2496
  %2518 = vmatprep.subr.bf16.mxu0 0
  %2519 = vmatpush1.bf16.msra.mxu0 %v2497
  %2520 = vmatprep.subr.bf16.mxu0 0
  %2521 = vmatpush1.bf16.msra.mxu0 %v2498
  %2522 = vmatprep.subr.bf16.mxu0 0
  %2523 = vmatpush1.bf16.msra.mxu0 %v2499
  %2524 = vmatprep.subr.bf16.mxu0 0
  %2525 = vmatpush1.bf16.msra.mxu0 0
  %2526 = vmatprep.subr.bf16.mxu0 0
  %2527 = vmatpush1.bf16.msra.mxu0 0
  %2528 = vmatprep.subr.bf16.mxu0 0
  %2529 = vmatpush1.bf16.msra.mxu0 0
  %2530 = vmatprep.subr.bf16.mxu0 0
  %2531 = vmatpush1.bf16.msra.mxu0 0
  %2532 = vmatprep.subr.bf16.mxu0 0
  %2533 = vmatpush1.bf16.msra.mxu0 0
  %2534 = vmatprep.subr.bf16.mxu0 0
  %2535 = vmatpush1.bf16.msra.mxu0 0
  %2536 = vmatprep.subr.bf16.mxu0 0
  %2537 = vmatpush1.bf16.msra.mxu0 0
  %2538 = vmatprep.subr.bf16.mxu0 0
  %2539 = vmatpush1.bf16.msra.mxu0 0
  %2540 = vmatprep.mubr.bf16.mxu0 0
  %2541 = vmatmul.mubr.bf16.gmra.mrb[0].mxu0 %v2436
  %v2542 = vpop.f32.mrb[0].mxu0
  %v2543 = vadd.f32 %v2458, %v2542
  %v2544 = vpop.f32.mrb[0].mxu0
  %v2545 = vpop.f32.mrb[0].mxu0
  %v2546 = vadd.f32 %v2458, %v2545
  %v2547 = vpop.f32.mrb[0].mxu0
  %2548 = vdwg.mxu0
  %2549 = vst [vmem:[%s7] sm:$0xff] %v2543
  %2550 = vst [vmem:[%s7 + $0x8] sm:$0xff] %v2546
  // Predicated region
  $region30: #{lenet_forward.5} parent=0 // pred_check
    _
  $region31: #{lenet_forward.5} parent=0 // pred_check_branch
    %2552 = sbr.rel (0) target = $region33
  $region32: #{lenet_forward.5} parent=0 // pred_region
    _
  $region33: #{lenet_forward.5} parent=0 // pred_fallthru
    _
  // Predicated region
  $region34: #{lenet_forward.5} parent=0 // pred_check
    _
  $region35: #{lenet_forward.5} parent=0 // pred_check_branch
    %2554 = sbr.rel (0) target = $region37
  $region36: #{lenet_forward.5} parent=0 // pred_region
    _
  $region37: #{lenet_forward.5} parent=0 // pred_fallthru
    _

</llo_original>
